<compile_context>
chip_gen: v5e
topology: v5e:2x2
jax: 0.10.0
libtpu: 0.0.40
codegen_flags: <defaults>
</compile_context>

<pallas_src>
import math

import numpy as np

import jax
import jax.numpy as jnp
from jax.experimental import pallas as pl
from jax.experimental.pallas import tpu as pltpu


# Small, forward-consistent configuration (PyTorch defaults scaled down):
#   num_input_features=1, filter_sizes=[4,8,8], kernel=3, stride=2, padding=1
#   input_shape=32 -> 16 -> 8 -> 4 = embedded_shape, num_output_features=1
#   mlp_layers=[32,32], output_shape=32
FILTERS = (4, 8, 8)
KSIZE = 3
STRIDE = 2
PAD = 1
INPUT_SHAPE = 32
EMBED_SHAPE = 4
MLP_LAYERS = (32, 32)
OUTPUT_SHAPE = 32

TB = 8  # images per grid step (batch tile)


# --------------------------- fused Pallas kernel ---------------------------- #

def _cnn_fused_kernel(x_ref, p_ref, pt_ref,
                      r1_ref, m1_ref, b1_ref,
                      r2_ref, m2_ref, b2_ref,
                      r3_ref, m3_ref, b3_ref,
                      r4_ref, m4_ref, b4_ref,
                      sf_ref, w1_ref, w2_ref, w3_ref,
                      o_ref):
    f32 = jnp.float32

    # ---- per-image normalization: (x - mean) / (std + 1e-5), population std ----
    x = x_ref[...]                                       # (TB*H, W)
    tb = p_ref.shape[0]
    tbh, wdim = x.shape
    inv_n = 1.0 / float((tbh // tb) * wdim)
    p = p_ref[...]                                       # (TB, TB*H) row indicator
    pt = pt_ref[...]                                     # (TB*H, TB)

    col_sums = jnp.dot(p, x, preferred_element_type=f32)                  # (TB, W)
    mean_i = jnp.sum(col_sums, axis=1, keepdims=True) * inv_n             # (TB, 1)
    mean_rows = jnp.dot(pt, jnp.broadcast_to(mean_i, (tb, wdim)),
                        preferred_element_type=f32)                       # (TB*H, W)
    xc = x - mean_rows
    sq_sums = jnp.dot(p, xc * xc, preferred_element_type=f32)             # (TB, W)
    var_i = jnp.sum(sq_sums, axis=1, keepdims=True) * inv_n               # (TB, 1)
    denom_i = jnp.sqrt(var_i) + 1e-5
    denom_rows = jnp.dot(pt, jnp.broadcast_to(denom_i, (tb, wdim)),
                         preferred_element_type=f32)                      # (TB*H, W)
    a = xc / denom_rows                                                   # conv1 input

    # ---- conv layer = sum of 9 tap matmuls, bias add, fused ReLU ----
    # activation layout: rows = b*Hin + h, lanes = w*Cin + ci
    def conv_block(act, r_ref, m_ref, bias_ref):
        kh_n = r_ref.shape[0]
        kw_n = m_ref.shape[0] // kh_n
        acc = None
        for kh in range(kh_n):
            # (TB*Ho, TB*Hin) @ (TB*Hin, Win*Cin) -> (TB*Ho, Win*Cin)
            rows = jnp.dot(r_ref[kh], act, preferred_element_type=f32)
            for kw in range(kw_n):
                # (TB*Ho, Win*Cin) @ (Win*Cin, Wo*Cout) -> (TB*Ho, Wo*Cout)
                t = jnp.dot(rows, m_ref[kh * kw_n + kw],
                            preferred_element_type=f32)
                acc = t if acc is None else acc + t
        return jnp.maximum(acc + bias_ref[...], 0.0)

    a = conv_block(a, r1_ref, m1_ref, b1_ref)   # relu(conv1)               (TB*16, 64)
    a = conv_block(a, r2_ref, m2_ref, b2_ref)   # relu(conv2)               (TB*8, 64)
    a = conv_block(a, r3_ref, m3_ref, b3_ref)   # act(conv3)  [from embed()] (TB*4, 32)
    a = conv_block(a, r4_ref, m4_ref, b4_ref)   # act(conv_embed) [flatten]  (TB*4, 4)

    # ---- flatten + mlp1 folded:  h = relu( sum_r (S_r @ a) @ W1_r ) ----
    h = None
    for r in range(sf_ref.shape[0]):
        t = jnp.dot(jnp.dot(sf_ref[r], a, preferred_element_type=f32),
                    w1_ref[r], preferred_element_type=f32)                 # (TB, 32)
        h = t if h is None else h + t
    h = jnp.maximum(h, 0.0)
    h = jnp.maximum(jnp.dot(h, w2_ref[...], preferred_element_type=f32), 0.0)
    o_ref[...] = jnp.dot(h, w3_ref[...], preferred_element_type=f32)


# ---------------------- constant (weight repack) helpers --------------------- #

def _row_select_np(Ho, Hin, stride, pad, k):
    R = np.zeros((k, Ho, Hin), np.float32)
    for kh in range(k):
        for ho in range(Ho):
            i = stride * ho + kh - pad
            if 0 <= i < Hin:
                R[kh, ho, i] = 1.0
    return R


def _col_select_np(Wo, Win, stride, pad, k):
    S = np.zeros((k, Win, Wo), np.float32)
    for kw in range(k):
        for wo in range(Wo):
            j = stride * wo + kw - pad
            if 0 <= j < Win:
                S[kw, j, wo] = 1.0
    return S


def _conv_consts(w, b, Hin, Win, stride, pad, tb):
    """Repack a torch-layout Conv2d (w: (Cout,Cin,KH,KW), b: (Cout,)) into the
    matrices consumed by the fused kernel.  Traceable in w/b (jnp ops only)."""
    Cout, Cin, KH, KW = w.shape
    Ho = (Hin + 2 * pad - KH) // stride + 1
    Wo = (Win + 2 * pad - KW) // stride + 1

    R = _row_select_np(Ho, Hin, stride, pad, KH)                 # (KH, Ho, Hin)
    eye = np.eye(tb, dtype=np.float32)
    r_bd = np.stack([np.kron(eye, R[kh]) for kh in range(KH)])   # (KH, tb*Ho, tb*Hin)

    S = _col_select_np(Wo, Win, stride, pad, KW)                 # (KW, Win, Wo)
    # M[t][wi*Cin+ci, wo*Cout+co] = w[co,ci,kh,kw] iff wi == stride*wo + kw - pad
    M = jnp.stack([jnp.kron(jnp.asarray(S[kw]), w[:, :, kh, kw].T)
                   for kh in range(KH) for kw in range(KW)])     # (KH*KW, Win*Cin, Wo*Cout)

    bt = jnp.tile(b, (Wo,)).reshape(1, Wo * Cout)                # bias at lane wo*Cout+co
    return jnp.asarray(r_bd), M, bt, Ho, Wo


# ------------------------------ parameters ----------------------------------- #

def _xavier_uniform(key, shape):
    cout, cin, kh, kw = shape
    fan_in, fan_out = cin * kh * kw, cout * kh * kw
    bound = math.sqrt(6.0 / (fan_in + fan_out))
    return jax.random.uniform(key, shape, jnp.float32, -bound, bound)


def _conv_bias(key, shape):
    cout, cin, kh, kw = shape
    bound = 1.0 / math.sqrt(cin * kh * kw)
    return jax.random.uniform(key, (cout,), jnp.float32, -bound, bound)


def _linear_w(key, out_f, in_f):
    bound = 1.0 / math.sqrt(in_f)
    return jax.random.uniform(key, (out_f, in_f), jnp.float32, -bound, bound)


def init_params(key):
    ks = jax.random.split(key, 12)
    p = {}
    p["conv1_w"] = _xavier_uniform(ks[0], (FILTERS[0], 1, KSIZE, KSIZE))
    p["conv1_b"] = _conv_bias(ks[1], (FILTERS[0], 1, KSIZE, KSIZE))
    p["conv2_w"] = _xavier_uniform(ks[2], (FILTERS[1], FILTERS[0], KSIZE, KSIZE))
    p["conv2_b"] = _conv_bias(ks[3], (FILTERS[1], FILTERS[0], KSIZE, KSIZE))
    p["conv3_w"] = _xavier_uniform(ks[4], (FILTERS[2], FILTERS[1], KSIZE, KSIZE))
    p["conv3_b"] = _conv_bias(ks[5], (FILTERS[2], FILTERS[1], KSIZE, KSIZE))
    p["embed_w"] = _xavier_uniform(ks[6], (1, FILTERS[2], KSIZE, KSIZE))
    p["embed_b"] = _conv_bias(ks[7], (1, FILTERS[2], KSIZE, KSIZE))
    p["mlp1_w"] = _linear_w(ks[8], MLP_LAYERS[0], EMBED_SHAPE ** 2)
    p["mlp2_w"] = _linear_w(ks[9], MLP_LAYERS[1], MLP_LAYERS[0])
    p["mlp3_w"] = _linear_w(ks[10], OUTPUT_SHAPE, MLP_LAYERS[1])
    # NOTE: convt1/convt2/convt3 (decoder) are not used by forward(); omitted.
    return p


# -------------------------------- forward ------------------------------------ #

def cnn_simple_forward(params, x):
    """x: (B, H, W) float32 depth images -> (B, OUTPUT_SHAPE) float32."""
    # TODO(synk): inpaint() uses scipy Delaunay + LinearNDInterpolator; no Pallas
    # equivalent -- inputs are assumed to contain no missing (inf) pixels.
    B, H, W = x.shape
    assert H == INPUT_SHAPE and W == INPUT_SHAPE

    # ---- repack conv weights into MXU-friendly constant matrices (traceable) ----
    r1, m1, b1, ho1, wo1 = _conv_consts(params["conv1_w"], params["conv1_b"],
                                        H, W, STRIDE, PAD, TB)
    r2, m2, b2, ho2, wo2 = _conv_consts(params["conv2_w"], params["conv2_b"],
                                        ho1, wo1, STRIDE, PAD, TB)
    r3, m3, b3, ho3, wo3 = _conv_consts(params["conv3_w"], params["conv3_b"],
                                        ho2, wo2, STRIDE, PAD, TB)
    r4, m4, b4, ho4, wo4 = _conv_consts(params["embed_w"], params["embed_b"],
                                        ho3, wo3, 1, 1, TB)
    assert ho4 == EMBED_SHAPE and wo4 == EMBED_SHAPE

    # per-image row indicator for the fused normalization
    p_mat = np.kron(np.eye(TB, dtype=np.float32),
                    np.ones((1, H), np.float32))          # (TB, TB*H)
    pt_mat = np.ascontiguousarray(p_mat.T)                # (TB*H, TB)

    # flatten row selectors: Sf[r][b, EMBED*b + r] = 1
    sf = np.zeros((EMBED_SHAPE, TB, TB * EMBED_SHAPE), np.float32)
    for rr in range(EMBED_SHAPE):
        for bb in range(TB):
            sf[rr, bb, EMBED_SHAPE * bb + rr] = 1.0

    # mlp1 folded with the flatten: w1h[r][w, j] = mlp1_w[j, EMBED*r + w]
    w1h = params["mlp1_w"].reshape(MLP_LAYERS[0], EMBED_SHAPE,
                                   EMBED_SHAPE).transpose(1, 2, 0)   # (4, 4, 32)
    w2t = params["mlp2_w"].T                                         # (32, 32)
    w3t = params["mlp3_w"].T                                         # (32, 32)

    # ---- pad batch to a multiple of TB; stack images along rows (H on sublanes) ----
    b_pad = ((B + TB - 1) // TB) * TB
    xp = jnp.pad(x.astype(jnp.float32), ((0, b_pad - B), (0, 0), (0, 0)))
    x2 = xp.reshape(b_pad * H, W)

    consts = (p_mat, pt_mat,
              r1, m1, b1, r2, m2, b2, r3, m3, b3, r4, m4, b4,
              sf, w1h, w2t, w3t)

    def _const_spec(arr):
        shape = tuple(int(s) for s in np.shape(arr))
        nd = len(shape)
        # same block every grid step -> fetched once, stays VMEM-resident
        return pl.BlockSpec(shape, lambda i, _n=nd: (0,) * _n)

    grid = (b_pad // TB,)
    out = pl.pallas_call(
        _cnn_fused_kernel,
        out_shape=jax.ShapeDtypeStruct((b_pad, OUTPUT_SHAPE), jnp.float32),
        grid=grid,
        in_specs=[pl.BlockSpec((TB * H, W), lambda i: (i, 0))] +
                 [_const_spec(c) for c in consts],
        out_specs=pl.BlockSpec((TB, OUTPUT_SHAPE), lambda i: (i, 0)),
        compiler_params=pltpu.CompilerParams(
            dimension_semantics=("parallel",),
            vmem_limit_bytes=32 * 1024 * 1024),
    )(x2, *consts)
    return out[:B]


# --------------------------- pure-JAX reference ------------------------------ #

def _reference_forward(params, x):
    """Non-Pallas reference of the same forward pass (for correctness check)."""
    hp = jax.lax.Precision.HIGHEST
    mean = jnp.mean(x, axis=(1, 2), keepdims=True)
    std = jnp.sqrt(jnp.mean((x - mean) ** 2, axis=(1, 2), keepdims=True))
    a = ((x - mean) / (std + 1e-5))[:, None, :, :]

    def conv(t, w, b, stride, pad):
        y = jax.lax.conv_general_dilated(
            t, w, window_strides=(stride, stride),
            padding=((pad, pad), (pad, pad)),
            dimension_numbers=("NCHW", "OIHW", "NCHW"),
            precision=hp)
        return y + b[None, :, None, None]

    a = jax.nn.relu(conv(a, params["conv1_w"], params["conv1_b"], STRIDE, PAD))
    a = jax.nn.relu(conv(a, params["conv2_w"], params["conv2_b"], STRIDE, PAD))
    a = jax.nn.relu(conv(a, params["conv3_w"], params["conv3_b"], STRIDE, PAD))
    a = jax.nn.relu(conv(a, params["embed_w"], params["embed_b"], 1, 1))
    f = a.reshape(a.shape[0], -1)
    h = jax.nn.relu(jnp.dot(f, params["mlp1_w"].T, precision=hp))
    h = jax.nn.relu(jnp.dot(h, params["mlp2_w"].T, precision=hp))
    return jnp.dot(h, params["mlp3_w"].T, precision=hp)


if __name__ == "__main__":
    key = jax.random.PRNGKey(0)
    k_x, k_p = jax.random.split(key)
    params = init_params(k_p)
    x = jax.random.uniform(k_x, (2, INPUT_SHAPE, INPUT_SHAPE), jnp.float32)

    out = jax.jit(cnn_simple_forward)(params, x)
    out = jax.block_until_ready(out)
    assert out.shape == (2, OUTPUT_SHAPE), out.shape
    assert out.dtype == jnp.float32

    ref = jax.block_until_ready(_reference_forward(params, x))
    max_err = float(jnp.max(jnp.abs(out - ref)))
    assert max_err < 1e-3, f"max abs error vs reference: {max_err}"

    print("KERNEL_OK")
</pallas_src>

<mosaic_0001>
module attributes {stable_mosaic.version = 11 : i64} {
  func.func @_cnn_fused_kernel(%arg0: i32, %arg1: memref<256x32xf32, #tpu.memory_space<vmem>>, %arg2: memref<8x256xf32, #tpu.memory_space<vmem>>, %arg3: memref<256x8xf32, #tpu.memory_space<vmem>>, %arg4: memref<3x128x256xf32, #tpu.memory_space<vmem>>, %arg5: memref<9x32x64xf32, #tpu.memory_space<vmem>>, %arg6: memref<1x64xf32, #tpu.memory_space<vmem>>, %arg7: memref<3x64x128xf32, #tpu.memory_space<vmem>>, %arg8: memref<9x64x64xf32, #tpu.memory_space<vmem>>, %arg9: memref<1x64xf32, #tpu.memory_space<vmem>>, %arg10: memref<3x32x64xf32, #tpu.memory_space<vmem>>, %arg11: memref<9x64x32xf32, #tpu.memory_space<vmem>>, %arg12: memref<1x32xf32, #tpu.memory_space<vmem>>, %arg13: memref<3x32x32xf32, #tpu.memory_space<vmem>>, %arg14: memref<9x32x4xf32, #tpu.memory_space<vmem>>, %arg15: memref<1x4xf32, #tpu.memory_space<vmem>>, %arg16: memref<4x8x32xf32, #tpu.memory_space<vmem>>, %arg17: memref<4x4x32xf32, #tpu.memory_space<vmem>>, %arg18: memref<32x32xf32, #tpu.memory_space<vmem>>, %arg19: memref<32x32xf32, #tpu.memory_space<vmem>>, %arg20: memref<8x32xf32, #tpu.memory_space<vmem>>) attributes {dimension_semantics = [#tpu.dimension_semantics<parallel>], iteration_bounds = array<i64: 1>, scalar_prefetch = 0 : i64, scratch_operands = 0 : i64, tpu.core_type = #tpu.core_type<tc>, window_params = [{transform_indices = @transform_0, window_bounds = array<i64: 256, 32>}, {pipeline_mode = #tpu.pipeline_mode<synchronous>, transform_indices = @transform_1, window_bounds = array<i64: 8, 256>}, {pipeline_mode = #tpu.pipeline_mode<synchronous>, transform_indices = @transform_2, window_bounds = array<i64: 256, 8>}, {pipeline_mode = #tpu.pipeline_mode<synchronous>, transform_indices = @transform_3, window_bounds = array<i64: 3, 128, 256>}, {pipeline_mode = #tpu.pipeline_mode<synchronous>, transform_indices = @transform_4, window_bounds = array<i64: 9, 32, 64>}, {pipeline_mode = #tpu.pipeline_mode<synchronous>, transform_indices = @transform_5, window_bounds = array<i64: 1, 64>}, {pipeline_mode = #tpu.pipeline_mode<synchronous>, transform_indices = @transform_6, window_bounds = array<i64: 3, 64, 128>}, {pipeline_mode = #tpu.pipeline_mode<synchronous>, transform_indices = @transform_7, window_bounds = array<i64: 9, 64, 64>}, {pipeline_mode = #tpu.pipeline_mode<synchronous>, transform_indices = @transform_8, window_bounds = array<i64: 1, 64>}, {pipeline_mode = #tpu.pipeline_mode<synchronous>, transform_indices = @transform_9, window_bounds = array<i64: 3, 32, 64>}, {pipeline_mode = #tpu.pipeline_mode<synchronous>, transform_indices = @transform_10, window_bounds = array<i64: 9, 64, 32>}, {pipeline_mode = #tpu.pipeline_mode<synchronous>, transform_indices = @transform_11, window_bounds = array<i64: 1, 32>}, {pipeline_mode = #tpu.pipeline_mode<synchronous>, transform_indices = @transform_12, window_bounds = array<i64: 3, 32, 32>}, {pipeline_mode = #tpu.pipeline_mode<synchronous>, transform_indices = @transform_13, window_bounds = array<i64: 9, 32, 4>}, {pipeline_mode = #tpu.pipeline_mode<synchronous>, transform_indices = @transform_14, window_bounds = array<i64: 1, 4>}, {pipeline_mode = #tpu.pipeline_mode<synchronous>, transform_indices = @transform_15, window_bounds = array<i64: 4, 8, 32>}, {pipeline_mode = #tpu.pipeline_mode<synchronous>, transform_indices = @transform_16, window_bounds = array<i64: 4, 4, 32>}, {pipeline_mode = #tpu.pipeline_mode<synchronous>, transform_indices = @transform_17, window_bounds = array<i64: 32, 32>}, {pipeline_mode = #tpu.pipeline_mode<synchronous>, transform_indices = @transform_18, window_bounds = array<i64: 32, 32>}, {transform_indices = @transform_19, window_bounds = array<i64: 8, 32>}]} {
    %c0 = arith.constant 0 : index
    %c0_0 = arith.constant 0 : index
    %0 = vector.load %arg1[%c0, %c0_0] : memref<256x32xf32, #tpu.memory_space<vmem>>, vector<256x32xf32>
    %c0_1 = arith.constant 0 : index
    %c0_2 = arith.constant 0 : index
    %1 = vector.load %arg2[%c0_1, %c0_2] : memref<8x256xf32, #tpu.memory_space<vmem>>, vector<8x256xf32>
    %c0_3 = arith.constant 0 : index
    %c0_4 = arith.constant 0 : index
    %2 = vector.load %arg3[%c0_3, %c0_4] : memref<256x8xf32, #tpu.memory_space<vmem>>, vector<256x8xf32>
    %cst = arith.constant dense<0.000000e+00> : vector<8x32xf32>
    %3 = tpu.matmul %1, %0, %cst {dimension_numbers = #tpu.dot_dimension_numbers<[1], [0], [0], [1], [0, 0, 1, 1], [], []>} : vector<8x256xf32>, vector<256x32xf32>, vector<8x32xf32> -> vector<8x32xf32>
    %cst_5 = arith.constant dense<0.000000e+00> : vector<8xf32>
    %4 = vector.multi_reduction <add>, %3, %cst_5 [1] : vector<8x32xf32> to vector<8xf32>
    %5 = vector.shape_cast %4 : vector<8xf32> to vector<8x1xf32>
    %cst_6 = arith.constant 9.765625E-4 : f32
    %6 = vector.broadcast %cst_6 : f32 to vector<8x1xf32>
    %7 = arith.mulf %5, %6 : vector<8x1xf32>
    %8 = vector.shape_cast %7 : vector<8x1xf32> to vector<8x1xf32>
    %9 = vector.broadcast %8 : vector<8x1xf32> to vector<8x32xf32>
    %cst_7 = arith.constant dense<0.000000e+00> : vector<256x32xf32>
    %10 = tpu.matmul %2, %9, %cst_7 {dimension_numbers = #tpu.dot_dimension_numbers<[1], [0], [0], [1], [0, 0, 1, 1], [], []>} : vector<256x8xf32>, vector<8x32xf32>, vector<256x32xf32> -> vector<256x32xf32>
    %11 = arith.subf %0, %10 : vector<256x32xf32>
    %12 = arith.mulf %11, %11 : vector<256x32xf32>
    %cst_8 = arith.constant dense<0.000000e+00> : vector<8x32xf32>
    %13 = tpu.matmul %1, %12, %cst_8 {dimension_numbers = #tpu.dot_dimension_numbers<[1], [0], [0], [1], [0, 0, 1, 1], [], []>} : vector<8x256xf32>, vector<256x32xf32>, vector<8x32xf32> -> vector<8x32xf32>
    %cst_9 = arith.constant dense<0.000000e+00> : vector<8xf32>
    %14 = vector.multi_reduction <add>, %13, %cst_9 [1] : vector<8x32xf32> to vector<8xf32>
    %15 = vector.shape_cast %14 : vector<8xf32> to vector<8x1xf32>
    %cst_10 = arith.constant 9.765625E-4 : f32
    %16 = vector.broadcast %cst_10 : f32 to vector<8x1xf32>
    %17 = arith.mulf %15, %16 : vector<8x1xf32>
    %18 = math.sqrt %17 : vector<8x1xf32>
    %cst_11 = arith.constant 9.99999974E-6 : f32
    %19 = vector.broadcast %cst_11 : f32 to vector<8x1xf32>
    %20 = arith.addf %18, %19 : vector<8x1xf32>
    %21 = vector.shape_cast %20 : vector<8x1xf32> to vector<8x1xf32>
    %22 = vector.broadcast %21 : vector<8x1xf32> to vector<8x32xf32>
    %cst_12 = arith.constant dense<0.000000e+00> : vector<256x32xf32>
    %23 = tpu.matmul %2, %22, %cst_12 {dimension_numbers = #tpu.dot_dimension_numbers<[1], [0], [0], [1], [0, 0, 1, 1], [], []>} : vector<256x8xf32>, vector<8x32xf32>, vector<256x32xf32> -> vector<256x32xf32>
    %24 = arith.divf %11, %23 : vector<256x32xf32>
    %c0_13 = arith.constant 0 : index
    %c0_14 = arith.constant 0 : index
    %c0_15 = arith.constant 0 : index
    %25 = vector.load %arg4[%c0_13, %c0_14, %c0_15] : memref<3x128x256xf32, #tpu.memory_space<vmem>>, vector<1x128x256xf32>
    %26 = vector.shape_cast %25 : vector<1x128x256xf32> to vector<128x256xf32>
    %cst_16 = arith.constant dense<0.000000e+00> : vector<128x32xf32>
    %27 = tpu.matmul %26, %24, %cst_16 {dimension_numbers = #tpu.dot_dimension_numbers<[1], [0], [0], [1], [0, 0, 1, 1], [], []>} : vector<128x256xf32>, vector<256x32xf32>, vector<128x32xf32> -> vector<128x32xf32>
    %c0_17 = arith.constant 0 : index
    %c0_18 = arith.constant 0 : index
    %c0_19 = arith.constant 0 : index
    %28 = vector.load %arg5[%c0_17, %c0_18, %c0_19] : memref<9x32x64xf32, #tpu.memory_space<vmem>>, vector<1x32x64xf32>
    %29 = vector.shape_cast %28 : vector<1x32x64xf32> to vector<32x64xf32>
    %cst_20 = arith.constant dense<0.000000e+00> : vector<128x64xf32>
    %30 = tpu.matmul %27, %29, %cst_20 {dimension_numbers = #tpu.dot_dimension_numbers<[1], [0], [0], [1], [0, 0, 1, 1], [], []>} : vector<128x32xf32>, vector<32x64xf32>, vector<128x64xf32> -> vector<128x64xf32>
    %c1 = arith.constant 1 : index
    %c0_21 = arith.constant 0 : index
    %c0_22 = arith.constant 0 : index
    %31 = vector.load %arg5[%c1, %c0_21, %c0_22] : memref<9x32x64xf32, #tpu.memory_space<vmem>>, vector<1x32x64xf32>
    %32 = vector.shape_cast %31 : vector<1x32x64xf32> to vector<32x64xf32>
    %cst_23 = arith.constant dense<0.000000e+00> : vector<128x64xf32>
    %33 = tpu.matmul %27, %32, %cst_23 {dimension_numbers = #tpu.dot_dimension_numbers<[1], [0], [0], [1], [0, 0, 1, 1], [], []>} : vector<128x32xf32>, vector<32x64xf32>, vector<128x64xf32> -> vector<128x64xf32>
    %34 = arith.addf %30, %33 : vector<128x64xf32>
    %c2 = arith.constant 2 : index
    %c0_24 = arith.constant 0 : index
    %c0_25 = arith.constant 0 : index
    %35 = vector.load %arg5[%c2, %c0_24, %c0_25] : memref<9x32x64xf32, #tpu.memory_space<vmem>>, vector<1x32x64xf32>
    %36 = vector.shape_cast %35 : vector<1x32x64xf32> to vector<32x64xf32>
    %cst_26 = arith.constant dense<0.000000e+00> : vector<128x64xf32>
    %37 = tpu.matmul %27, %36, %cst_26 {dimension_numbers = #tpu.dot_dimension_numbers<[1], [0], [0], [1], [0, 0, 1, 1], [], []>} : vector<128x32xf32>, vector<32x64xf32>, vector<128x64xf32> -> vector<128x64xf32>
    %38 = arith.addf %34, %37 : vector<128x64xf32>
    %c1_27 = arith.constant 1 : index
    %c0_28 = arith.constant 0 : index
    %c0_29 = arith.constant 0 : index
    %39 = vector.load %arg4[%c1_27, %c0_28, %c0_29] : memref<3x128x256xf32, #tpu.memory_space<vmem>>, vector<1x128x256xf32>
    %40 = vector.shape_cast %39 : vector<1x128x256xf32> to vector<128x256xf32>
    %cst_30 = arith.constant dense<0.000000e+00> : vector<128x32xf32>
    %41 = tpu.matmul %40, %24, %cst_30 {dimension_numbers = #tpu.dot_dimension_numbers<[1], [0], [0], [1], [0, 0, 1, 1], [], []>} : vector<128x256xf32>, vector<256x32xf32>, vector<128x32xf32> -> vector<128x32xf32>
    %c3 = arith.constant 3 : index
    %c0_31 = arith.constant 0 : index
    %c0_32 = arith.constant 0 : index
    %42 = vector.load %arg5[%c3, %c0_31, %c0_32] : memref<9x32x64xf32, #tpu.memory_space<vmem>>, vector<1x32x64xf32>
    %43 = vector.shape_cast %42 : vector<1x32x64xf32> to vector<32x64xf32>
    %cst_33 = arith.constant dense<0.000000e+00> : vector<128x64xf32>
    %44 = tpu.matmul %41, %43, %cst_33 {dimension_numbers = #tpu.dot_dimension_numbers<[1], [0], [0], [1], [0, 0, 1, 1], [], []>} : vector<128x32xf32>, vector<32x64xf32>, vector<128x64xf32> -> vector<128x64xf32>
    %45 = arith.addf %38, %44 : vector<128x64xf32>
    %c4 = arith.constant 4 : index
    %c0_34 = arith.constant 0 : index
    %c0_35 = arith.constant 0 : index
    %46 = vector.load %arg5[%c4, %c0_34, %c0_35] : memref<9x32x64xf32, #tpu.memory_space<vmem>>, vector<1x32x64xf32>
    %47 = vector.shape_cast %46 : vector<1x32x64xf32> to vector<32x64xf32>
    %cst_36 = arith.constant dense<0.000000e+00> : vector<128x64xf32>
    %48 = tpu.matmul %41, %47, %cst_36 {dimension_numbers = #tpu.dot_dimension_numbers<[1], [0], [0], [1], [0, 0, 1, 1], [], []>} : vector<128x32xf32>, vector<32x64xf32>, vector<128x64xf32> -> vector<128x64xf32>
    %49 = arith.addf %45, %48 : vector<128x64xf32>
    %c5 = arith.constant 5 : index
    %c0_37 = arith.constant 0 : index
    %c0_38 = arith.constant 0 : index
    %50 = vector.load %arg5[%c5, %c0_37, %c0_38] : memref<9x32x64xf32, #tpu.memory_space<vmem>>, vector<1x32x64xf32>
    %51 = vector.shape_cast %50 : vector<1x32x64xf32> to vector<32x64xf32>
    %cst_39 = arith.constant dense<0.000000e+00> : vector<128x64xf32>
    %52 = tpu.matmul %41, %51, %cst_39 {dimension_numbers = #tpu.dot_dimension_numbers<[1], [0], [0], [1], [0, 0, 1, 1], [], []>} : vector<128x32xf32>, vector<32x64xf32>, vector<128x64xf32> -> vector<128x64xf32>
    %53 = arith.addf %49, %52 : vector<128x64xf32>
    %c2_40 = arith.constant 2 : index
    %c0_41 = arith.constant 0 : index
    %c0_42 = arith.constant 0 : index
    %54 = vector.load %arg4[%c2_40, %c0_41, %c0_42] : memref<3x128x256xf32, #tpu.memory_space<vmem>>, vector<1x128x256xf32>
    %55 = vector.shape_cast %54 : vector<1x128x256xf32> to vector<128x256xf32>
    %cst_43 = arith.constant dense<0.000000e+00> : vector<128x32xf32>
    %56 = tpu.matmul %55, %24, %cst_43 {dimension_numbers = #tpu.dot_dimension_numbers<[1], [0], [0], [1], [0, 0, 1, 1], [], []>} : vector<128x256xf32>, vector<256x32xf32>, vector<128x32xf32> -> vector<128x32xf32>
    %c6 = arith.constant 6 : index
    %c0_44 = arith.constant 0 : index
    %c0_45 = arith.constant 0 : index
    %57 = vector.load %arg5[%c6, %c0_44, %c0_45] : memref<9x32x64xf32, #tpu.memory_space<vmem>>, vector<1x32x64xf32>
    %58 = vector.shape_cast %57 : vector<1x32x64xf32> to vector<32x64xf32>
    %cst_46 = arith.constant dense<0.000000e+00> : vector<128x64xf32>
    %59 = tpu.matmul %56, %58, %cst_46 {dimension_numbers = #tpu.dot_dimension_numbers<[1], [0], [0], [1], [0, 0, 1, 1], [], []>} : vector<128x32xf32>, vector<32x64xf32>, vector<128x64xf32> -> vector<128x64xf32>
    %60 = arith.addf %53, %59 : vector<128x64xf32>
    %c7 = arith.constant 7 : index
    %c0_47 = arith.constant 0 : index
    %c0_48 = arith.constant 0 : index
    %61 = vector.load %arg5[%c7, %c0_47, %c0_48] : memref<9x32x64xf32, #tpu.memory_space<vmem>>, vector<1x32x64xf32>
    %62 = vector.shape_cast %61 : vector<1x32x64xf32> to vector<32x64xf32>
    %cst_49 = arith.constant dense<0.000000e+00> : vector<128x64xf32>
    %63 = tpu.matmul %56, %62, %cst_49 {dimension_numbers = #tpu.dot_dimension_numbers<[1], [0], [0], [1], [0, 0, 1, 1], [], []>} : vector<128x32xf32>, vector<32x64xf32>, vector<128x64xf32> -> vector<128x64xf32>
    %64 = arith.addf %60, %63 : vector<128x64xf32>
    %c8 = arith.constant 8 : index
    %c0_50 = arith.constant 0 : index
    %c0_51 = arith.constant 0 : index
    %65 = vector.load %arg5[%c8, %c0_50, %c0_51] : memref<9x32x64xf32, #tpu.memory_space<vmem>>, vector<1x32x64xf32>
    %66 = vector.shape_cast %65 : vector<1x32x64xf32> to vector<32x64xf32>
    %cst_52 = arith.constant dense<0.000000e+00> : vector<128x64xf32>
    %67 = tpu.matmul %56, %66, %cst_52 {dimension_numbers = #tpu.dot_dimension_numbers<[1], [0], [0], [1], [0, 0, 1, 1], [], []>} : vector<128x32xf32>, vector<32x64xf32>, vector<128x64xf32> -> vector<128x64xf32>
    %68 = arith.addf %64, %67 : vector<128x64xf32>
    %c0_53 = arith.constant 0 : index
    %c0_54 = arith.constant 0 : index
    %69 = vector.load %arg6[%c0_53, %c0_54] : memref<1x64xf32, #tpu.memory_space<vmem>>, vector<1x64xf32>
    %70 = vector.broadcast %69 : vector<1x64xf32> to vector<128x64xf32>
    %71 = arith.addf %68, %70 : vector<128x64xf32>
    %cst_55 = arith.constant 0.000000e+00 : f32
    %72 = vector.broadcast %cst_55 : f32 to vector<128x64xf32>
    %73 = arith.maximumf %71, %72 : vector<128x64xf32>
    %c0_56 = arith.constant 0 : index
    %c0_57 = arith.constant 0 : index
    %c0_58 = arith.constant 0 : index
    %74 = vector.load %arg7[%c0_56, %c0_57, %c0_58] : memref<3x64x128xf32, #tpu.memory_space<vmem>>, vector<1x64x128xf32>
    %75 = vector.shape_cast %74 : vector<1x64x128xf32> to vector<64x128xf32>
    %cst_59 = arith.constant dense<0.000000e+00> : vector<64x64xf32>
    %76 = tpu.matmul %75, %73, %cst_59 {dimension_numbers = #tpu.dot_dimension_numbers<[1], [0], [0], [1], [0, 0, 1, 1], [], []>} : vector<64x128xf32>, vector<128x64xf32>, vector<64x64xf32> -> vector<64x64xf32>
    %c0_60 = arith.constant 0 : index
    %c0_61 = arith.constant 0 : index
    %c0_62 = arith.constant 0 : index
    %77 = vector.load %arg8[%c0_60, %c0_61, %c0_62] : memref<9x64x64xf32, #tpu.memory_space<vmem>>, vector<1x64x64xf32>
    %78 = vector.shape_cast %77 : vector<1x64x64xf32> to vector<64x64xf32>
    %cst_63 = arith.constant dense<0.000000e+00> : vector<64x64xf32>
    %79 = tpu.matmul %76, %78, %cst_63 {dimension_numbers = #tpu.dot_dimension_numbers<[1], [0], [0], [1], [0, 0, 1, 1], [], []>} : vector<64x64xf32>, vector<64x64xf32>, vector<64x64xf32> -> vector<64x64xf32>
    %c1_64 = arith.constant 1 : index
    %c0_65 = arith.constant 0 : index
    %c0_66 = arith.constant 0 : index
    %80 = vector.load %arg8[%c1_64, %c0_65, %c0_66] : memref<9x64x64xf32, #tpu.memory_space<vmem>>, vector<1x64x64xf32>
    %81 = vector.shape_cast %80 : vector<1x64x64xf32> to vector<64x64xf32>
    %cst_67 = arith.constant dense<0.000000e+00> : vector<64x64xf32>
    %82 = tpu.matmul %76, %81, %cst_67 {dimension_numbers = #tpu.dot_dimension_numbers<[1], [0], [0], [1], [0, 0, 1, 1], [], []>} : vector<64x64xf32>, vector<64x64xf32>, vector<64x64xf32> -> vector<64x64xf32>
    %83 = arith.addf %79, %82 : vector<64x64xf32>
    %c2_68 = arith.constant 2 : index
    %c0_69 = arith.constant 0 : index
    %c0_70 = arith.constant 0 : index
    %84 = vector.load %arg8[%c2_68, %c0_69, %c0_70] : memref<9x64x64xf32, #tpu.memory_space<vmem>>, vector<1x64x64xf32>
    %85 = vector.shape_cast %84 : vector<1x64x64xf32> to vector<64x64xf32>
    %cst_71 = arith.constant dense<0.000000e+00> : vector<64x64xf32>
    %86 = tpu.matmul %76, %85, %cst_71 {dimension_numbers = #tpu.dot_dimension_numbers<[1], [0], [0], [1], [0, 0, 1, 1], [], []>} : vector<64x64xf32>, vector<64x64xf32>, vector<64x64xf32> -> vector<64x64xf32>
    %87 = arith.addf %83, %86 : vector<64x64xf32>
    %c1_72 = arith.constant 1 : index
    %c0_73 = arith.constant 0 : index
    %c0_74 = arith.constant 0 : index
    %88 = vector.load %arg7[%c1_72, %c0_73, %c0_74] : memref<3x64x128xf32, #tpu.memory_space<vmem>>, vector<1x64x128xf32>
    %89 = vector.shape_cast %88 : vector<1x64x128xf32> to vector<64x128xf32>
    %cst_75 = arith.constant dense<0.000000e+00> : vector<64x64xf32>
    %90 = tpu.matmul %89, %73, %cst_75 {dimension_numbers = #tpu.dot_dimension_numbers<[1], [0], [0], [1], [0, 0, 1, 1], [], []>} : vector<64x128xf32>, vector<128x64xf32>, vector<64x64xf32> -> vector<64x64xf32>
    %c3_76 = arith.constant 3 : index
    %c0_77 = arith.constant 0 : index
    %c0_78 = arith.constant 0 : index
    %91 = vector.load %arg8[%c3_76, %c0_77, %c0_78] : memref<9x64x64xf32, #tpu.memory_space<vmem>>, vector<1x64x64xf32>
    %92 = vector.shape_cast %91 : vector<1x64x64xf32> to vector<64x64xf32>
    %cst_79 = arith.constant dense<0.000000e+00> : vector<64x64xf32>
    %93 = tpu.matmul %90, %92, %cst_79 {dimension_numbers = #tpu.dot_dimension_numbers<[1], [0], [0], [1], [0, 0, 1, 1], [], []>} : vector<64x64xf32>, vector<64x64xf32>, vector<64x64xf32> -> vector<64x64xf32>
    %94 = arith.addf %87, %93 : vector<64x64xf32>
    %c4_80 = arith.constant 4 : index
    %c0_81 = arith.constant 0 : index
    %c0_82 = arith.constant 0 : index
    %95 = vector.load %arg8[%c4_80, %c0_81, %c0_82] : memref<9x64x64xf32, #tpu.memory_space<vmem>>, vector<1x64x64xf32>
    %96 = vector.shape_cast %95 : vector<1x64x64xf32> to vector<64x64xf32>
    %cst_83 = arith.constant dense<0.000000e+00> : vector<64x64xf32>
    %97 = tpu.matmul %90, %96, %cst_83 {dimension_numbers = #tpu.dot_dimension_numbers<[1], [0], [0], [1], [0, 0, 1, 1], [], []>} : vector<64x64xf32>, vector<64x64xf32>, vector<64x64xf32> -> vector<64x64xf32>
    %98 = arith.addf %94, %97 : vector<64x64xf32>
    %c5_84 = arith.constant 5 : index
    %c0_85 = arith.constant 0 : index
    %c0_86 = arith.constant 0 : index
    %99 = vector.load %arg8[%c5_84, %c0_85, %c0_86] : memref<9x64x64xf32, #tpu.memory_space<vmem>>, vector<1x64x64xf32>
    %100 = vector.shape_cast %99 : vector<1x64x64xf32> to vector<64x64xf32>
    %cst_87 = arith.constant dense<0.000000e+00> : vector<64x64xf32>
    %101 = tpu.matmul %90, %100, %cst_87 {dimension_numbers = #tpu.dot_dimension_numbers<[1], [0], [0], [1], [0, 0, 1, 1], [], []>} : vector<64x64xf32>, vector<64x64xf32>, vector<64x64xf32> -> vector<64x64xf32>
    %102 = arith.addf %98, %101 : vector<64x64xf32>
    %c2_88 = arith.constant 2 : index
    %c0_89 = arith.constant 0 : index
    %c0_90 = arith.constant 0 : index
    %103 = vector.load %arg7[%c2_88, %c0_89, %c0_90] : memref<3x64x128xf32, #tpu.memory_space<vmem>>, vector<1x64x128xf32>
    %104 = vector.shape_cast %103 : vector<1x64x128xf32> to vector<64x128xf32>
    %cst_91 = arith.constant dense<0.000000e+00> : vector<64x64xf32>
    %105 = tpu.matmul %104, %73, %cst_91 {dimension_numbers = #tpu.dot_dimension_numbers<[1], [0], [0], [1], [0, 0, 1, 1], [], []>} : vector<64x128xf32>, vector<128x64xf32>, vector<64x64xf32> -> vector<64x64xf32>
    %c6_92 = arith.constant 6 : index
    %c0_93 = arith.constant 0 : index
    %c0_94 = arith.constant 0 : index
    %106 = vector.load %arg8[%c6_92, %c0_93, %c0_94] : memref<9x64x64xf32, #tpu.memory_space<vmem>>, vector<1x64x64xf32>
    %107 = vector.shape_cast %106 : vector<1x64x64xf32> to vector<64x64xf32>
    %cst_95 = arith.constant dense<0.000000e+00> : vector<64x64xf32>
    %108 = tpu.matmul %105, %107, %cst_95 {dimension_numbers = #tpu.dot_dimension_numbers<[1], [0], [0], [1], [0, 0, 1, 1], [], []>} : vector<64x64xf32>, vector<64x64xf32>, vector<64x64xf32> -> vector<64x64xf32>
    %109 = arith.addf %102, %108 : vector<64x64xf32>
    %c7_96 = arith.constant 7 : index
    %c0_97 = arith.constant 0 : index
    %c0_98 = arith.constant 0 : index
    %110 = vector.load %arg8[%c7_96, %c0_97, %c0_98] : memref<9x64x64xf32, #tpu.memory_space<vmem>>, vector<1x64x64xf32>
    %111 = vector.shape_cast %110 : vector<1x64x64xf32> to vector<64x64xf32>
    %cst_99 = arith.constant dense<0.000000e+00> : vector<64x64xf32>
    %112 = tpu.matmul %105, %111, %cst_99 {dimension_numbers = #tpu.dot_dimension_numbers<[1], [0], [0], [1], [0, 0, 1, 1], [], []>} : vector<64x64xf32>, vector<64x64xf32>, vector<64x64xf32> -> vector<64x64xf32>
    %113 = arith.addf %109, %112 : vector<64x64xf32>
    %c8_100 = arith.constant 8 : index
    %c0_101 = arith.constant 0 : index
    %c0_102 = arith.constant 0 : index
    %114 = vector.load %arg8[%c8_100, %c0_101, %c0_102] : memref<9x64x64xf32, #tpu.memory_space<vmem>>, vector<1x64x64xf32>
    %115 = vector.shape_cast %114 : vector<1x64x64xf32> to vector<64x64xf32>
    %cst_103 = arith.constant dense<0.000000e+00> : vector<64x64xf32>
    %116 = tpu.matmul %105, %115, %cst_103 {dimension_numbers = #tpu.dot_dimension_numbers<[1], [0], [0], [1], [0, 0, 1, 1], [], []>} : vector<64x64xf32>, vector<64x64xf32>, vector<64x64xf32> -> vector<64x64xf32>
    %117 = arith.addf %113, %116 : vector<64x64xf32>
    %c0_104 = arith.constant 0 : index
    %c0_105 = arith.constant 0 : index
    %118 = vector.load %arg9[%c0_104, %c0_105] : memref<1x64xf32, #tpu.memory_space<vmem>>, vector<1x64xf32>
    %119 = vector.broadcast %118 : vector<1x64xf32> to vector<64x64xf32>
    %120 = arith.addf %117, %119 : vector<64x64xf32>
    %cst_106 = arith.constant 0.000000e+00 : f32
    %121 = vector.broadcast %cst_106 : f32 to vector<64x64xf32>
    %122 = arith.maximumf %120, %121 : vector<64x64xf32>
    %c0_107 = arith.constant 0 : index
    %c0_108 = arith.constant 0 : index
    %c0_109 = arith.constant 0 : index
    %123 = vector.load %arg10[%c0_107, %c0_108, %c0_109] : memref<3x32x64xf32, #tpu.memory_space<vmem>>, vector<1x32x64xf32>
    %124 = vector.shape_cast %123 : vector<1x32x64xf32> to vector<32x64xf32>
    %cst_110 = arith.constant dense<0.000000e+00> : vector<32x64xf32>
    %125 = tpu.matmul %124, %122, %cst_110 {dimension_numbers = #tpu.dot_dimension_numbers<[1], [0], [0], [1], [0, 0, 1, 1], [], []>} : vector<32x64xf32>, vector<64x64xf32>, vector<32x64xf32> -> vector<32x64xf32>
    %c0_111 = arith.constant 0 : index
    %c0_112 = arith.constant 0 : index
    %c0_113 = arith.constant 0 : index
    %126 = vector.load %arg11[%c0_111, %c0_112, %c0_113] : memref<9x64x32xf32, #tpu.memory_space<vmem>>, vector<1x64x32xf32>
    %127 = vector.shape_cast %126 : vector<1x64x32xf32> to vector<64x32xf32>
    %cst_114 = arith.constant dense<0.000000e+00> : vector<32x32xf32>
    %128 = tpu.matmul %125, %127, %cst_114 {dimension_numbers = #tpu.dot_dimension_numbers<[1], [0], [0], [1], [0, 0, 1, 1], [], []>} : vector<32x64xf32>, vector<64x32xf32>, vector<32x32xf32> -> vector<32x32xf32>
    %c1_115 = arith.constant 1 : index
    %c0_116 = arith.constant 0 : index
    %c0_117 = arith.constant 0 : index
    %129 = vector.load %arg11[%c1_115, %c0_116, %c0_117] : memref<9x64x32xf32, #tpu.memory_space<vmem>>, vector<1x64x32xf32>
    %130 = vector.shape_cast %129 : vector<1x64x32xf32> to vector<64x32xf32>
    %cst_118 = arith.constant dense<0.000000e+00> : vector<32x32xf32>
    %131 = tpu.matmul %125, %130, %cst_118 {dimension_numbers = #tpu.dot_dimension_numbers<[1], [0], [0], [1], [0, 0, 1, 1], [], []>} : vector<32x64xf32>, vector<64x32xf32>, vector<32x32xf32> -> vector<32x32xf32>
    %132 = arith.addf %128, %131 : vector<32x32xf32>
    %c2_119 = arith.constant 2 : index
    %c0_120 = arith.constant 0 : index
    %c0_121 = arith.constant 0 : index
    %133 = vector.load %arg11[%c2_119, %c0_120, %c0_121] : memref<9x64x32xf32, #tpu.memory_space<vmem>>, vector<1x64x32xf32>
    %134 = vector.shape_cast %133 : vector<1x64x32xf32> to vector<64x32xf32>
    %cst_122 = arith.constant dense<0.000000e+00> : vector<32x32xf32>
    %135 = tpu.matmul %125, %134, %cst_122 {dimension_numbers = #tpu.dot_dimension_numbers<[1], [0], [0], [1], [0, 0, 1, 1], [], []>} : vector<32x64xf32>, vector<64x32xf32>, vector<32x32xf32> -> vector<32x32xf32>
    %136 = arith.addf %132, %135 : vector<32x32xf32>
    %c1_123 = arith.constant 1 : index
    %c0_124 = arith.constant 0 : index
    %c0_125 = arith.constant 0 : index
    %137 = vector.load %arg10[%c1_123, %c0_124, %c0_125] : memref<3x32x64xf32, #tpu.memory_space<vmem>>, vector<1x32x64xf32>
    %138 = vector.shape_cast %137 : vector<1x32x64xf32> to vector<32x64xf32>
    %cst_126 = arith.constant dense<0.000000e+00> : vector<32x64xf32>
    %139 = tpu.matmul %138, %122, %cst_126 {dimension_numbers = #tpu.dot_dimension_numbers<[1], [0], [0], [1], [0, 0, 1, 1], [], []>} : vector<32x64xf32>, vector<64x64xf32>, vector<32x64xf32> -> vector<32x64xf32>
    %c3_127 = arith.constant 3 : index
    %c0_128 = arith.constant 0 : index
    %c0_129 = arith.constant 0 : index
    %140 = vector.load %arg11[%c3_127, %c0_128, %c0_129] : memref<9x64x32xf32, #tpu.memory_space<vmem>>, vector<1x64x32xf32>
    %141 = vector.shape_cast %140 : vector<1x64x32xf32> to vector<64x32xf32>
    %cst_130 = arith.constant dense<0.000000e+00> : vector<32x32xf32>
    %142 = tpu.matmul %139, %141, %cst_130 {dimension_numbers = #tpu.dot_dimension_numbers<[1], [0], [0], [1], [0, 0, 1, 1], [], []>} : vector<32x64xf32>, vector<64x32xf32>, vector<32x32xf32> -> vector<32x32xf32>
    %143 = arith.addf %136, %142 : vector<32x32xf32>
    %c4_131 = arith.constant 4 : index
    %c0_132 = arith.constant 0 : index
    %c0_133 = arith.constant 0 : index
    %144 = vector.load %arg11[%c4_131, %c0_132, %c0_133] : memref<9x64x32xf32, #tpu.memory_space<vmem>>, vector<1x64x32xf32>
    %145 = vector.shape_cast %144 : vector<1x64x32xf32> to vector<64x32xf32>
    %cst_134 = arith.constant dense<0.000000e+00> : vector<32x32xf32>
    %146 = tpu.matmul %139, %145, %cst_134 {dimension_numbers = #tpu.dot_dimension_numbers<[1], [0], [0], [1], [0, 0, 1, 1], [], []>} : vector<32x64xf32>, vector<64x32xf32>, vector<32x32xf32> -> vector<32x32xf32>
    %147 = arith.addf %143, %146 : vector<32x32xf32>
    %c5_135 = arith.constant 5 : index
    %c0_136 = arith.constant 0 : index
    %c0_137 = arith.constant 0 : index
    %148 = vector.load %arg11[%c5_135, %c0_136, %c0_137] : memref<9x64x32xf32, #tpu.memory_space<vmem>>, vector<1x64x32xf32>
    %149 = vector.shape_cast %148 : vector<1x64x32xf32> to vector<64x32xf32>
    %cst_138 = arith.constant dense<0.000000e+00> : vector<32x32xf32>
    %150 = tpu.matmul %139, %149, %cst_138 {dimension_numbers = #tpu.dot_dimension_numbers<[1], [0], [0], [1], [0, 0, 1, 1], [], []>} : vector<32x64xf32>, vector<64x32xf32>, vector<32x32xf32> -> vector<32x32xf32>
    %151 = arith.addf %147, %150 : vector<32x32xf32>
    %c2_139 = arith.constant 2 : index
    %c0_140 = arith.constant 0 : index
    %c0_141 = arith.constant 0 : index
    %152 = vector.load %arg10[%c2_139, %c0_140, %c0_141] : memref<3x32x64xf32, #tpu.memory_space<vmem>>, vector<1x32x64xf32>
    %153 = vector.shape_cast %152 : vector<1x32x64xf32> to vector<32x64xf32>
    %cst_142 = arith.constant dense<0.000000e+00> : vector<32x64xf32>
    %154 = tpu.matmul %153, %122, %cst_142 {dimension_numbers = #tpu.dot_dimension_numbers<[1], [0], [0], [1], [0, 0, 1, 1], [], []>} : vector<32x64xf32>, vector<64x64xf32>, vector<32x64xf32> -> vector<32x64xf32>
    %c6_143 = arith.constant 6 : index
    %c0_144 = arith.constant 0 : index
    %c0_145 = arith.constant 0 : index
    %155 = vector.load %arg11[%c6_143, %c0_144, %c0_145] : memref<9x64x32xf32, #tpu.memory_space<vmem>>, vector<1x64x32xf32>
    %156 = vector.shape_cast %155 : vector<1x64x32xf32> to vector<64x32xf32>
    %cst_146 = arith.constant dense<0.000000e+00> : vector<32x32xf32>
    %157 = tpu.matmul %154, %156, %cst_146 {dimension_numbers = #tpu.dot_dimension_numbers<[1], [0], [0], [1], [0, 0, 1, 1], [], []>} : vector<32x64xf32>, vector<64x32xf32>, vector<32x32xf32> -> vector<32x32xf32>
    %158 = arith.addf %151, %157 : vector<32x32xf32>
    %c7_147 = arith.constant 7 : index
    %c0_148 = arith.constant 0 : index
    %c0_149 = arith.constant 0 : index
    %159 = vector.load %arg11[%c7_147, %c0_148, %c0_149] : memref<9x64x32xf32, #tpu.memory_space<vmem>>, vector<1x64x32xf32>
    %160 = vector.shape_cast %159 : vector<1x64x32xf32> to vector<64x32xf32>
    %cst_150 = arith.constant dense<0.000000e+00> : vector<32x32xf32>
    %161 = tpu.matmul %154, %160, %cst_150 {dimension_numbers = #tpu.dot_dimension_numbers<[1], [0], [0], [1], [0, 0, 1, 1], [], []>} : vector<32x64xf32>, vector<64x32xf32>, vector<32x32xf32> -> vector<32x32xf32>
    %162 = arith.addf %158, %161 : vector<32x32xf32>
    %c8_151 = arith.constant 8 : index
    %c0_152 = arith.constant 0 : index
    %c0_153 = arith.constant 0 : index
    %163 = vector.load %arg11[%c8_151, %c0_152, %c0_153] : memref<9x64x32xf32, #tpu.memory_space<vmem>>, vector<1x64x32xf32>
    %164 = vector.shape_cast %163 : vector<1x64x32xf32> to vector<64x32xf32>
    %cst_154 = arith.constant dense<0.000000e+00> : vector<32x32xf32>
    %165 = tpu.matmul %154, %164, %cst_154 {dimension_numbers = #tpu.dot_dimension_numbers<[1], [0], [0], [1], [0, 0, 1, 1], [], []>} : vector<32x64xf32>, vector<64x32xf32>, vector<32x32xf32> -> vector<32x32xf32>
    %166 = arith.addf %162, %165 : vector<32x32xf32>
    %c0_155 = arith.constant 0 : index
    %c0_156 = arith.constant 0 : index
    %167 = vector.load %arg12[%c0_155, %c0_156] : memref<1x32xf32, #tpu.memory_space<vmem>>, vector<1x32xf32>
    %168 = vector.broadcast %167 : vector<1x32xf32> to vector<32x32xf32>
    %169 = arith.addf %166, %168 : vector<32x32xf32>
    %cst_157 = arith.constant 0.000000e+00 : f32
    %170 = vector.broadcast %cst_157 : f32 to vector<32x32xf32>
    %171 = arith.maximumf %169, %170 : vector<32x32xf32>
    %c0_158 = arith.constant 0 : index
    %c0_159 = arith.constant 0 : index
    %c0_160 = arith.constant 0 : index
    %172 = vector.load %arg13[%c0_158, %c0_159, %c0_160] : memref<3x32x32xf32, #tpu.memory_space<vmem>>, vector<1x32x32xf32>
    %173 = vector.shape_cast %172 : vector<1x32x32xf32> to vector<32x32xf32>
    %cst_161 = arith.constant dense<0.000000e+00> : vector<32x32xf32>
    %174 = tpu.matmul %173, %171, %cst_161 {dimension_numbers = #tpu.dot_dimension_numbers<[1], [0], [0], [1], [0, 0, 1, 1], [], []>} : vector<32x32xf32>, vector<32x32xf32>, vector<32x32xf32> -> vector<32x32xf32>
    %c0_162 = arith.constant 0 : index
    %c0_163 = arith.constant 0 : index
    %c0_164 = arith.constant 0 : index
    %175 = vector.load %arg14[%c0_162, %c0_163, %c0_164] : memref<9x32x4xf32, #tpu.memory_space<vmem>>, vector<1x32x4xf32>
    %176 = vector.shape_cast %175 : vector<1x32x4xf32> to vector<32x4xf32>
    %cst_165 = arith.constant dense<0.000000e+00> : vector<32x4xf32>
    %177 = tpu.matmul %174, %176, %cst_165 {dimension_numbers = #tpu.dot_dimension_numbers<[1], [0], [0], [1], [0, 0, 1, 1], [], []>} : vector<32x32xf32>, vector<32x4xf32>, vector<32x4xf32> -> vector<32x4xf32>
    %c1_166 = arith.constant 1 : index
    %c0_167 = arith.constant 0 : index
    %c0_168 = arith.constant 0 : index
    %178 = vector.load %arg14[%c1_166, %c0_167, %c0_168] : memref<9x32x4xf32, #tpu.memory_space<vmem>>, vector<1x32x4xf32>
    %179 = vector.shape_cast %178 : vector<1x32x4xf32> to vector<32x4xf32>
    %cst_169 = arith.constant dense<0.000000e+00> : vector<32x4xf32>
    %180 = tpu.matmul %174, %179, %cst_169 {dimension_numbers = #tpu.dot_dimension_numbers<[1], [0], [0], [1], [0, 0, 1, 1], [], []>} : vector<32x32xf32>, vector<32x4xf32>, vector<32x4xf32> -> vector<32x4xf32>
    %181 = arith.addf %177, %180 : vector<32x4xf32>
    %c2_170 = arith.constant 2 : index
    %c0_171 = arith.constant 0 : index
    %c0_172 = arith.constant 0 : index
    %182 = vector.load %arg14[%c2_170, %c0_171, %c0_172] : memref<9x32x4xf32, #tpu.memory_space<vmem>>, vector<1x32x4xf32>
    %183 = vector.shape_cast %182 : vector<1x32x4xf32> to vector<32x4xf32>
    %cst_173 = arith.constant dense<0.000000e+00> : vector<32x4xf32>
    %184 = tpu.matmul %174, %183, %cst_173 {dimension_numbers = #tpu.dot_dimension_numbers<[1], [0], [0], [1], [0, 0, 1, 1], [], []>} : vector<32x32xf32>, vector<32x4xf32>, vector<32x4xf32> -> vector<32x4xf32>
    %185 = arith.addf %181, %184 : vector<32x4xf32>
    %c1_174 = arith.constant 1 : index
    %c0_175 = arith.constant 0 : index
    %c0_176 = arith.constant 0 : index
    %186 = vector.load %arg13[%c1_174, %c0_175, %c0_176] : memref<3x32x32xf32, #tpu.memory_space<vmem>>, vector<1x32x32xf32>
    %187 = vector.shape_cast %186 : vector<1x32x32xf32> to vector<32x32xf32>
    %cst_177 = arith.constant dense<0.000000e+00> : vector<32x32xf32>
    %188 = tpu.matmul %187, %171, %cst_177 {dimension_numbers = #tpu.dot_dimension_numbers<[1], [0], [0], [1], [0, 0, 1, 1], [], []>} : vector<32x32xf32>, vector<32x32xf32>, vector<32x32xf32> -> vector<32x32xf32>
    %c3_178 = arith.constant 3 : index
    %c0_179 = arith.constant 0 : index
    %c0_180 = arith.constant 0 : index
    %189 = vector.load %arg14[%c3_178, %c0_179, %c0_180] : memref<9x32x4xf32, #tpu.memory_space<vmem>>, vector<1x32x4xf32>
    %190 = vector.shape_cast %189 : vector<1x32x4xf32> to vector<32x4xf32>
    %cst_181 = arith.constant dense<0.000000e+00> : vector<32x4xf32>
    %191 = tpu.matmul %188, %190, %cst_181 {dimension_numbers = #tpu.dot_dimension_numbers<[1], [0], [0], [1], [0, 0, 1, 1], [], []>} : vector<32x32xf32>, vector<32x4xf32>, vector<32x4xf32> -> vector<32x4xf32>
    %192 = arith.addf %185, %191 : vector<32x4xf32>
    %c4_182 = arith.constant 4 : index
    %c0_183 = arith.constant 0 : index
    %c0_184 = arith.constant 0 : index
    %193 = vector.load %arg14[%c4_182, %c0_183, %c0_184] : memref<9x32x4xf32, #tpu.memory_space<vmem>>, vector<1x32x4xf32>
    %194 = vector.shape_cast %193 : vector<1x32x4xf32> to vector<32x4xf32>
    %cst_185 = arith.constant dense<0.000000e+00> : vector<32x4xf32>
    %195 = tpu.matmul %188, %194, %cst_185 {dimension_numbers = #tpu.dot_dimension_numbers<[1], [0], [0], [1], [0, 0, 1, 1], [], []>} : vector<32x32xf32>, vector<32x4xf32>, vector<32x4xf32> -> vector<32x4xf32>
    %196 = arith.addf %192, %195 : vector<32x4xf32>
    %c5_186 = arith.constant 5 : index
    %c0_187 = arith.constant 0 : index
    %c0_188 = arith.constant 0 : index
    %197 = vector.load %arg14[%c5_186, %c0_187, %c0_188] : memref<9x32x4xf32, #tpu.memory_space<vmem>>, vector<1x32x4xf32>
    %198 = vector.shape_cast %197 : vector<1x32x4xf32> to vector<32x4xf32>
    %cst_189 = arith.constant dense<0.000000e+00> : vector<32x4xf32>
    %199 = tpu.matmul %188, %198, %cst_189 {dimension_numbers = #tpu.dot_dimension_numbers<[1], [0], [0], [1], [0, 0, 1, 1], [], []>} : vector<32x32xf32>, vector<32x4xf32>, vector<32x4xf32> -> vector<32x4xf32>
    %200 = arith.addf %196, %199 : vector<32x4xf32>
    %c2_190 = arith.constant 2 : index
    %c0_191 = arith.constant 0 : index
    %c0_192 = arith.constant 0 : index
    %201 = vector.load %arg13[%c2_190, %c0_191, %c0_192] : memref<3x32x32xf32, #tpu.memory_space<vmem>>, vector<1x32x32xf32>
    %202 = vector.shape_cast %201 : vector<1x32x32xf32> to vector<32x32xf32>
    %cst_193 = arith.constant dense<0.000000e+00> : vector<32x32xf32>
    %203 = tpu.matmul %202, %171, %cst_193 {dimension_numbers = #tpu.dot_dimension_numbers<[1], [0], [0], [1], [0, 0, 1, 1], [], []>} : vector<32x32xf32>, vector<32x32xf32>, vector<32x32xf32> -> vector<32x32xf32>
    %c6_194 = arith.constant 6 : index
    %c0_195 = arith.constant 0 : index
    %c0_196 = arith.constant 0 : index
    %204 = vector.load %arg14[%c6_194, %c0_195, %c0_196] : memref<9x32x4xf32, #tpu.memory_space<vmem>>, vector<1x32x4xf32>
    %205 = vector.shape_cast %204 : vector<1x32x4xf32> to vector<32x4xf32>
    %cst_197 = arith.constant dense<0.000000e+00> : vector<32x4xf32>
    %206 = tpu.matmul %203, %205, %cst_197 {dimension_numbers = #tpu.dot_dimension_numbers<[1], [0], [0], [1], [0, 0, 1, 1], [], []>} : vector<32x32xf32>, vector<32x4xf32>, vector<32x4xf32> -> vector<32x4xf32>
    %207 = arith.addf %200, %206 : vector<32x4xf32>
    %c7_198 = arith.constant 7 : index
    %c0_199 = arith.constant 0 : index
    %c0_200 = arith.constant 0 : index
    %208 = vector.load %arg14[%c7_198, %c0_199, %c0_200] : memref<9x32x4xf32, #tpu.memory_space<vmem>>, vector<1x32x4xf32>
    %209 = vector.shape_cast %208 : vector<1x32x4xf32> to vector<32x4xf32>
    %cst_201 = arith.constant dense<0.000000e+00> : vector<32x4xf32>
    %210 = tpu.matmul %203, %209, %cst_201 {dimension_numbers = #tpu.dot_dimension_numbers<[1], [0], [0], [1], [0, 0, 1, 1], [], []>} : vector<32x32xf32>, vector<32x4xf32>, vector<32x4xf32> -> vector<32x4xf32>
    %211 = arith.addf %207, %210 : vector<32x4xf32>
    %c8_202 = arith.constant 8 : index
    %c0_203 = arith.constant 0 : index
    %c0_204 = arith.constant 0 : index
    %212 = vector.load %arg14[%c8_202, %c0_203, %c0_204] : memref<9x32x4xf32, #tpu.memory_space<vmem>>, vector<1x32x4xf32>
    %213 = vector.shape_cast %212 : vector<1x32x4xf32> to vector<32x4xf32>
    %cst_205 = arith.constant dense<0.000000e+00> : vector<32x4xf32>
    %214 = tpu.matmul %203, %213, %cst_205 {dimension_numbers = #tpu.dot_dimension_numbers<[1], [0], [0], [1], [0, 0, 1, 1], [], []>} : vector<32x32xf32>, vector<32x4xf32>, vector<32x4xf32> -> vector<32x4xf32>
    %215 = arith.addf %211, %214 : vector<32x4xf32>
    %c0_206 = arith.constant 0 : index
    %c0_207 = arith.constant 0 : index
    %216 = vector.load %arg15[%c0_206, %c0_207] : memref<1x4xf32, #tpu.memory_space<vmem>>, vector<1x4xf32>
    %217 = vector.broadcast %216 : vector<1x4xf32> to vector<32x4xf32>
    %218 = arith.addf %215, %217 : vector<32x4xf32>
    %cst_208 = arith.constant 0.000000e+00 : f32
    %219 = vector.broadcast %cst_208 : f32 to vector<32x4xf32>
    %220 = arith.maximumf %218, %219 : vector<32x4xf32>
    %c0_209 = arith.constant 0 : index
    %c0_210 = arith.constant 0 : index
    %c0_211 = arith.constant 0 : index
    %221 = vector.load %arg16[%c0_209, %c0_210, %c0_211] : memref<4x8x32xf32, #tpu.memory_space<vmem>>, vector<1x8x32xf32>
    %222 = vector.shape_cast %221 : vector<1x8x32xf32> to vector<8x32xf32>
    %cst_212 = arith.constant dense<0.000000e+00> : vector<8x4xf32>
    %223 = tpu.matmul %222, %220, %cst_212 {dimension_numbers = #tpu.dot_dimension_numbers<[1], [0], [0], [1], [0, 0, 1, 1], [], []>} : vector<8x32xf32>, vector<32x4xf32>, vector<8x4xf32> -> vector<8x4xf32>
    %c0_213 = arith.constant 0 : index
    %c0_214 = arith.constant 0 : index
    %c0_215 = arith.constant 0 : index
    %224 = vector.load %arg17[%c0_213, %c0_214, %c0_215] : memref<4x4x32xf32, #tpu.memory_space<vmem>>, vector<1x4x32xf32>
    %225 = vector.shape_cast %224 : vector<1x4x32xf32> to vector<4x32xf32>
    %cst_216 = arith.constant dense<0.000000e+00> : vector<8x32xf32>
    %226 = tpu.matmul %223, %225, %cst_216 {dimension_numbers = #tpu.dot_dimension_numbers<[1], [0], [0], [1], [0, 0, 1, 1], [], []>} : vector<8x4xf32>, vector<4x32xf32>, vector<8x32xf32> -> vector<8x32xf32>
    %c1_217 = arith.constant 1 : index
    %c0_218 = arith.constant 0 : index
    %c0_219 = arith.constant 0 : index
    %227 = vector.load %arg16[%c1_217, %c0_218, %c0_219] : memref<4x8x32xf32, #tpu.memory_space<vmem>>, vector<1x8x32xf32>
    %228 = vector.shape_cast %227 : vector<1x8x32xf32> to vector<8x32xf32>
    %cst_220 = arith.constant dense<0.000000e+00> : vector<8x4xf32>
    %229 = tpu.matmul %228, %220, %cst_220 {dimension_numbers = #tpu.dot_dimension_numbers<[1], [0], [0], [1], [0, 0, 1, 1], [], []>} : vector<8x32xf32>, vector<32x4xf32>, vector<8x4xf32> -> vector<8x4xf32>
    %c1_221 = arith.constant 1 : index
    %c0_222 = arith.constant 0 : index
    %c0_223 = arith.constant 0 : index
    %230 = vector.load %arg17[%c1_221, %c0_222, %c0_223] : memref<4x4x32xf32, #tpu.memory_space<vmem>>, vector<1x4x32xf32>
    %231 = vector.shape_cast %230 : vector<1x4x32xf32> to vector<4x32xf32>
    %cst_224 = arith.constant dense<0.000000e+00> : vector<8x32xf32>
    %232 = tpu.matmul %229, %231, %cst_224 {dimension_numbers = #tpu.dot_dimension_numbers<[1], [0], [0], [1], [0, 0, 1, 1], [], []>} : vector<8x4xf32>, vector<4x32xf32>, vector<8x32xf32> -> vector<8x32xf32>
    %233 = arith.addf %226, %232 : vector<8x32xf32>
    %c2_225 = arith.constant 2 : index
    %c0_226 = arith.constant 0 : index
    %c0_227 = arith.constant 0 : index
    %234 = vector.load %arg16[%c2_225, %c0_226, %c0_227] : memref<4x8x32xf32, #tpu.memory_space<vmem>>, vector<1x8x32xf32>
    %235 = vector.shape_cast %234 : vector<1x8x32xf32> to vector<8x32xf32>
    %cst_228 = arith.constant dense<0.000000e+00> : vector<8x4xf32>
    %236 = tpu.matmul %235, %220, %cst_228 {dimension_numbers = #tpu.dot_dimension_numbers<[1], [0], [0], [1], [0, 0, 1, 1], [], []>} : vector<8x32xf32>, vector<32x4xf32>, vector<8x4xf32> -> vector<8x4xf32>
    %c2_229 = arith.constant 2 : index
    %c0_230 = arith.constant 0 : index
    %c0_231 = arith.constant 0 : index
    %237 = vector.load %arg17[%c2_229, %c0_230, %c0_231] : memref<4x4x32xf32, #tpu.memory_space<vmem>>, vector<1x4x32xf32>
    %238 = vector.shape_cast %237 : vector<1x4x32xf32> to vector<4x32xf32>
    %cst_232 = arith.constant dense<0.000000e+00> : vector<8x32xf32>
    %239 = tpu.matmul %236, %238, %cst_232 {dimension_numbers = #tpu.dot_dimension_numbers<[1], [0], [0], [1], [0, 0, 1, 1], [], []>} : vector<8x4xf32>, vector<4x32xf32>, vector<8x32xf32> -> vector<8x32xf32>
    %240 = arith.addf %233, %239 : vector<8x32xf32>
    %c3_233 = arith.constant 3 : index
    %c0_234 = arith.constant 0 : index
    %c0_235 = arith.constant 0 : index
    %241 = vector.load %arg16[%c3_233, %c0_234, %c0_235] : memref<4x8x32xf32, #tpu.memory_space<vmem>>, vector<1x8x32xf32>
    %242 = vector.shape_cast %241 : vector<1x8x32xf32> to vector<8x32xf32>
    %cst_236 = arith.constant dense<0.000000e+00> : vector<8x4xf32>
    %243 = tpu.matmul %242, %220, %cst_236 {dimension_numbers = #tpu.dot_dimension_numbers<[1], [0], [0], [1], [0, 0, 1, 1], [], []>} : vector<8x32xf32>, vector<32x4xf32>, vector<8x4xf32> -> vector<8x4xf32>
    %c3_237 = arith.constant 3 : index
    %c0_238 = arith.constant 0 : index
    %c0_239 = arith.constant 0 : index
    %244 = vector.load %arg17[%c3_237, %c0_238, %c0_239] : memref<4x4x32xf32, #tpu.memory_space<vmem>>, vector<1x4x32xf32>
    %245 = vector.shape_cast %244 : vector<1x4x32xf32> to vector<4x32xf32>
    %cst_240 = arith.constant dense<0.000000e+00> : vector<8x32xf32>
    %246 = tpu.matmul %243, %245, %cst_240 {dimension_numbers = #tpu.dot_dimension_numbers<[1], [0], [0], [1], [0, 0, 1, 1], [], []>} : vector<8x4xf32>, vector<4x32xf32>, vector<8x32xf32> -> vector<8x32xf32>
    %247 = arith.addf %240, %246 : vector<8x32xf32>
    %cst_241 = arith.constant 0.000000e+00 : f32
    %248 = vector.broadcast %cst_241 : f32 to vector<8x32xf32>
    %249 = arith.maximumf %247, %248 : vector<8x32xf32>
    %c0_242 = arith.constant 0 : index
    %c0_243 = arith.constant 0 : index
    %250 = vector.load %arg18[%c0_242, %c0_243] : memref<32x32xf32, #tpu.memory_space<vmem>>, vector<32x32xf32>
    %cst_244 = arith.constant dense<0.000000e+00> : vector<8x32xf32>
    %251 = tpu.matmul %249, %250, %cst_244 {dimension_numbers = #tpu.dot_dimension_numbers<[1], [0], [0], [1], [0, 0, 1, 1], [], []>} : vector<8x32xf32>, vector<32x32xf32>, vector<8x32xf32> -> vector<8x32xf32>
    %cst_245 = arith.constant 0.000000e+00 : f32
    %252 = vector.broadcast %cst_245 : f32 to vector<8x32xf32>
    %253 = arith.maximumf %251, %252 : vector<8x32xf32>
    %c0_246 = arith.constant 0 : index
    %c0_247 = arith.constant 0 : index
    %254 = vector.load %arg19[%c0_246, %c0_247] : memref<32x32xf32, #tpu.memory_space<vmem>>, vector<32x32xf32>
    %cst_248 = arith.constant dense<0.000000e+00> : vector<8x32xf32>
    %255 = tpu.matmul %253, %254, %cst_248 {dimension_numbers = #tpu.dot_dimension_numbers<[1], [0], [0], [1], [0, 0, 1, 1], [], []>} : vector<8x32xf32>, vector<32x32xf32>, vector<8x32xf32> -> vector<8x32xf32>
    %c0_249 = arith.constant 0 : index
    %c0_250 = arith.constant 0 : index
    %256 = vector.load %arg20[%c0_249, %c0_250] : memref<8x32xf32, #tpu.memory_space<vmem>>, vector<8x32xf32>
    tpu.vector_store %arg20[%c0_249, %c0_250], %255 {strides = array<i32>} : memref<8x32xf32, #tpu.memory_space<vmem>>, vector<8x32xf32>,
    return
  }
  func.func @transform_0(%arg0: i32) -> (i32, i32) {
    %c0_i32 = arith.constant 0 : i32
    %c0_i32_0 = arith.constant 0 : i32
    return %arg0, %c0_i32 : i32, i32
  }
  func.func @transform_1(%arg0: i32) -> (i32, i32) {
    %c0_i32 = arith.constant 0 : i32
    %c0_i32_0 = arith.constant 0 : i32
    %c0_i32_1 = arith.constant 0 : i32
    return %c0_i32, %c0_i32_0 : i32, i32
  }
  func.func @transform_2(%arg0: i32) -> (i32, i32) {
    %c0_i32 = arith.constant 0 : i32
    %c0_i32_0 = arith.constant 0 : i32
    %c0_i32_1 = arith.constant 0 : i32
    return %c0_i32, %c0_i32_0 : i32, i32
  }
  func.func @transform_3(%arg0: i32) -> (i32, i32, i32) {
    %c0_i32 = arith.constant 0 : i32
    %c0_i32_0 = arith.constant 0 : i32
    %c0_i32_1 = arith.constant 0 : i32
    %c0_i32_2 = arith.constant 0 : i32
    return %c0_i32, %c0_i32_0, %c0_i32_1 : i32, i32, i32
  }
  func.func @transform_4(%arg0: i32) -> (i32, i32, i32) {
    %c0_i32 = arith.constant 0 : i32
    %c0_i32_0 = arith.constant 0 : i32
    %c0_i32_1 = arith.constant 0 : i32
    %c0_i32_2 = arith.constant 0 : i32
    return %c0_i32, %c0_i32_0, %c0_i32_1 : i32, i32, i32
  }
  func.func @transform_5(%arg0: i32) -> (i32, i32) {
    %c0_i32 = arith.constant 0 : i32
    %c0_i32_0 = arith.constant 0 : i32
    %c0_i32_1 = arith.constant 0 : i32
    return %c0_i32, %c0_i32_0 : i32, i32
  }
  func.func @transform_6(%arg0: i32) -> (i32, i32, i32) {
    %c0_i32 = arith.constant 0 : i32
    %c0_i32_0 = arith.constant 0 : i32
    %c0_i32_1 = arith.constant 0 : i32
    %c0_i32_2 = arith.constant 0 : i32
    return %c0_i32, %c0_i32_0, %c0_i32_1 : i32, i32, i32
  }
  func.func @transform_7(%arg0: i32) -> (i32, i32, i32) {
    %c0_i32 = arith.constant 0 : i32
    %c0_i32_0 = arith.constant 0 : i32
    %c0_i32_1 = arith.constant 0 : i32
    %c0_i32_2 = arith.constant 0 : i32
    return %c0_i32, %c0_i32_0, %c0_i32_1 : i32, i32, i32
  }
  func.func @transform_8(%arg0: i32) -> (i32, i32) {
    %c0_i32 = arith.constant 0 : i32
    %c0_i32_0 = arith.constant 0 : i32
    %c0_i32_1 = arith.constant 0 : i32
    return %c0_i32, %c0_i32_0 : i32, i32
  }
  func.func @transform_9(%arg0: i32) -> (i32, i32, i32) {
    %c0_i32 = arith.constant 0 : i32
    %c0_i32_0 = arith.constant 0 : i32
    %c0_i32_1 = arith.constant 0 : i32
    %c0_i32_2 = arith.constant 0 : i32
    return %c0_i32, %c0_i32_0, %c0_i32_1 : i32, i32, i32
  }
  func.func @transform_10(%arg0: i32) -> (i32, i32, i32) {
    %c0_i32 = arith.constant 0 : i32
    %c0_i32_0 = arith.constant 0 : i32
    %c0_i32_1 = arith.constant 0 : i32
    %c0_i32_2 = arith.constant 0 : i32
    return %c0_i32, %c0_i32_0, %c0_i32_1 : i32, i32, i32
  }
  func.func @transform_11(%arg0: i32) -> (i32, i32) {
    %c0_i32 = arith.constant 0 : i32
    %c0_i32_0 = arith.constant 0 : i32
    %c0_i32_1 = arith.constant 0 : i32
    return %c0_i32, %c0_i32_0 : i32, i32
  }
  func.func @transform_12(%arg0: i32) -> (i32, i32, i32) {
    %c0_i32 = arith.constant 0 : i32
    %c0_i32_0 = arith.constant 0 : i32
    %c0_i32_1 = arith.constant 0 : i32
    %c0_i32_2 = arith.constant 0 : i32
    return %c0_i32, %c0_i32_0, %c0_i32_1 : i32, i32, i32
  }
  func.func @transform_13(%arg0: i32) -> (i32, i32, i32) {
    %c0_i32 = arith.constant 0 : i32
    %c0_i32_0 = arith.constant 0 : i32
    %c0_i32_1 = arith.constant 0 : i32
    %c0_i32_2 = arith.constant 0 : i32
    return %c0_i32, %c0_i32_0, %c0_i32_1 : i32, i32, i32
  }
  func.func @transform_14(%arg0: i32) -> (i32, i32) {
    %c0_i32 = arith.constant 0 : i32
    %c0_i32_0 = arith.constant 0 : i32
    %c0_i32_1 = arith.constant 0 : i32
    return %c0_i32, %c0_i32_0 : i32, i32
  }
  func.func @transform_15(%arg0: i32) -> (i32, i32, i32) {
    %c0_i32 = arith.constant 0 : i32
    %c0_i32_0 = arith.constant 0 : i32
    %c0_i32_1 = arith.constant 0 : i32
    %c0_i32_2 = arith.constant 0 : i32
    return %c0_i32, %c0_i32_0, %c0_i32_1 : i32, i32, i32
  }
  func.func @transform_16(%arg0: i32) -> (i32, i32, i32) {
    %c0_i32 = arith.constant 0 : i32
    %c0_i32_0 = arith.constant 0 : i32
    %c0_i32_1 = arith.constant 0 : i32
    %c0_i32_2 = arith.constant 0 : i32
    return %c0_i32, %c0_i32_0, %c0_i32_1 : i32, i32, i32
  }
  func.func @transform_17(%arg0: i32) -> (i32, i32) {
    %c0_i32 = arith.constant 0 : i32
    %c0_i32_0 = arith.constant 0 : i32
    %c0_i32_1 = arith.constant 0 : i32
    return %c0_i32, %c0_i32_0 : i32, i32
  }
  func.func @transform_18(%arg0: i32) -> (i32, i32) {
    %c0_i32 = arith.constant 0 : i32
    %c0_i32_0 = arith.constant 0 : i32
    %c0_i32_1 = arith.constant 0 : i32
    return %c0_i32, %c0_i32_0 : i32, i32
  }
  func.func @transform_19(%arg0: i32) -> (i32, i32) {
    %c0_i32 = arith.constant 0 : i32
    %c0_i32_0 = arith.constant 0 : i32
    return %arg0, %c0_i32 : i32, i32
  }
}

</mosaic_0001>

<llo_original>
// kernel: tile.33
$region0: #{tile.33}
  #allocation0 [shape = 's32[1]{0}', space=sflag, size = 0x4, scoped, tag = 'scoped memory for tile.33']
  %s0 = inlined_call_operand.vmem [shape: f32[8], index: 0, kind: input, shape index: {}]
  %s1 = inlined_call_operand.vmem [shape: f32[4,8], index: 1, kind: output, shape index: {}]
  // Predicated region
  $region2: #{tile.33} parent=0 // pred_check
    _
  $region3: #{tile.33} parent=0 // pred_check_branch
    %3 = sbr.rel (0) target = $region5
  $region4: #{tile.33} parent=0 // pred_region
    _
  $region5: #{tile.33} parent=0 // pred_fallthru
    _
  %v4 = vld [vmem:[%s0] ss:$0 sm:$0xff]
  %5 = vst [vmem:[%s1] sm:$0xf] %v4

// kernel: tile.28
$region0: #{tile.28}
  #allocation0 [shape = 's32[1]{0}', space=sflag, size = 0x4, scoped, tag = 'scoped memory for tile.28']
  %s0 = inlined_call_operand.vmem [shape: f32[8], index: 0, kind: input, shape index: {}]
  %s1 = inlined_call_operand.vmem [shape: f32[8,8], index: 1, kind: output, shape index: {}]
  // Predicated region
  $region2: #{tile.28} parent=0 // pred_check
    _
  $region3: #{tile.28} parent=0 // pred_check_branch
    %3 = sbr.rel (0) target = $region5
  $region4: #{tile.28} parent=0 // pred_region
    _
  $region5: #{tile.28} parent=0 // pred_fallthru
    _
  %v4 = vld [vmem:[%s0] ss:$0 sm:$0xff]
  %5 = vst [vmem:[%s1] sm:$0xff] %v4

// kernel: tile.34
$region0: #{tile.34}
  %s0 = inlined_call_operand.vmem [shape: f32[4,8], index: 0, kind: input, shape index: {}]
  %s1 = inlined_call_operand.vmem [shape: f32[1,32], index: 1, kind: output, shape index: {}]
  $region1: #{tile.34} parent=0
    #allocation0 [shape = 'u8[4096]{0}', space=vmem, size = 0x1000, scoped, tag = 'scoped mem for output reshape']
    #allocation1 [shape = 'u8[4096]{0}', space=vmem, size = 0x1000, scoped, tag = 'scoped mem for input reshape']
    %s3 = ssub.s32 16, 1
    %v4 = vld [vmem:[%s0] sm:%s3]
    %5 = vst [vmem:[#allocation1] sm:%s3] %v4
    %v6 = vld [vmem:[#allocation1] sm:$0x1]
    %vm7 = vcmask 64512
    %8 = vst.msk [vmem:[#allocation0] sm:$0x1] %vm7, %v6
    %s9 = scalar_lea.vmem [#allocation1], 3
    %v10 = vld [vmem:[%s9] sm:$0x1]
    %11 = vrot.lane.b32.xlu0 %v10, 24
    %v12 = vpop.permute.xlu0 %11
    %vm13 = vcmask 261312
    %14 = vst.msk [vmem:[#allocation0] sm:$0x1] %vm13, %v12
    %s15 = scalar_lea.vmem [#allocation1], 2
    %v16 = vld [vmem:[%s15] sm:$0x1]
    %17 = vrot.lane.b32.xlu0 %v16, 16
    %v18 = vpop.permute.xlu0 %17
    %vm19 = vcmask 195712
    %20 = vst.msk [vmem:[#allocation0] sm:$0x1] %vm19, %v18
    %s21 = scalar_lea.vmem [#allocation1], 1
    %v22 = vld [vmem:[%s21] sm:$0x1]
    %23 = vrot.lane.b32.xlu0 %v22, 8
    %v24 = vpop.permute.xlu0 %23
    %vm25 = vcmask 130112
    %26 = vst.msk [vmem:[#allocation0] sm:$0x1] %vm25, %v24
    %s28 = ssub.s32 2, 1
    %v29 = vld [vmem:[#allocation0] sm:%s28]
    %s31 = ssub.s32 2, 1
    %32 = vst [vmem:[%s1] sm:%s31] %v29

// kernel: tile.29
$region0: #{tile.29}
  %s0 = inlined_call_operand.vmem [shape: f32[8,8], index: 0, kind: input, shape index: {}]
  %s1 = inlined_call_operand.vmem [shape: f32[1,64], index: 1, kind: output, shape index: {}]
  $region1: #{tile.29} parent=0
    #allocation0 [shape = 'u8[4096]{0}', space=vmem, size = 0x1000, scoped, tag = 'scoped mem for output reshape']
    %v2 = vld [vmem:[%s0] sm:$0x1]
    %vm3 = vcmask 64512
    %4 = vst.msk [vmem:[#allocation0] sm:$0x1] %vm3, %v2
    %s5 = scalar_lea.vmem %s0, 7
    %v6 = vld [vmem:[%s5] sm:$0x1]
    %7 = vrot.lane.b32.xlu0 %v6, 56
    %v8 = vpop.permute.xlu0 %7
    %vm9 = vcmask 523712
    %10 = vst.msk [vmem:[#allocation0] sm:$0x1] %vm9, %v8
    %s11 = scalar_lea.vmem %s0, 6
    %v12 = vld [vmem:[%s11] sm:$0x1]
    %13 = vrot.lane.b32.xlu0 %v12, 48
    %v14 = vpop.permute.xlu0 %13
    %vm15 = vcmask 458112
    %16 = vst.msk [vmem:[#allocation0] sm:$0x1] %vm15, %v14
    %s17 = scalar_lea.vmem %s0, 5
    %v18 = vld [vmem:[%s17] sm:$0x1]
    %19 = vrot.lane.b32.xlu0 %v18, 40
    %v20 = vpop.permute.xlu0 %19
    %vm21 = vcmask 392512
    %22 = vst.msk [vmem:[#allocation0] sm:$0x1] %vm21, %v20
    %s23 = scalar_lea.vmem %s0, 4
    %v24 = vld [vmem:[%s23] sm:$0x1]
    %25 = vrot.lane.b32.xlu0 %v24, 32
    %v26 = vpop.permute.xlu0 %25
    %vm27 = vcmask 326912
    %28 = vst.msk [vmem:[#allocation0] sm:$0x1] %vm27, %v26
    %s29 = scalar_lea.vmem %s0, 3
    %v30 = vld [vmem:[%s29] sm:$0x1]
    %31 = vrot.lane.b32.xlu0 %v30, 24
    %v32 = vpop.permute.xlu0 %31
    %vm33 = vcmask 261312
    %34 = vst.msk [vmem:[#allocation0] sm:$0x1] %vm33, %v32
    %s35 = scalar_lea.vmem %s0, 2
    %v36 = vld [vmem:[%s35] sm:$0x1]
    %37 = vrot.lane.b32.xlu0 %v36, 16
    %v38 = vpop.permute.xlu0 %37
    %vm39 = vcmask 195712
    %40 = vst.msk [vmem:[#allocation0] sm:$0x1] %vm39, %v38
    %s41 = scalar_lea.vmem %s0, 1
    %v42 = vld [vmem:[%s41] sm:$0x1]
    %43 = vrot.lane.b32.xlu0 %v42, 8
    %v44 = vpop.permute.xlu0 %43
    %vm45 = vcmask 130112
    %46 = vst.msk [vmem:[#allocation0] sm:$0x1] %vm45, %v44
    %s48 = ssub.s32 2, 1
    %v49 = vld [vmem:[#allocation0] sm:%s48]
    %s51 = ssub.s32 2, 1
    %52 = vst [vmem:[%s1] sm:%s51] %v49

// kernel: tile.24
$region0: #{tile.24}
  %s0 = inlined_call_operand.vmem [shape: f32[16,4], index: 0, kind: input, shape index: {}]
  %s1 = inlined_call_operand.vmem [shape: f32[1,64], index: 1, kind: output, shape index: {}]
  $region1: #{tile.24} parent=0
    #allocation0 [shape = 'u8[4096]{0}', space=vmem, size = 0x1000, scoped, tag = 'scoped mem for output reshape']
    %v2 = vld [vmem:[%s0] sm:$0x1]
    %vm3 = vcmask 31744
    %4 = vst.msk [vmem:[#allocation0] sm:$0x1] %vm3, %v2
    %s5 = scalar_lea.vmem %s0, 15
    %v6 = vld [vmem:[%s5] sm:$0x1]
    %7 = vrot.lane.b32.xlu0 %v6, 60
    %v8 = vpop.permute.xlu0 %7
    %vm9 = vcmask 523744
    %10 = vst.msk [vmem:[#allocation0] sm:$0x1] %vm9, %v8
    %s11 = scalar_lea.vmem %s0, 14
    %v12 = vld [vmem:[%s11] sm:$0x1]
    %13 = vrot.lane.b32.xlu0 %v12, 56
    %v14 = vpop.permute.xlu0 %13
    %vm15 = vcmask 490944
    %16 = vst.msk [vmem:[#allocation0] sm:$0x1] %vm15, %v14
    %s17 = scalar_lea.vmem %s0, 13
    %v18 = vld [vmem:[%s17] sm:$0x1]
    %19 = vrot.lane.b32.xlu0 %v18, 52
    %v20 = vpop.permute.xlu0 %19
    %vm21 = vcmask 458144
    %22 = vst.msk [vmem:[#allocation0] sm:$0x1] %vm21, %v20
    %s23 = scalar_lea.vmem %s0, 12
    %v24 = vld [vmem:[%s23] sm:$0x1]
    %25 = vrot.lane.b32.xlu0 %v24, 48
    %v26 = vpop.permute.xlu0 %25
    %vm27 = vcmask 425344
    %28 = vst.msk [vmem:[#allocation0] sm:$0x1] %vm27, %v26
    %s29 = scalar_lea.vmem %s0, 11
    %v30 = vld [vmem:[%s29] sm:$0x1]
    %31 = vrot.lane.b32.xlu0 %v30, 44
    %v32 = vpop.permute.xlu0 %31
    %vm33 = vcmask 392544
    %34 = vst.msk [vmem:[#allocation0] sm:$0x1] %vm33, %v32
    %s35 = scalar_lea.vmem %s0, 10
    %v36 = vld [vmem:[%s35] sm:$0x1]
    %37 = vrot.lane.b32.xlu0 %v36, 40
    %v38 = vpop.permute.xlu0 %37
    %vm39 = vcmask 359744
    %40 = vst.msk [vmem:[#allocation0] sm:$0x1] %vm39, %v38
    %s41 = scalar_lea.vmem %s0, 9
    %v42 = vld [vmem:[%s41] sm:$0x1]
    %43 = vrot.lane.b32.xlu0 %v42, 36
    %v44 = vpop.permute.xlu0 %43
    %vm45 = vcmask 326944
    %46 = vst.msk [vmem:[#allocation0] sm:$0x1] %vm45, %v44
    %s47 = scalar_lea.vmem %s0, 8
    %v48 = vld [vmem:[%s47] sm:$0x1]
    %49 = vrot.lane.b32.xlu0 %v48, 32
    %v50 = vpop.permute.xlu0 %49
    %vm51 = vcmask 294144
    %52 = vst.msk [vmem:[#allocation0] sm:$0x1] %vm51, %v50
    %s53 = scalar_lea.vmem %s0, 7
    %v54 = vld [vmem:[%s53] sm:$0x1]
    %55 = vrot.lane.b32.xlu0 %v54, 28
    %v56 = vpop.permute.xlu0 %55
    %vm57 = vcmask 261344
    %58 = vst.msk [vmem:[#allocation0] sm:$0x1] %vm57, %v56
    %s59 = scalar_lea.vmem %s0, 6
    %v60 = vld [vmem:[%s59] sm:$0x1]
    %61 = vrot.lane.b32.xlu0 %v60, 24
    %v62 = vpop.permute.xlu0 %61
    %vm63 = vcmask 228544
    %64 = vst.msk [vmem:[#allocation0] sm:$0x1] %vm63, %v62
    %s65 = scalar_lea.vmem %s0, 5
    %v66 = vld [vmem:[%s65] sm:$0x1]
    %67 = vrot.lane.b32.xlu0 %v66, 20
    %v68 = vpop.permute.xlu0 %67
    %vm69 = vcmask 195744
    %70 = vst.msk [vmem:[#allocation0] sm:$0x1] %vm69, %v68
    %s71 = scalar_lea.vmem %s0, 4
    %v72 = vld [vmem:[%s71] sm:$0x1]
    %73 = vrot.lane.b32.xlu0 %v72, 16
    %v74 = vpop.permute.xlu0 %73
    %vm75 = vcmask 162944
    %76 = vst.msk [vmem:[#allocation0] sm:$0x1] %vm75, %v74
    %s77 = scalar_lea.vmem %s0, 3
    %v78 = vld [vmem:[%s77] sm:$0x1]
    %79 = vrot.lane.b32.xlu0 %v78, 12
    %v80 = vpop.permute.xlu0 %79
    %vm81 = vcmask 130144
    %82 = vst.msk [vmem:[#allocation0] sm:$0x1] %vm81, %v80
    %s83 = scalar_lea.vmem %s0, 2
    %v84 = vld [vmem:[%s83] sm:$0x1]
    %85 = vrot.lane.b32.xlu0 %v84, 8
    %v86 = vpop.permute.xlu0 %85
    %vm87 = vcmask 97344
    %88 = vst.msk [vmem:[#allocation0] sm:$0x1] %vm87, %v86
    %s89 = scalar_lea.vmem %s0, 1
    %v90 = vld [vmem:[%s89] sm:$0x1]
    %91 = vrot.lane.b32.xlu0 %v90, 4
    %v92 = vpop.permute.xlu0 %91
    %vm93 = vcmask 64544
    %94 = vst.msk [vmem:[#allocation0] sm:$0x1] %vm93, %v92
    %s96 = ssub.s32 2, 1
    %v97 = vld [vmem:[#allocation0] sm:%s96]
    %s99 = ssub.s32 2, 1
    %100 = vst [vmem:[%s1] sm:%s99] %v97

// kernel: cnn_simple_forward.1
$region0: #{cnn_simple_forward.1}
  #allocation0 [shape = 'u32[]', space=smem, size = 0x4, offset = 0x4, fixed_abs, tag = 'smem constant byte address 0x4 - core index']
  #allocation1 [shape = 'u32[72,128]{1,0:T(1,128)}', space=vmem, size = 0x9000, scoped, tag = 'internal scratch']
  %s0 = inlined_call_operand.vmem [shape: f32[256,32], index: 0, kind: input, shape index: {}]
  %s1 = inlined_call_operand.vmem [shape: f32[8,256], index: 1, kind: input, shape index: {}]
  %s2 = inlined_call_operand.vmem [shape: f32[256,8], index: 2, kind: input, shape index: {}]
  %s3 = inlined_call_operand.vmem [shape: f32[3,128,256], index: 3, kind: input, shape index: {}]
  %s4 = inlined_call_operand.vmem [shape: f32[9,32,64], index: 4, kind: input, shape index: {}]
  %s5 = inlined_call_operand.vmem [shape: f32[1,64], index: 5, kind: input, shape index: {}]
  %s6 = inlined_call_operand.vmem [shape: f32[3,64,128], index: 6, kind: input, shape index: {}]
  %s7 = inlined_call_operand.vmem [shape: f32[9,64,64], index: 7, kind: input, shape index: {}]
  %s8 = inlined_call_operand.vmem [shape: f32[1,64], index: 8, kind: input, shape index: {}]
  %s9 = inlined_call_operand.vmem [shape: f32[3,32,64], index: 9, kind: input, shape index: {}]
  %s10 = inlined_call_operand.vmem [shape: f32[9,64,32], index: 10, kind: input, shape index: {}]
  %s11 = inlined_call_operand.vmem [shape: f32[1,32], index: 11, kind: input, shape index: {}]
  %s12 = inlined_call_operand.vmem [shape: f32[3,32,32], index: 12, kind: input, shape index: {}]
  %s13 = inlined_call_operand.vmem [shape: f32[9,32,4], index: 13, kind: input, shape index: {}]
  %s14 = inlined_call_operand.vmem [shape: f32[1,4], index: 14, kind: input, shape index: {}]
  %s15 = inlined_call_operand.vmem [shape: f32[4,8,32], index: 15, kind: input, shape index: {}]
  %s16 = inlined_call_operand.vmem [shape: f32[4,4,32], index: 16, kind: input, shape index: {}]
  %s17 = inlined_call_operand.vmem [shape: f32[32,32], index: 17, kind: input, shape index: {}]
  %s18 = inlined_call_operand.vmem [shape: f32[32,32], index: 18, kind: input, shape index: {}]
  %s19 = inlined_call_operand.vmem [shape: f32[8,32], index: 19, kind: output, shape index: {}]
  %s20 = sld [smem:[#allocation0]]
  $region86: #{cnn_simple_forward.1} parent=0
    _
  %s22 = ssub.s32 1, %s20
  %s23 = scalar_select 0, %s22, %s20
  // Predicated region
  $region2: #{cnn_simple_forward.1} parent=0 // pred_check
    _
  $region3: #{cnn_simple_forward.1} parent=0 // pred_check_branch
    %25 = sbr.rel (0) target = $region5
  $region4: #{cnn_simple_forward.1} parent=0 // pred_region
    _
  $region5: #{cnn_simple_forward.1} parent=0 // pred_fallthru
    _
  // Predicated region
  $region6: #{cnn_simple_forward.1} parent=0 // pred_check
    _
  $region7: #{cnn_simple_forward.1} parent=0 // pred_check_branch
    %27 = sbr.rel (0) target = $region9
  $region8: #{cnn_simple_forward.1} parent=0 // pred_region
    _
  $region9: #{cnn_simple_forward.1} parent=0 // pred_fallthru
    _
  // Predicated region
  $region10: #{cnn_simple_forward.1} parent=0 // pred_check
    _
  $region11: #{cnn_simple_forward.1} parent=0 // pred_check_branch
    %29 = sbr.rel (0) target = $region13
  $region12: #{cnn_simple_forward.1} parent=0 // pred_region
    _
  $region13: #{cnn_simple_forward.1} parent=0 // pred_fallthru
    _
  // Predicated region
  $region14: #{cnn_simple_forward.1} parent=0 // pred_check
    _
  $region15: #{cnn_simple_forward.1} parent=0 // pred_check_branch
    %31 = sbr.rel (0) target = $region17
  $region16: #{cnn_simple_forward.1} parent=0 // pred_region
    _
  $region17: #{cnn_simple_forward.1} parent=0 // pred_fallthru
    _
  // Predicated region
  $region18: #{cnn_simple_forward.1} parent=0 // pred_check
    _
  $region19: #{cnn_simple_forward.1} parent=0 // pred_check_branch
    %33 = sbr.rel (0) target = $region21
  $region20: #{cnn_simple_forward.1} parent=0 // pred_region
    _
  $region21: #{cnn_simple_forward.1} parent=0 // pred_fallthru
    _
  // Predicated region
  $region22: #{cnn_simple_forward.1} parent=0 // pred_check
    _
  $region23: #{cnn_simple_forward.1} parent=0 // pred_check_branch
    %35 = sbr.rel (0) target = $region25
  $region24: #{cnn_simple_forward.1} parent=0 // pred_region
    _
  $region25: #{cnn_simple_forward.1} parent=0 // pred_fallthru
    _
  // Predicated region
  $region26: #{cnn_simple_forward.1} parent=0 // pred_check
    _
  $region27: #{cnn_simple_forward.1} parent=0 // pred_check_branch
    %37 = sbr.rel (0) target = $region29
  $region28: #{cnn_simple_forward.1} parent=0 // pred_region
    _
  $region29: #{cnn_simple_forward.1} parent=0 // pred_fallthru
    _
  // Predicated region
  $region30: #{cnn_simple_forward.1} parent=0 // pred_check
    _
  $region31: #{cnn_simple_forward.1} parent=0 // pred_check_branch
    %39 = sbr.rel (0) target = $region33
  $region32: #{cnn_simple_forward.1} parent=0 // pred_region
    _
  $region33: #{cnn_simple_forward.1} parent=0 // pred_fallthru
    _
  // Predicated region
  $region34: #{cnn_simple_forward.1} parent=0 // pred_check
    _
  $region35: #{cnn_simple_forward.1} parent=0 // pred_check_branch
    %41 = sbr.rel (0) target = $region37
  $region36: #{cnn_simple_forward.1} parent=0 // pred_region
    _
  $region37: #{cnn_simple_forward.1} parent=0 // pred_fallthru
    _
  // Predicated region
  $region38: #{cnn_simple_forward.1} parent=0 // pred_check
    _
  $region39: #{cnn_simple_forward.1} parent=0 // pred_check_branch
    %43 = sbr.rel (0) target = $region41
  $region40: #{cnn_simple_forward.1} parent=0 // pred_region
    _
  $region41: #{cnn_simple_forward.1} parent=0 // pred_fallthru
    _
  // Predicated region
  $region42: #{cnn_simple_forward.1} parent=0 // pred_check
    _
  $region43: #{cnn_simple_forward.1} parent=0 // pred_check_branch
    %45 = sbr.rel (0) target = $region45
  $region44: #{cnn_simple_forward.1} parent=0 // pred_region
    _
  $region45: #{cnn_simple_forward.1} parent=0 // pred_fallthru
    _
  // Predicated region
  $region46: #{cnn_simple_forward.1} parent=0 // pred_check
    _
  $region47: #{cnn_simple_forward.1} parent=0 // pred_check_branch
    %47 = sbr.rel (0) target = $region49
  $region48: #{cnn_simple_forward.1} parent=0 // pred_region
    _
  $region49: #{cnn_simple_forward.1} parent=0 // pred_fallthru
    _
  // Predicated region
  $region50: #{cnn_simple_forward.1} parent=0 // pred_check
    _
  $region51: #{cnn_simple_forward.1} parent=0 // pred_check_branch
    %49 = sbr.rel (0) target = $region53
  $region52: #{cnn_simple_forward.1} parent=0 // pred_region
    _
  $region53: #{cnn_simple_forward.1} parent=0 // pred_fallthru
    _
  // Predicated region
  $region54: #{cnn_simple_forward.1} parent=0 // pred_check
    _
  $region55: #{cnn_simple_forward.1} parent=0 // pred_check_branch
    %51 = sbr.rel (0) target = $region57
  $region56: #{cnn_simple_forward.1} parent=0 // pred_region
    _
  $region57: #{cnn_simple_forward.1} parent=0 // pred_fallthru
    _
  // Predicated region
  $region58: #{cnn_simple_forward.1} parent=0 // pred_check
    _
  $region59: #{cnn_simple_forward.1} parent=0 // pred_check_branch
    %53 = sbr.rel (0) target = $region61
  $region60: #{cnn_simple_forward.1} parent=0 // pred_region
    _
  $region61: #{cnn_simple_forward.1} parent=0 // pred_fallthru
    _
  // Predicated region
  $region62: #{cnn_simple_forward.1} parent=0 // pred_check
    _
  $region63: #{cnn_simple_forward.1} parent=0 // pred_check_branch
    %55 = sbr.rel (0) target = $region65
  $region64: #{cnn_simple_forward.1} parent=0 // pred_region
    _
  $region65: #{cnn_simple_forward.1} parent=0 // pred_fallthru
    _
  // Predicated region
  $region66: #{cnn_simple_forward.1} parent=0 // pred_check
    _
  $region67: #{cnn_simple_forward.1} parent=0 // pred_check_branch
    %57 = sbr.rel (0) target = $region69
  $region68: #{cnn_simple_forward.1} parent=0 // pred_region
    _
  $region69: #{cnn_simple_forward.1} parent=0 // pred_fallthru
    _
  // Predicated region
  $region70: #{cnn_simple_forward.1} parent=0 // pred_check
    _
  $region71: #{cnn_simple_forward.1} parent=0 // pred_check_branch
    %59 = sbr.rel (0) target = $region73
  $region72: #{cnn_simple_forward.1} parent=0 // pred_region
    _
  $region73: #{cnn_simple_forward.1} parent=0 // pred_fallthru
    _
  // Predicated region
  $region74: #{cnn_simple_forward.1} parent=0 // pred_check
    _
  $region75: #{cnn_simple_forward.1} parent=0 // pred_check_branch
    %61 = sbr.rel (0) target = $region77
  $region76: #{cnn_simple_forward.1} parent=0 // pred_region
    _
  $region77: #{cnn_simple_forward.1} parent=0 // pred_fallthru
    _
  %v62 = vld [vmem:[%s0] sm:$0xff]
  %v63 = vld [vmem:[%s0 + $0x8] sm:$0xff]
  %v64 = vld [vmem:[%s0 + $0x10] sm:$0xff]
  %v65 = vld [vmem:[%s0 + $0x18] sm:$0xff]
  %v66 = vld [vmem:[%s0 + $0x20] sm:$0xff]
  %v67 = vld [vmem:[%s0 + $0x28] sm:$0xff]
  %v68 = vld [vmem:[%s0 + $0x30] sm:$0xff]
  %v69 = vld [vmem:[%s0 + $0x38] sm:$0xff]
  %v70 = vld [vmem:[%s0 + $0x40] sm:$0xff]
  %v71 = vld [vmem:[%s0 + $0x48] sm:$0xff]
  %v72 = vld [vmem:[%s0 + $0x50] sm:$0xff]
  %v73 = vld [vmem:[%s0 + $0x58] sm:$0xff]
  %v74 = vld [vmem:[%s0 + $0x60] sm:$0xff]
  %v75 = vld [vmem:[%s0 + $0x68] sm:$0xff]
  %v76 = vld [vmem:[%s0 + $0x70] sm:$0xff]
  %v77 = vld [vmem:[%s0 + $0x78] sm:$0xff]
  %v78 = vld [vmem:[%s0 + $0x80] sm:$0xff]
  %v79 = vld [vmem:[%s0 + $0x88] sm:$0xff]
  %v80 = vld [vmem:[%s0 + $0x90] sm:$0xff]
  %v81 = vld [vmem:[%s0 + $0x98] sm:$0xff]
  %v82 = vld [vmem:[%s0 + $0xa0] sm:$0xff]
  %v83 = vld [vmem:[%s0 + $0xa8] sm:$0xff]
  %v84 = vld [vmem:[%s0 + $0xb0] sm:$0xff]
  %v85 = vld [vmem:[%s0 + $0xb8] sm:$0xff]
  %v86 = vld [vmem:[%s0 + $0xc0] sm:$0xff]
  %v87 = vld [vmem:[%s0 + $0xc8] sm:$0xff]
  %v88 = vld [vmem:[%s0 + $0xd0] sm:$0xff]
  %v89 = vld [vmem:[%s0 + $0xd8] sm:$0xff]
  %v90 = vld [vmem:[%s0 + $0xe0] sm:$0xff]
  %v91 = vld [vmem:[%s0 + $0xe8] sm:$0xff]
  %v92 = vld [vmem:[%s0 + $0xf0] sm:$0xff]
  %v93 = vld [vmem:[%s0 + $0xf8] sm:$0xff]
  %v94 = vld [vmem:[%s1] sm:$0xff]
  %v95 = vld [vmem:[%s1 + $0x8] sm:$0xff]
  %v96 = vld [vmem:[%s2] sm:$0xff]
  %v97 = vld [vmem:[%s2 + $0x8] sm:$0xff]
  %v98 = vld [vmem:[%s2 + $0x10] sm:$0xff]
  %v99 = vld [vmem:[%s2 + $0x18] sm:$0xff]
  %v100 = vld [vmem:[%s2 + $0x20] sm:$0xff]
  %v101 = vld [vmem:[%s2 + $0x28] sm:$0xff]
  %v102 = vld [vmem:[%s2 + $0x30] sm:$0xff]
  %v103 = vld [vmem:[%s2 + $0x38] sm:$0xff]
  %v104 = vld [vmem:[%s2 + $0x40] sm:$0xff]
  %v105 = vld [vmem:[%s2 + $0x48] sm:$0xff]
  %v106 = vld [vmem:[%s2 + $0x50] sm:$0xff]
  %v107 = vld [vmem:[%s2 + $0x58] sm:$0xff]
  %v108 = vld [vmem:[%s2 + $0x60] sm:$0xff]
  %v109 = vld [vmem:[%s2 + $0x68] sm:$0xff]
  %v110 = vld [vmem:[%s2 + $0x70] sm:$0xff]
  %v111 = vld [vmem:[%s2 + $0x78] sm:$0xff]
  %v112 = vld [vmem:[%s2 + $0x80] sm:$0xff]
  %v113 = vld [vmem:[%s2 + $0x88] sm:$0xff]
  %v114 = vld [vmem:[%s2 + $0x90] sm:$0xff]
  %v115 = vld [vmem:[%s2 + $0x98] sm:$0xff]
  %v116 = vld [vmem:[%s2 + $0xa0] sm:$0xff]
  %v117 = vld [vmem:[%s2 + $0xa8] sm:$0xff]
  %v118 = vld [vmem:[%s2 + $0xb0] sm:$0xff]
  %v119 = vld [vmem:[%s2 + $0xb8] sm:$0xff]
  %v120 = vld [vmem:[%s2 + $0xc0] sm:$0xff]
  %v121 = vld [vmem:[%s2 + $0xc8] sm:$0xff]
  %v122 = vld [vmem:[%s2 + $0xd0] sm:$0xff]
  %v123 = vld [vmem:[%s2 + $0xd8] sm:$0xff]
  %v124 = vld [vmem:[%s2 + $0xe0] sm:$0xff]
  %v125 = vld [vmem:[%s2 + $0xe8] sm:$0xff]
  %v126 = vld [vmem:[%s2 + $0xf0] sm:$0xff]
  %v127 = vld [vmem:[%s2 + $0xf8] sm:$0xff]
  %128 = vmatpush.msra.mxu0 %v77
  %129 = vmatpush.msra.mxu0 %v76
  %130 = vmatpush.msra.mxu0 %v75
  %131 = vmatpush.msra.mxu0 %v74
  %132 = vmatpush.msra.mxu0 %v73
  %133 = vmatpush.msra.mxu0 %v72
  %134 = vmatpush.msra.mxu0 %v71
  %135 = vmatpush.msra.mxu0 %v70
  %136 = vmatpush.msra.mxu0 %v69
  %137 = vmatpush.msra.mxu0 %v68
  %138 = vmatpush.msra.mxu0 %v67
  %139 = vmatpush.msra.mxu0 %v66
  %140 = vmatpush.msra.mxu0 %v65
  %141 = vmatpush.msra.mxu0 %v64
  %142 = vmatpush.msra.mxu0 %v63
  %143 = vmatpush.msra.mxu0 %v62
  %144 = vmatmul.f32.gmra.mxu0 %v94
  %v145 = vpop.f32.mrf.mxu0
  %v146 = vadd.f32 0.0, %v145
  %147 = vdwg.mxu0
  %148 = vmatpush.msra.mxu0 %v93
  %149 = vmatpush.msra.mxu0 %v92
  %150 = vmatpush.msra.mxu0 %v91
  %151 = vmatpush.msra.mxu0 %v90
  %152 = vmatpush.msra.mxu0 %v89
  %153 = vmatpush.msra.mxu0 %v88
  %154 = vmatpush.msra.mxu0 %v87
  %155 = vmatpush.msra.mxu0 %v86
  %156 = vmatpush.msra.mxu0 %v85
  %157 = vmatpush.msra.mxu0 %v84
  %158 = vmatpush.msra.mxu0 %v83
  %159 = vmatpush.msra.mxu0 %v82
  %160 = vmatpush.msra.mxu0 %v81
  %161 = vmatpush.msra.mxu0 %v80
  %162 = vmatpush.msra.mxu0 %v79
  %163 = vmatpush.msra.mxu0 %v78
  %164 = vmatmul.f32.gmra.mxu0 %v95
  %v165 = vpop.f32.mrf.mxu0
  %v166 = vadd.f32 %v146, %v165
  %167 = vdwg.mxu0
  %vm168 = vcmask 261120
  %v169 = vsel %vm168, %v166, 0.0
  %170 = vadd.xlane.f32.xlu0 %v169
  %v171 = vpop.xlane.xlu0 %170
  %v172 = vmul.f32 %v171, 0.0009765625
  %vm173 = vcmask 64512
  %v175 = vsel %vm173, %v96, 0
  %v178 = vsel %vm173, %v97, 0
  %v181 = vsel %vm173, %v98, 0
  %v184 = vsel %vm173, %v99, 0
  %v187 = vsel %vm173, %v100, 0
  %v190 = vsel %vm173, %v101, 0
  %v193 = vsel %vm173, %v102, 0
  %v196 = vsel %vm173, %v103, 0
  %v199 = vsel %vm173, %v104, 0
  %v202 = vsel %vm173, %v105, 0
  %v205 = vsel %vm173, %v106, 0
  %v208 = vsel %vm173, %v107, 0
  %v211 = vsel %vm173, %v108, 0
  %v214 = vsel %vm173, %v109, 0
  %v217 = vsel %vm173, %v110, 0
  %v220 = vsel %vm173, %v111, 0
  %v223 = vsel %vm173, %v112, 0
  %v226 = vsel %vm173, %v113, 0
  %v229 = vsel %vm173, %v114, 0
  %v232 = vsel %vm173, %v115, 0
  %v235 = vsel %vm173, %v116, 0
  %v238 = vsel %vm173, %v117, 0
  %v241 = vsel %vm173, %v118, 0
  %v244 = vsel %vm173, %v119, 0
  %v247 = vsel %vm173, %v120, 0
  %v250 = vsel %vm173, %v121, 0
  %v253 = vsel %vm173, %v122, 0
  %v256 = vsel %vm173, %v123, 0
  %v259 = vsel %vm173, %v124, 0
  %v262 = vsel %vm173, %v125, 0
  %v265 = vsel %vm173, %v126, 0
  %v268 = vsel %vm173, %v127, 0
  %270 = vmatpush.msra.mxu0 0.0
  %271 = vmatpush.msra.mxu0 0.0
  %272 = vmatpush.msra.mxu0 0.0
  %273 = vmatpush.msra.mxu0 0.0
  %274 = vmatpush.msra.mxu0 0.0
  %275 = vmatpush.msra.mxu0 0.0
  %276 = vmatpush.msra.mxu0 0.0
  %277 = vmatpush.msra.mxu0 0.0
  %278 = vmatpush.msra.mxu0 0.0
  %279 = vmatpush.msra.mxu0 0.0
  %280 = vmatpush.msra.mxu0 0.0
  %281 = vmatpush.msra.mxu0 0.0
  %282 = vmatpush.msra.mxu0 0.0
  %283 = vmatpush.msra.mxu0 0.0
  %284 = vmatpush.msra.mxu0 0.0
  %285 = vmatpush.msra.mxu0 %v172
  %286 = vmatmul.f32.gmra.mxu0 %v175
  %v287 = vpop.f32.mrf.mxu0
  %v288 = vadd.f32 0.0, %v287
  %289 = vmatmul.f32.gmra.mxu0 %v178
  %v290 = vpop.f32.mrf.mxu0
  %v291 = vadd.f32 0.0, %v290
  %292 = vmatmul.f32.gmra.mxu0 %v181
  %v293 = vpop.f32.mrf.mxu0
  %v294 = vadd.f32 0.0, %v293
  %295 = vmatmul.f32.gmra.mxu0 %v184
  %v296 = vpop.f32.mrf.mxu0
  %v297 = vadd.f32 0.0, %v296
  %298 = vmatmul.f32.gmra.mxu0 %v187
  %v299 = vpop.f32.mrf.mxu0
  %v300 = vadd.f32 0.0, %v299
  %301 = vmatmul.f32.gmra.mxu0 %v190
  %v302 = vpop.f32.mrf.mxu0
  %v303 = vadd.f32 0.0, %v302
  %304 = vmatmul.f32.gmra.mxu0 %v193
  %v305 = vpop.f32.mrf.mxu0
  %v306 = vadd.f32 0.0, %v305
  %307 = vmatmul.f32.gmra.mxu0 %v196
  %v308 = vpop.f32.mrf.mxu0
  %v309 = vadd.f32 0.0, %v308
  %310 = vmatmul.f32.gmra.mxu0 %v199
  %v311 = vpop.f32.mrf.mxu0
  %v312 = vadd.f32 0.0, %v311
  %313 = vmatmul.f32.gmra.mxu0 %v202
  %v314 = vpop.f32.mrf.mxu0
  %v315 = vadd.f32 0.0, %v314
  %316 = vmatmul.f32.gmra.mxu0 %v205
  %v317 = vpop.f32.mrf.mxu0
  %v318 = vadd.f32 0.0, %v317
  %319 = vmatmul.f32.gmra.mxu0 %v208
  %v320 = vpop.f32.mrf.mxu0
  %v321 = vadd.f32 0.0, %v320
  %322 = vmatmul.f32.gmra.mxu0 %v211
  %v323 = vpop.f32.mrf.mxu0
  %v324 = vadd.f32 0.0, %v323
  %325 = vmatmul.f32.gmra.mxu0 %v214
  %v326 = vpop.f32.mrf.mxu0
  %v327 = vadd.f32 0.0, %v326
  %328 = vmatmul.f32.gmra.mxu0 %v217
  %v329 = vpop.f32.mrf.mxu0
  %v330 = vadd.f32 0.0, %v329
  %331 = vmatmul.f32.gmra.mxu0 %v220
  %v332 = vpop.f32.mrf.mxu0
  %v333 = vadd.f32 0.0, %v332
  %334 = vmatmul.f32.gmra.mxu0 %v223
  %v335 = vpop.f32.mrf.mxu0
  %v336 = vadd.f32 0.0, %v335
  %337 = vmatmul.f32.gmra.mxu0 %v226
  %v338 = vpop.f32.mrf.mxu0
  %v339 = vadd.f32 0.0, %v338
  %340 = vmatmul.f32.gmra.mxu0 %v229
  %v341 = vpop.f32.mrf.mxu0
  %v342 = vadd.f32 0.0, %v341
  %343 = vmatmul.f32.gmra.mxu0 %v232
  %v344 = vpop.f32.mrf.mxu0
  %v345 = vadd.f32 0.0, %v344
  %346 = vmatmul.f32.gmra.mxu0 %v235
  %v347 = vpop.f32.mrf.mxu0
  %v348 = vadd.f32 0.0, %v347
  %349 = vmatmul.f32.gmra.mxu0 %v238
  %v350 = vpop.f32.mrf.mxu0
  %v351 = vadd.f32 0.0, %v350
  %352 = vmatmul.f32.gmra.mxu0 %v241
  %v353 = vpop.f32.mrf.mxu0
  %v354 = vadd.f32 0.0, %v353
  %355 = vmatmul.f32.gmra.mxu0 %v244
  %v356 = vpop.f32.mrf.mxu0
  %v357 = vadd.f32 0.0, %v356
  %358 = vmatmul.f32.gmra.mxu0 %v247
  %v359 = vpop.f32.mrf.mxu0
  %v360 = vadd.f32 0.0, %v359
  %361 = vmatmul.f32.gmra.mxu0 %v250
  %v362 = vpop.f32.mrf.mxu0
  %v363 = vadd.f32 0.0, %v362
  %364 = vmatmul.f32.gmra.mxu0 %v253
  %v365 = vpop.f32.mrf.mxu0
  %v366 = vadd.f32 0.0, %v365
  %367 = vmatmul.f32.gmra.mxu0 %v256
  %v368 = vpop.f32.mrf.mxu0
  %v369 = vadd.f32 0.0, %v368
  %370 = vmatmul.f32.gmra.mxu0 %v259
  %v371 = vpop.f32.mrf.mxu0
  %v372 = vadd.f32 0.0, %v371
  %373 = vmatmul.f32.gmra.mxu0 %v262
  %v374 = vpop.f32.mrf.mxu0
  %v375 = vadd.f32 0.0, %v374
  %376 = vmatmul.f32.gmra.mxu0 %v265
  %v377 = vpop.f32.mrf.mxu0
  %v378 = vadd.f32 0.0, %v377
  %379 = vmatmul.f32.gmra.mxu0 %v268
  %v380 = vpop.f32.mrf.mxu0
  %v381 = vadd.f32 0.0, %v380
  %382 = vdwg.mxu0
  %v383 = vsub.f32 %v62, %v288
  %v384 = vsub.f32 %v63, %v291
  %v385 = vsub.f32 %v64, %v294
  %v386 = vsub.f32 %v65, %v297
  %v387 = vsub.f32 %v66, %v300
  %v388 = vsub.f32 %v67, %v303
  %v389 = vsub.f32 %v68, %v306
  %v390 = vsub.f32 %v69, %v309
  %v391 = vsub.f32 %v70, %v312
  %v392 = vsub.f32 %v71, %v315
  %v393 = vsub.f32 %v72, %v318
  %v394 = vsub.f32 %v73, %v321
  %v395 = vsub.f32 %v74, %v324
  %v396 = vsub.f32 %v75, %v327
  %v397 = vsub.f32 %v76, %v330
  %v398 = vsub.f32 %v77, %v333
  %v399 = vsub.f32 %v78, %v336
  %v400 = vsub.f32 %v79, %v339
  %v401 = vsub.f32 %v80, %v342
  %v402 = vsub.f32 %v81, %v345
  %v403 = vsub.f32 %v82, %v348
  %v404 = vsub.f32 %v83, %v351
  %v405 = vsub.f32 %v84, %v354
  %v406 = vsub.f32 %v85, %v357
  %v407 = vsub.f32 %v86, %v360
  %v408 = vsub.f32 %v87, %v363
  %v409 = vsub.f32 %v88, %v366
  %v410 = vsub.f32 %v89, %v369
  %v411 = vsub.f32 %v90, %v372
  %v412 = vsub.f32 %v91, %v375
  %v413 = vsub.f32 %v92, %v378
  %v414 = vsub.f32 %v93, %v381
  %v415 = vmul.f32 %v383, %v383
  %v416 = vmul.f32 %v384, %v384
  %v417 = vmul.f32 %v385, %v385
  %v418 = vmul.f32 %v386, %v386
  %v419 = vmul.f32 %v387, %v387
  %v420 = vmul.f32 %v388, %v388
  %v421 = vmul.f32 %v389, %v389
  %v422 = vmul.f32 %v390, %v390
  %v423 = vmul.f32 %v391, %v391
  %v424 = vmul.f32 %v392, %v392
  %v425 = vmul.f32 %v393, %v393
  %v426 = vmul.f32 %v394, %v394
  %v427 = vmul.f32 %v395, %v395
  %v428 = vmul.f32 %v396, %v396
  %v429 = vmul.f32 %v397, %v397
  %v430 = vmul.f32 %v398, %v398
  %v431 = vmul.f32 %v399, %v399
  %v432 = vmul.f32 %v400, %v400
  %v433 = vmul.f32 %v401, %v401
  %v434 = vmul.f32 %v402, %v402
  %v435 = vmul.f32 %v403, %v403
  %v436 = vmul.f32 %v404, %v404
  %v437 = vmul.f32 %v405, %v405
  %v438 = vmul.f32 %v406, %v406
  %v439 = vmul.f32 %v407, %v407
  %v440 = vmul.f32 %v408, %v408
  %v441 = vmul.f32 %v409, %v409
  %v442 = vmul.f32 %v410, %v410
  %v443 = vmul.f32 %v411, %v411
  %v444 = vmul.f32 %v412, %v412
  %v445 = vmul.f32 %v413, %v413
  %v446 = vmul.f32 %v414, %v414
  %447 = vmatpush.msra.mxu0 %v430
  %448 = vmatpush.msra.mxu0 %v429
  %449 = vmatpush.msra.mxu0 %v428
  %450 = vmatpush.msra.mxu0 %v427
  %451 = vmatpush.msra.mxu0 %v426
  %452 = vmatpush.msra.mxu0 %v425
  %453 = vmatpush.msra.mxu0 %v424
  %454 = vmatpush.msra.mxu0 %v423
  %455 = vmatpush.msra.mxu0 %v422
  %456 = vmatpush.msra.mxu0 %v421
  %457 = vmatpush.msra.mxu0 %v420
  %458 = vmatpush.msra.mxu0 %v419
  %459 = vmatpush.msra.mxu0 %v418
  %460 = vmatpush.msra.mxu0 %v417
  %461 = vmatpush.msra.mxu0 %v416
  %462 = vmatpush.msra.mxu0 %v415
  %463 = vmatmul.f32.gmra.mxu0 %v94
  %v464 = vpop.f32.mrf.mxu0
  %v465 = vadd.f32 0.0, %v464
  %466 = vdwg.mxu0
  %467 = vmatpush.msra.mxu0 %v446
  %468 = vmatpush.msra.mxu0 %v445
  %469 = vmatpush.msra.mxu0 %v444
  %470 = vmatpush.msra.mxu0 %v443
  %471 = vmatpush.msra.mxu0 %v442
  %472 = vmatpush.msra.mxu0 %v441
  %473 = vmatpush.msra.mxu0 %v440
  %474 = vmatpush.msra.mxu0 %v439
  %475 = vmatpush.msra.mxu0 %v438
  %476 = vmatpush.msra.mxu0 %v437
  %477 = vmatpush.msra.mxu0 %v436
  %478 = vmatpush.msra.mxu0 %v435
  %479 = vmatpush.msra.mxu0 %v434
  %480 = vmatpush.msra.mxu0 %v433
  %481 = vmatpush.msra.mxu0 %v432
  %482 = vmatpush.msra.mxu0 %v431
  %483 = vmatmul.f32.gmra.mxu0 %v95
  %v484 = vpop.f32.mrf.mxu0
  %v485 = vadd.f32 %v465, %v484
  %486 = vdwg.mxu0
  %v487 = vsel %vm168, %v485, 0.0
  %488 = vadd.xlane.f32.xlu0 %v487
  %v489 = vpop.xlane.xlu0 %488
  %v490 = vmul.f32 %v489, 0.0009765625
  %v491 = vrsqrt.pop %v490
  %v492 = vmul.f32 %v491, %v490
  %v493 = vmul.f32 %v492, %v491
  %v494 = vmul.f32 0.5, %v493
  %v495 = vsub.f32 1.5, %v494
  %v496 = vmul.f32 %v491, %v495
  %v497 = vmul.f32 %v490, %v496
  %vm498 = vcmp.eq.f32.partialorder %v490, inf
  %v499 = vsel %vm498, %v490, %v497
  %vm500 = vcmp.eq.f32.partialorder %v490, 0.0
  %v501 = vand.u32 %v490, 2147483648
  %v502 = vsel %vm500, %v501, %v499
  %v503 = vadd.f32 %v502, 1e-05
  %504 = vmatpush.msra.mxu0 0.0
  %505 = vmatpush.msra.mxu0 0.0
  %506 = vmatpush.msra.mxu0 0.0
  %507 = vmatpush.msra.mxu0 0.0
  %508 = vmatpush.msra.mxu0 0.0
  %509 = vmatpush.msra.mxu0 0.0
  %510 = vmatpush.msra.mxu0 0.0
  %511 = vmatpush.msra.mxu0 0.0
  %512 = vmatpush.msra.mxu0 0.0
  %513 = vmatpush.msra.mxu0 0.0
  %514 = vmatpush.msra.mxu0 0.0
  %515 = vmatpush.msra.mxu0 0.0
  %516 = vmatpush.msra.mxu0 0.0
  %517 = vmatpush.msra.mxu0 0.0
  %518 = vmatpush.msra.mxu0 0.0
  %519 = vmatpush.msra.mxu0 %v503
  %520 = vmatmul.f32.gmra.mxu0 %v175
  %v521 = vpop.f32.mrf.mxu0
  %v522 = vadd.f32 0.0, %v521
  %523 = vmatmul.f32.gmra.mxu0 %v178
  %v524 = vpop.f32.mrf.mxu0
  %v525 = vadd.f32 0.0, %v524
  %526 = vmatmul.f32.gmra.mxu0 %v181
  %v527 = vpop.f32.mrf.mxu0
  %v528 = vadd.f32 0.0, %v527
  %529 = vmatmul.f32.gmra.mxu0 %v184
  %v530 = vpop.f32.mrf.mxu0
  %v531 = vadd.f32 0.0, %v530
  %532 = vmatmul.f32.gmra.mxu0 %v187
  %v533 = vpop.f32.mrf.mxu0
  %v534 = vadd.f32 0.0, %v533
  %535 = vmatmul.f32.gmra.mxu0 %v190
  %v536 = vpop.f32.mrf.mxu0
  %v537 = vadd.f32 0.0, %v536
  %538 = vmatmul.f32.gmra.mxu0 %v193
  %v539 = vpop.f32.mrf.mxu0
  %v540 = vadd.f32 0.0, %v539
  %541 = vmatmul.f32.gmra.mxu0 %v196
  %v542 = vpop.f32.mrf.mxu0
  %v543 = vadd.f32 0.0, %v542
  %544 = vmatmul.f32.gmra.mxu0 %v199
  %v545 = vpop.f32.mrf.mxu0
  %v546 = vadd.f32 0.0, %v545
  %547 = vmatmul.f32.gmra.mxu0 %v202
  %v548 = vpop.f32.mrf.mxu0
  %v549 = vadd.f32 0.0, %v548
  %550 = vmatmul.f32.gmra.mxu0 %v205
  %v551 = vpop.f32.mrf.mxu0
  %v552 = vadd.f32 0.0, %v551
  %553 = vmatmul.f32.gmra.mxu0 %v208
  %v554 = vpop.f32.mrf.mxu0
  %v555 = vadd.f32 0.0, %v554
  %556 = vmatmul.f32.gmra.mxu0 %v211
  %v557 = vpop.f32.mrf.mxu0
  %v558 = vadd.f32 0.0, %v557
  %559 = vmatmul.f32.gmra.mxu0 %v214
  %v560 = vpop.f32.mrf.mxu0
  %v561 = vadd.f32 0.0, %v560
  %562 = vmatmul.f32.gmra.mxu0 %v217
  %v563 = vpop.f32.mrf.mxu0
  %v564 = vadd.f32 0.0, %v563
  %565 = vmatmul.f32.gmra.mxu0 %v220
  %v566 = vpop.f32.mrf.mxu0
  %v567 = vadd.f32 0.0, %v566
  %568 = vmatmul.f32.gmra.mxu0 %v223
  %v569 = vpop.f32.mrf.mxu0
  %v570 = vadd.f32 0.0, %v569
  %571 = vmatmul.f32.gmra.mxu0 %v226
  %v572 = vpop.f32.mrf.mxu0
  %v573 = vadd.f32 0.0, %v572
  %574 = vmatmul.f32.gmra.mxu0 %v229
  %v575 = vpop.f32.mrf.mxu0
  %v576 = vadd.f32 0.0, %v575
  %577 = vmatmul.f32.gmra.mxu0 %v232
  %v578 = vpop.f32.mrf.mxu0
  %v579 = vadd.f32 0.0, %v578
  %580 = vmatmul.f32.gmra.mxu0 %v235
  %v581 = vpop.f32.mrf.mxu0
  %v582 = vadd.f32 0.0, %v581
  %583 = vmatmul.f32.gmra.mxu0 %v238
  %v584 = vpop.f32.mrf.mxu0
  %v585 = vadd.f32 0.0, %v584
  %586 = vmatmul.f32.gmra.mxu0 %v241
  %v587 = vpop.f32.mrf.mxu0
  %v588 = vadd.f32 0.0, %v587
  %589 = vmatmul.f32.gmra.mxu0 %v244
  %v590 = vpop.f32.mrf.mxu0
  %v591 = vadd.f32 0.0, %v590
  %592 = vmatmul.f32.gmra.mxu0 %v247
  %v593 = vpop.f32.mrf.mxu0
  %v594 = vadd.f32 0.0, %v593
  %595 = vmatmul.f32.gmra.mxu0 %v250
  %v596 = vpop.f32.mrf.mxu0
  %v597 = vadd.f32 0.0, %v596
  %598 = vmatmul.f32.gmra.mxu0 %v253
  %v599 = vpop.f32.mrf.mxu0
  %v600 = vadd.f32 0.0, %v599
  %601 = vmatmul.f32.gmra.mxu0 %v256
  %v602 = vpop.f32.mrf.mxu0
  %v603 = vadd.f32 0.0, %v602
  %604 = vmatmul.f32.gmra.mxu0 %v259
  %v605 = vpop.f32.mrf.mxu0
  %v606 = vadd.f32 0.0, %v605
  %607 = vmatmul.f32.gmra.mxu0 %v262
  %v608 = vpop.f32.mrf.mxu0
  %v609 = vadd.f32 0.0, %v608
  %610 = vmatmul.f32.gmra.mxu0 %v265
  %v611 = vpop.f32.mrf.mxu0
  %v612 = vadd.f32 0.0, %v611
  %613 = vmatmul.f32.gmra.mxu0 %v268
  %v614 = vpop.f32.mrf.mxu0
  %v615 = vadd.f32 0.0, %v614
  %616 = vdwg.mxu0
  %v617 = vrcp.pop %v522
  %v618 = vmul.f32 %v522, %v617
  %v619 = vsub.f32 1.0, %v618
  %v620 = vmul.f32 %v617, %v619
  %v621 = vadd.f32 %v617, %v620
  %vm622 = vweird.f32 %v522
  %vm623 = vweird.f32 %v617
  %vm624 = vmor %vm622, %vm623
  %v625 = vsel %vm624, %v617, %v621
  %v626 = vand.u32 2147483647, %v522
  %vm627 = vcmp.eq.f32.partialorder %v626, 8.507059e+37
  %v628 = vand.u32 %v522, 2147483648
  %v629 = vor.u32 1.1754944e-38, %v628
  %v630 = vsel %vm627, %v629, %v625
  %v631 = vmul.f32 %v383, %v630
  %v632 = vrcp.pop %v525
  %v633 = vmul.f32 %v525, %v632
  %v634 = vsub.f32 1.0, %v633
  %v635 = vmul.f32 %v632, %v634
  %v636 = vadd.f32 %v632, %v635
  %vm637 = vweird.f32 %v525
  %vm638 = vweird.f32 %v632
  %vm639 = vmor %vm637, %vm638
  %v640 = vsel %vm639, %v632, %v636
  %v641 = vand.u32 2147483647, %v525
  %vm642 = vcmp.eq.f32.partialorder %v641, 8.507059e+37
  %v643 = vand.u32 %v525, 2147483648
  %v644 = vor.u32 1.1754944e-38, %v643
  %v645 = vsel %vm642, %v644, %v640
  %v646 = vmul.f32 %v384, %v645
  %v647 = vrcp.pop %v528
  %v648 = vmul.f32 %v528, %v647
  %v649 = vsub.f32 1.0, %v648
  %v650 = vmul.f32 %v647, %v649
  %v651 = vadd.f32 %v647, %v650
  %vm652 = vweird.f32 %v528
  %vm653 = vweird.f32 %v647
  %vm654 = vmor %vm652, %vm653
  %v655 = vsel %vm654, %v647, %v651
  %v656 = vand.u32 2147483647, %v528
  %vm657 = vcmp.eq.f32.partialorder %v656, 8.507059e+37
  %v658 = vand.u32 %v528, 2147483648
  %v659 = vor.u32 1.1754944e-38, %v658
  %v660 = vsel %vm657, %v659, %v655
  %v661 = vmul.f32 %v385, %v660
  %v662 = vrcp.pop %v531
  %v663 = vmul.f32 %v531, %v662
  %v664 = vsub.f32 1.0, %v663
  %v665 = vmul.f32 %v662, %v664
  %v666 = vadd.f32 %v662, %v665
  %vm667 = vweird.f32 %v531
  %vm668 = vweird.f32 %v662
  %vm669 = vmor %vm667, %vm668
  %v670 = vsel %vm669, %v662, %v666
  %v671 = vand.u32 2147483647, %v531
  %vm672 = vcmp.eq.f32.partialorder %v671, 8.507059e+37
  %v673 = vand.u32 %v531, 2147483648
  %v674 = vor.u32 1.1754944e-38, %v673
  %v675 = vsel %vm672, %v674, %v670
  %v676 = vmul.f32 %v386, %v675
  %v677 = vrcp.pop %v534
  %v678 = vmul.f32 %v534, %v677
  %v679 = vsub.f32 1.0, %v678
  %v680 = vmul.f32 %v677, %v679
  %v681 = vadd.f32 %v677, %v680
  %vm682 = vweird.f32 %v534
  %vm683 = vweird.f32 %v677
  %vm684 = vmor %vm682, %vm683
  %v685 = vsel %vm684, %v677, %v681
  %v686 = vand.u32 2147483647, %v534
  %vm687 = vcmp.eq.f32.partialorder %v686, 8.507059e+37
  %v688 = vand.u32 %v534, 2147483648
  %v689 = vor.u32 1.1754944e-38, %v688
  %v690 = vsel %vm687, %v689, %v685
  %v691 = vmul.f32 %v387, %v690
  %v692 = vrcp.pop %v537
  %v693 = vmul.f32 %v537, %v692
  %v694 = vsub.f32 1.0, %v693
  %v695 = vmul.f32 %v692, %v694
  %v696 = vadd.f32 %v692, %v695
  %vm697 = vweird.f32 %v537
  %vm698 = vweird.f32 %v692
  %vm699 = vmor %vm697, %vm698
  %v700 = vsel %vm699, %v692, %v696
  %v701 = vand.u32 2147483647, %v537
  %vm702 = vcmp.eq.f32.partialorder %v701, 8.507059e+37
  %v703 = vand.u32 %v537, 2147483648
  %v704 = vor.u32 1.1754944e-38, %v703
  %v705 = vsel %vm702, %v704, %v700
  %v706 = vmul.f32 %v388, %v705
  %v707 = vrcp.pop %v540
  %v708 = vmul.f32 %v540, %v707
  %v709 = vsub.f32 1.0, %v708
  %v710 = vmul.f32 %v707, %v709
  %v711 = vadd.f32 %v707, %v710
  %vm712 = vweird.f32 %v540
  %vm713 = vweird.f32 %v707
  %vm714 = vmor %vm712, %vm713
  %v715 = vsel %vm714, %v707, %v711
  %v716 = vand.u32 2147483647, %v540
  %vm717 = vcmp.eq.f32.partialorder %v716, 8.507059e+37
  %v718 = vand.u32 %v540, 2147483648
  %v719 = vor.u32 1.1754944e-38, %v718
  %v720 = vsel %vm717, %v719, %v715
  %v721 = vmul.f32 %v389, %v720
  %v722 = vrcp.pop %v543
  %v723 = vmul.f32 %v543, %v722
  %v724 = vsub.f32 1.0, %v723
  %v725 = vmul.f32 %v722, %v724
  %v726 = vadd.f32 %v722, %v725
  %vm727 = vweird.f32 %v543
  %vm728 = vweird.f32 %v722
  %vm729 = vmor %vm727, %vm728
  %v730 = vsel %vm729, %v722, %v726
  %v731 = vand.u32 2147483647, %v543
  %vm732 = vcmp.eq.f32.partialorder %v731, 8.507059e+37
  %v733 = vand.u32 %v543, 2147483648
  %v734 = vor.u32 1.1754944e-38, %v733
  %v735 = vsel %vm732, %v734, %v730
  %v736 = vmul.f32 %v390, %v735
  %v737 = vrcp.pop %v546
  %v738 = vmul.f32 %v546, %v737
  %v739 = vsub.f32 1.0, %v738
  %v740 = vmul.f32 %v737, %v739
  %v741 = vadd.f32 %v737, %v740
  %vm742 = vweird.f32 %v546
  %vm743 = vweird.f32 %v737
  %vm744 = vmor %vm742, %vm743
  %v745 = vsel %vm744, %v737, %v741
  %v746 = vand.u32 2147483647, %v546
  %vm747 = vcmp.eq.f32.partialorder %v746, 8.507059e+37
  %v748 = vand.u32 %v546, 2147483648
  %v749 = vor.u32 1.1754944e-38, %v748
  %v750 = vsel %vm747, %v749, %v745
  %v751 = vmul.f32 %v391, %v750
  %v752 = vrcp.pop %v549
  %v753 = vmul.f32 %v549, %v752
  %v754 = vsub.f32 1.0, %v753
  %v755 = vmul.f32 %v752, %v754
  %v756 = vadd.f32 %v752, %v755
  %vm757 = vweird.f32 %v549
  %vm758 = vweird.f32 %v752
  %vm759 = vmor %vm757, %vm758
  %v760 = vsel %vm759, %v752, %v756
  %v761 = vand.u32 2147483647, %v549
  %vm762 = vcmp.eq.f32.partialorder %v761, 8.507059e+37
  %v763 = vand.u32 %v549, 2147483648
  %v764 = vor.u32 1.1754944e-38, %v763
  %v765 = vsel %vm762, %v764, %v760
  %v766 = vmul.f32 %v392, %v765
  %v767 = vrcp.pop %v552
  %v768 = vmul.f32 %v552, %v767
  %v769 = vsub.f32 1.0, %v768
  %v770 = vmul.f32 %v767, %v769
  %v771 = vadd.f32 %v767, %v770
  %vm772 = vweird.f32 %v552
  %vm773 = vweird.f32 %v767
  %vm774 = vmor %vm772, %vm773
  %v775 = vsel %vm774, %v767, %v771
  %v776 = vand.u32 2147483647, %v552
  %vm777 = vcmp.eq.f32.partialorder %v776, 8.507059e+37
  %v778 = vand.u32 %v552, 2147483648
  %v779 = vor.u32 1.1754944e-38, %v778
  %v780 = vsel %vm777, %v779, %v775
  %v781 = vmul.f32 %v393, %v780
  %v782 = vrcp.pop %v555
  %v783 = vmul.f32 %v555, %v782
  %v784 = vsub.f32 1.0, %v783
  %v785 = vmul.f32 %v782, %v784
  %v786 = vadd.f32 %v782, %v785
  %vm787 = vweird.f32 %v555
  %vm788 = vweird.f32 %v782
  %vm789 = vmor %vm787, %vm788
  %v790 = vsel %vm789, %v782, %v786
  %v791 = vand.u32 2147483647, %v555
  %vm792 = vcmp.eq.f32.partialorder %v791, 8.507059e+37
  %v793 = vand.u32 %v555, 2147483648
  %v794 = vor.u32 1.1754944e-38, %v793
  %v795 = vsel %vm792, %v794, %v790
  %v796 = vmul.f32 %v394, %v795
  %v797 = vrcp.pop %v558
  %v798 = vmul.f32 %v558, %v797
  %v799 = vsub.f32 1.0, %v798
  %v800 = vmul.f32 %v797, %v799
  %v801 = vadd.f32 %v797, %v800
  %vm802 = vweird.f32 %v558
  %vm803 = vweird.f32 %v797
  %vm804 = vmor %vm802, %vm803
  %v805 = vsel %vm804, %v797, %v801
  %v806 = vand.u32 2147483647, %v558
  %vm807 = vcmp.eq.f32.partialorder %v806, 8.507059e+37
  %v808 = vand.u32 %v558, 2147483648
  %v809 = vor.u32 1.1754944e-38, %v808
  %v810 = vsel %vm807, %v809, %v805
  %v811 = vmul.f32 %v395, %v810
  %v812 = vrcp.pop %v561
  %v813 = vmul.f32 %v561, %v812
  %v814 = vsub.f32 1.0, %v813
  %v815 = vmul.f32 %v812, %v814
  %v816 = vadd.f32 %v812, %v815
  %vm817 = vweird.f32 %v561
  %vm818 = vweird.f32 %v812
  %vm819 = vmor %vm817, %vm818
  %v820 = vsel %vm819, %v812, %v816
  %v821 = vand.u32 2147483647, %v561
  %vm822 = vcmp.eq.f32.partialorder %v821, 8.507059e+37
  %v823 = vand.u32 %v561, 2147483648
  %v824 = vor.u32 1.1754944e-38, %v823
  %v825 = vsel %vm822, %v824, %v820
  %v826 = vmul.f32 %v396, %v825
  %v827 = vrcp.pop %v564
  %v828 = vmul.f32 %v564, %v827
  %v829 = vsub.f32 1.0, %v828
  %v830 = vmul.f32 %v827, %v829
  %v831 = vadd.f32 %v827, %v830
  %vm832 = vweird.f32 %v564
  %vm833 = vweird.f32 %v827
  %vm834 = vmor %vm832, %vm833
  %v835 = vsel %vm834, %v827, %v831
  %v836 = vand.u32 2147483647, %v564
  %vm837 = vcmp.eq.f32.partialorder %v836, 8.507059e+37
  %v838 = vand.u32 %v564, 2147483648
  %v839 = vor.u32 1.1754944e-38, %v838
  %v840 = vsel %vm837, %v839, %v835
  %v841 = vmul.f32 %v397, %v840
  %v842 = vrcp.pop %v567
  %v843 = vmul.f32 %v567, %v842
  %v844 = vsub.f32 1.0, %v843
  %v845 = vmul.f32 %v842, %v844
  %v846 = vadd.f32 %v842, %v845
  %vm847 = vweird.f32 %v567
  %vm848 = vweird.f32 %v842
  %vm849 = vmor %vm847, %vm848
  %v850 = vsel %vm849, %v842, %v846
  %v851 = vand.u32 2147483647, %v567
  %vm852 = vcmp.eq.f32.partialorder %v851, 8.507059e+37
  %v853 = vand.u32 %v567, 2147483648
  %v854 = vor.u32 1.1754944e-38, %v853
  %v855 = vsel %vm852, %v854, %v850
  %v856 = vmul.f32 %v398, %v855
  %v857 = vrcp.pop %v570
  %v858 = vmul.f32 %v570, %v857
  %v859 = vsub.f32 1.0, %v858
  %v860 = vmul.f32 %v857, %v859
  %v861 = vadd.f32 %v857, %v860
  %vm862 = vweird.f32 %v570
  %vm863 = vweird.f32 %v857
  %vm864 = vmor %vm862, %vm863
  %v865 = vsel %vm864, %v857, %v861
  %v866 = vand.u32 2147483647, %v570
  %vm867 = vcmp.eq.f32.partialorder %v866, 8.507059e+37
  %v868 = vand.u32 %v570, 2147483648
  %v869 = vor.u32 1.1754944e-38, %v868
  %v870 = vsel %vm867, %v869, %v865
  %v871 = vmul.f32 %v399, %v870
  %v872 = vrcp.pop %v573
  %v873 = vmul.f32 %v573, %v872
  %v874 = vsub.f32 1.0, %v873
  %v875 = vmul.f32 %v872, %v874
  %v876 = vadd.f32 %v872, %v875
  %vm877 = vweird.f32 %v573
  %vm878 = vweird.f32 %v872
  %vm879 = vmor %vm877, %vm878
  %v880 = vsel %vm879, %v872, %v876
  %v881 = vand.u32 2147483647, %v573
  %vm882 = vcmp.eq.f32.partialorder %v881, 8.507059e+37
  %v883 = vand.u32 %v573, 2147483648
  %v884 = vor.u32 1.1754944e-38, %v883
  %v885 = vsel %vm882, %v884, %v880
  %v886 = vmul.f32 %v400, %v885
  %v887 = vrcp.pop %v576
  %v888 = vmul.f32 %v576, %v887
  %v889 = vsub.f32 1.0, %v888
  %v890 = vmul.f32 %v887, %v889
  %v891 = vadd.f32 %v887, %v890
  %vm892 = vweird.f32 %v576
  %vm893 = vweird.f32 %v887
  %vm894 = vmor %vm892, %vm893
  %v895 = vsel %vm894, %v887, %v891
  %v896 = vand.u32 2147483647, %v576
  %vm897 = vcmp.eq.f32.partialorder %v896, 8.507059e+37
  %v898 = vand.u32 %v576, 2147483648
  %v899 = vor.u32 1.1754944e-38, %v898
  %v900 = vsel %vm897, %v899, %v895
  %v901 = vmul.f32 %v401, %v900
  %v902 = vrcp.pop %v579
  %v903 = vmul.f32 %v579, %v902
  %v904 = vsub.f32 1.0, %v903
  %v905 = vmul.f32 %v902, %v904
  %v906 = vadd.f32 %v902, %v905
  %vm907 = vweird.f32 %v579
  %vm908 = vweird.f32 %v902
  %vm909 = vmor %vm907, %vm908
  %v910 = vsel %vm909, %v902, %v906
  %v911 = vand.u32 2147483647, %v579
  %vm912 = vcmp.eq.f32.partialorder %v911, 8.507059e+37
  %v913 = vand.u32 %v579, 2147483648
  %v914 = vor.u32 1.1754944e-38, %v913
  %v915 = vsel %vm912, %v914, %v910
  %v916 = vmul.f32 %v402, %v915
  %v917 = vrcp.pop %v582
  %v918 = vmul.f32 %v582, %v917
  %v919 = vsub.f32 1.0, %v918
  %v920 = vmul.f32 %v917, %v919
  %v921 = vadd.f32 %v917, %v920
  %vm922 = vweird.f32 %v582
  %vm923 = vweird.f32 %v917
  %vm924 = vmor %vm922, %vm923
  %v925 = vsel %vm924, %v917, %v921
  %v926 = vand.u32 2147483647, %v582
  %vm927 = vcmp.eq.f32.partialorder %v926, 8.507059e+37
  %v928 = vand.u32 %v582, 2147483648
  %v929 = vor.u32 1.1754944e-38, %v928
  %v930 = vsel %vm927, %v929, %v925
  %v931 = vmul.f32 %v403, %v930
  %v932 = vrcp.pop %v585
  %v933 = vmul.f32 %v585, %v932
  %v934 = vsub.f32 1.0, %v933
  %v935 = vmul.f32 %v932, %v934
  %v936 = vadd.f32 %v932, %v935
  %vm937 = vweird.f32 %v585
  %vm938 = vweird.f32 %v932
  %vm939 = vmor %vm937, %vm938
  %v940 = vsel %vm939, %v932, %v936
  %v941 = vand.u32 2147483647, %v585
  %vm942 = vcmp.eq.f32.partialorder %v941, 8.507059e+37
  %v943 = vand.u32 %v585, 2147483648
  %v944 = vor.u32 1.1754944e-38, %v943
  %v945 = vsel %vm942, %v944, %v940
  %v946 = vmul.f32 %v404, %v945
  %v947 = vrcp.pop %v588
  %v948 = vmul.f32 %v588, %v947
  %v949 = vsub.f32 1.0, %v948
  %v950 = vmul.f32 %v947, %v949
  %v951 = vadd.f32 %v947, %v950
  %vm952 = vweird.f32 %v588
  %vm953 = vweird.f32 %v947
  %vm954 = vmor %vm952, %vm953
  %v955 = vsel %vm954, %v947, %v951
  %v956 = vand.u32 2147483647, %v588
  %vm957 = vcmp.eq.f32.partialorder %v956, 8.507059e+37
  %v958 = vand.u32 %v588, 2147483648
  %v959 = vor.u32 1.1754944e-38, %v958
  %v960 = vsel %vm957, %v959, %v955
  %v961 = vmul.f32 %v405, %v960
  %v962 = vrcp.pop %v591
  %v963 = vmul.f32 %v591, %v962
  %v964 = vsub.f32 1.0, %v963
  %v965 = vmul.f32 %v962, %v964
  %v966 = vadd.f32 %v962, %v965
  %vm967 = vweird.f32 %v591
  %vm968 = vweird.f32 %v962
  %vm969 = vmor %vm967, %vm968
  %v970 = vsel %vm969, %v962, %v966
  %v971 = vand.u32 2147483647, %v591
  %vm972 = vcmp.eq.f32.partialorder %v971, 8.507059e+37
  %v973 = vand.u32 %v591, 2147483648
  %v974 = vor.u32 1.1754944e-38, %v973
  %v975 = vsel %vm972, %v974, %v970
  %v976 = vmul.f32 %v406, %v975
  %v977 = vrcp.pop %v594
  %v978 = vmul.f32 %v594, %v977
  %v979 = vsub.f32 1.0, %v978
  %v980 = vmul.f32 %v977, %v979
  %v981 = vadd.f32 %v977, %v980
  %vm982 = vweird.f32 %v594
  %vm983 = vweird.f32 %v977
  %vm984 = vmor %vm982, %vm983
  %v985 = vsel %vm984, %v977, %v981
  %v986 = vand.u32 2147483647, %v594
  %vm987 = vcmp.eq.f32.partialorder %v986, 8.507059e+37
  %v988 = vand.u32 %v594, 2147483648
  %v989 = vor.u32 1.1754944e-38, %v988
  %v990 = vsel %vm987, %v989, %v985
  %v991 = vmul.f32 %v407, %v990
  %v992 = vrcp.pop %v597
  %v993 = vmul.f32 %v597, %v992
  %v994 = vsub.f32 1.0, %v993
  %v995 = vmul.f32 %v992, %v994
  %v996 = vadd.f32 %v992, %v995
  %vm997 = vweird.f32 %v597
  %vm998 = vweird.f32 %v992
  %vm999 = vmor %vm997, %vm998
  %v1000 = vsel %vm999, %v992, %v996
  %v1001 = vand.u32 2147483647, %v597
  %vm1002 = vcmp.eq.f32.partialorder %v1001, 8.507059e+37
  %v1003 = vand.u32 %v597, 2147483648
  %v1004 = vor.u32 1.1754944e-38, %v1003
  %v1005 = vsel %vm1002, %v1004, %v1000
  %v1006 = vmul.f32 %v408, %v1005
  %v1007 = vrcp.pop %v600
  %v1008 = vmul.f32 %v600, %v1007
  %v1009 = vsub.f32 1.0, %v1008
  %v1010 = vmul.f32 %v1007, %v1009
  %v1011 = vadd.f32 %v1007, %v1010
  %vm1012 = vweird.f32 %v600
  %vm1013 = vweird.f32 %v1007
  %vm1014 = vmor %vm1012, %vm1013
  %v1015 = vsel %vm1014, %v1007, %v1011
  %v1016 = vand.u32 2147483647, %v600
  %vm1017 = vcmp.eq.f32.partialorder %v1016, 8.507059e+37
  %v1018 = vand.u32 %v600, 2147483648
  %v1019 = vor.u32 1.1754944e-38, %v1018
  %v1020 = vsel %vm1017, %v1019, %v1015
  %v1021 = vmul.f32 %v409, %v1020
  %v1022 = vrcp.pop %v603
  %v1023 = vmul.f32 %v603, %v1022
  %v1024 = vsub.f32 1.0, %v1023
  %v1025 = vmul.f32 %v1022, %v1024
  %v1026 = vadd.f32 %v1022, %v1025
  %vm1027 = vweird.f32 %v603
  %vm1028 = vweird.f32 %v1022
  %vm1029 = vmor %vm1027, %vm1028
  %v1030 = vsel %vm1029, %v1022, %v1026
  %v1031 = vand.u32 2147483647, %v603
  %vm1032 = vcmp.eq.f32.partialorder %v1031, 8.507059e+37
  %v1033 = vand.u32 %v603, 2147483648
  %v1034 = vor.u32 1.1754944e-38, %v1033
  %v1035 = vsel %vm1032, %v1034, %v1030
  %v1036 = vmul.f32 %v410, %v1035
  %v1037 = vrcp.pop %v606
  %v1038 = vmul.f32 %v606, %v1037
  %v1039 = vsub.f32 1.0, %v1038
  %v1040 = vmul.f32 %v1037, %v1039
  %v1041 = vadd.f32 %v1037, %v1040
  %vm1042 = vweird.f32 %v606
  %vm1043 = vweird.f32 %v1037
  %vm1044 = vmor %vm1042, %vm1043
  %v1045 = vsel %vm1044, %v1037, %v1041
  %v1046 = vand.u32 2147483647, %v606
  %vm1047 = vcmp.eq.f32.partialorder %v1046, 8.507059e+37
  %v1048 = vand.u32 %v606, 2147483648
  %v1049 = vor.u32 1.1754944e-38, %v1048
  %v1050 = vsel %vm1047, %v1049, %v1045
  %v1051 = vmul.f32 %v411, %v1050
  %v1052 = vrcp.pop %v609
  %v1053 = vmul.f32 %v609, %v1052
  %v1054 = vsub.f32 1.0, %v1053
  %v1055 = vmul.f32 %v1052, %v1054
  %v1056 = vadd.f32 %v1052, %v1055
  %vm1057 = vweird.f32 %v609
  %vm1058 = vweird.f32 %v1052
  %vm1059 = vmor %vm1057, %vm1058
  %v1060 = vsel %vm1059, %v1052, %v1056
  %v1061 = vand.u32 2147483647, %v609
  %vm1062 = vcmp.eq.f32.partialorder %v1061, 8.507059e+37
  %v1063 = vand.u32 %v609, 2147483648
  %v1064 = vor.u32 1.1754944e-38, %v1063
  %v1065 = vsel %vm1062, %v1064, %v1060
  %v1066 = vmul.f32 %v412, %v1065
  %v1067 = vrcp.pop %v612
  %v1068 = vmul.f32 %v612, %v1067
  %v1069 = vsub.f32 1.0, %v1068
  %v1070 = vmul.f32 %v1067, %v1069
  %v1071 = vadd.f32 %v1067, %v1070
  %vm1072 = vweird.f32 %v612
  %vm1073 = vweird.f32 %v1067
  %vm1074 = vmor %vm1072, %vm1073
  %v1075 = vsel %vm1074, %v1067, %v1071
  %v1076 = vand.u32 2147483647, %v612
  %vm1077 = vcmp.eq.f32.partialorder %v1076, 8.507059e+37
  %v1078 = vand.u32 %v612, 2147483648
  %v1079 = vor.u32 1.1754944e-38, %v1078
  %v1080 = vsel %vm1077, %v1079, %v1075
  %v1081 = vmul.f32 %v413, %v1080
  %v1082 = vrcp.pop %v615
  %v1083 = vmul.f32 %v615, %v1082
  %v1084 = vsub.f32 1.0, %v1083
  %v1085 = vmul.f32 %v1082, %v1084
  %v1086 = vadd.f32 %v1082, %v1085
  %vm1087 = vweird.f32 %v615
  %vm1088 = vweird.f32 %v1082
  %vm1089 = vmor %vm1087, %vm1088
  %v1090 = vsel %vm1089, %v1082, %v1086
  %v1091 = vand.u32 2147483647, %v615
  %vm1092 = vcmp.eq.f32.partialorder %v1091, 8.507059e+37
  %v1093 = vand.u32 %v615, 2147483648
  %v1094 = vor.u32 1.1754944e-38, %v1093
  %v1095 = vsel %vm1092, %v1094, %v1090
  %v1096 = vmul.f32 %v414, %v1095
  %v1097 = vld [vmem:[%s3] sm:$0xff]
  %v1098 = vld [vmem:[%s3 + $0x8] sm:$0xff]
  %v1099 = vld [vmem:[%s3 + $0x10] sm:$0xff]
  %v1100 = vld [vmem:[%s3 + $0x18] sm:$0xff]
  %v1101 = vld [vmem:[%s3 + $0x20] sm:$0xff]
  %v1102 = vld [vmem:[%s3 + $0x28] sm:$0xff]
  %v1103 = vld [vmem:[%s3 + $0x30] sm:$0xff]
  %v1104 = vld [vmem:[%s3 + $0x38] sm:$0xff]
  %v1105 = vld [vmem:[%s3 + $0x40] sm:$0xff]
  %v1106 = vld [vmem:[%s3 + $0x48] sm:$0xff]
  %v1107 = vld [vmem:[%s3 + $0x50] sm:$0xff]
  %v1108 = vld [vmem:[%s3 + $0x58] sm:$0xff]
  %v1109 = vld [vmem:[%s3 + $0x60] sm:$0xff]
  %v1110 = vld [vmem:[%s3 + $0x68] sm:$0xff]
  %v1111 = vld [vmem:[%s3 + $0x70] sm:$0xff]
  %v1112 = vld [vmem:[%s3 + $0x78] sm:$0xff]
  %v1113 = vld [vmem:[%s3 + $0x80] sm:$0xff]
  %v1114 = vld [vmem:[%s3 + $0x88] sm:$0xff]
  %v1115 = vld [vmem:[%s3 + $0x90] sm:$0xff]
  %v1116 = vld [vmem:[%s3 + $0x98] sm:$0xff]
  %v1117 = vld [vmem:[%s3 + $0xa0] sm:$0xff]
  %v1118 = vld [vmem:[%s3 + $0xa8] sm:$0xff]
  %v1119 = vld [vmem:[%s3 + $0xb0] sm:$0xff]
  %v1120 = vld [vmem:[%s3 + $0xb8] sm:$0xff]
  %v1121 = vld [vmem:[%s3 + $0xc0] sm:$0xff]
  %v1122 = vld [vmem:[%s3 + $0xc8] sm:$0xff]
  %v1123 = vld [vmem:[%s3 + $0xd0] sm:$0xff]
  %v1124 = vld [vmem:[%s3 + $0xd8] sm:$0xff]
  %v1125 = vld [vmem:[%s3 + $0xe0] sm:$0xff]
  %v1126 = vld [vmem:[%s3 + $0xe8] sm:$0xff]
  %v1127 = vld [vmem:[%s3 + $0xf0] sm:$0xff]
  %v1128 = vld [vmem:[%s3 + $0xf8] sm:$0xff]
  %1129 = vmatpush.msra.mxu0 %v856
  %1130 = vmatpush.msra.mxu0 %v841
  %1131 = vmatpush.msra.mxu0 %v826
  %1132 = vmatpush.msra.mxu0 %v811
  %1133 = vmatpush.msra.mxu0 %v796
  %1134 = vmatpush.msra.mxu0 %v781
  %1135 = vmatpush.msra.mxu0 %v766
  %1136 = vmatpush.msra.mxu0 %v751
  %1137 = vmatpush.msra.mxu0 %v736
  %1138 = vmatpush.msra.mxu0 %v721
  %1139 = vmatpush.msra.mxu0 %v706
  %1140 = vmatpush.msra.mxu0 %v691
  %1141 = vmatpush.msra.mxu0 %v676
  %1142 = vmatpush.msra.mxu0 %v661
  %1143 = vmatpush.msra.mxu0 %v646
  %1144 = vmatpush.msra.mxu0 %v631
  %1145 = vmatmul.f32.gmra.mxu0 %v1097
  %v1146 = vpop.f32.mrf.mxu0
  %v1147 = vadd.f32 0.0, %v1146
  %1148 = vmatmul.f32.gmra.mxu0 %v1099
  %v1149 = vpop.f32.mrf.mxu0
  %v1150 = vadd.f32 0.0, %v1149
  %1151 = vmatmul.f32.gmra.mxu0 %v1101
  %v1152 = vpop.f32.mrf.mxu0
  %v1153 = vadd.f32 0.0, %v1152
  %1154 = vmatmul.f32.gmra.mxu0 %v1103
  %v1155 = vpop.f32.mrf.mxu0
  %v1156 = vadd.f32 0.0, %v1155
  %1157 = vmatmul.f32.gmra.mxu0 %v1105
  %v1158 = vpop.f32.mrf.mxu0
  %v1159 = vadd.f32 0.0, %v1158
  %1160 = vmatmul.f32.gmra.mxu0 %v1107
  %v1161 = vpop.f32.mrf.mxu0
  %v1162 = vadd.f32 0.0, %v1161
  %1163 = vmatmul.f32.gmra.mxu0 %v1109
  %v1164 = vpop.f32.mrf.mxu0
  %v1165 = vadd.f32 0.0, %v1164
  %1166 = vmatmul.f32.gmra.mxu0 %v1111
  %v1167 = vpop.f32.mrf.mxu0
  %v1168 = vadd.f32 0.0, %v1167
  %1169 = vmatmul.f32.gmra.mxu0 %v1113
  %v1170 = vpop.f32.mrf.mxu0
  %v1171 = vadd.f32 0.0, %v1170
  %1172 = vmatmul.f32.gmra.mxu0 %v1115
  %v1173 = vpop.f32.mrf.mxu0
  %v1174 = vadd.f32 0.0, %v1173
  %1175 = vmatmul.f32.gmra.mxu0 %v1117
  %v1176 = vpop.f32.mrf.mxu0
  %v1177 = vadd.f32 0.0, %v1176
  %1178 = vmatmul.f32.gmra.mxu0 %v1119
  %v1179 = vpop.f32.mrf.mxu0
  %v1180 = vadd.f32 0.0, %v1179
  %1181 = vmatmul.f32.gmra.mxu0 %v1121
  %v1182 = vpop.f32.mrf.mxu0
  %v1183 = vadd.f32 0.0, %v1182
  %1184 = vmatmul.f32.gmra.mxu0 %v1123
  %v1185 = vpop.f32.mrf.mxu0
  %v1186 = vadd.f32 0.0, %v1185
  %1187 = vmatmul.f32.gmra.mxu0 %v1125
  %v1188 = vpop.f32.mrf.mxu0
  %v1189 = vadd.f32 0.0, %v1188
  %1190 = vmatmul.f32.gmra.mxu0 %v1127
  %v1191 = vpop.f32.mrf.mxu0
  %v1192 = vadd.f32 0.0, %v1191
  %1193 = vdwg.mxu0
  %1194 = vmatpush.msra.mxu0 %v1096
  %1195 = vmatpush.msra.mxu0 %v1081
  %1196 = vmatpush.msra.mxu0 %v1066
  %1197 = vmatpush.msra.mxu0 %v1051
  %1198 = vmatpush.msra.mxu0 %v1036
  %1199 = vmatpush.msra.mxu0 %v1021
  %1200 = vmatpush.msra.mxu0 %v1006
  %1201 = vmatpush.msra.mxu0 %v991
  %1202 = vmatpush.msra.mxu0 %v976
  %1203 = vmatpush.msra.mxu0 %v961
  %1204 = vmatpush.msra.mxu0 %v946
  %1205 = vmatpush.msra.mxu0 %v931
  %1206 = vmatpush.msra.mxu0 %v916
  %1207 = vmatpush.msra.mxu0 %v901
  %1208 = vmatpush.msra.mxu0 %v886
  %1209 = vmatpush.msra.mxu0 %v871
  %1210 = vmatmul.f32.gmra.mxu0 %v1098
  %v1211 = vpop.f32.mrf.mxu0
  %v1212 = vadd.f32 %v1147, %v1211
  %1213 = vmatmul.f32.gmra.mxu0 %v1100
  %v1214 = vpop.f32.mrf.mxu0
  %v1215 = vadd.f32 %v1150, %v1214
  %1216 = vmatmul.f32.gmra.mxu0 %v1102
  %v1217 = vpop.f32.mrf.mxu0
  %v1218 = vadd.f32 %v1153, %v1217
  %1219 = vmatmul.f32.gmra.mxu0 %v1104
  %v1220 = vpop.f32.mrf.mxu0
  %v1221 = vadd.f32 %v1156, %v1220
  %1222 = vmatmul.f32.gmra.mxu0 %v1106
  %v1223 = vpop.f32.mrf.mxu0
  %v1224 = vadd.f32 %v1159, %v1223
  %1225 = vmatmul.f32.gmra.mxu0 %v1108
  %v1226 = vpop.f32.mrf.mxu0
  %v1227 = vadd.f32 %v1162, %v1226
  %1228 = vmatmul.f32.gmra.mxu0 %v1110
  %v1229 = vpop.f32.mrf.mxu0
  %v1230 = vadd.f32 %v1165, %v1229
  %1231 = vmatmul.f32.gmra.mxu0 %v1112
  %v1232 = vpop.f32.mrf.mxu0
  %v1233 = vadd.f32 %v1168, %v1232
  %1234 = vmatmul.f32.gmra.mxu0 %v1114
  %v1235 = vpop.f32.mrf.mxu0
  %v1236 = vadd.f32 %v1171, %v1235
  %1237 = vmatmul.f32.gmra.mxu0 %v1116
  %v1238 = vpop.f32.mrf.mxu0
  %v1239 = vadd.f32 %v1174, %v1238
  %1240 = vmatmul.f32.gmra.mxu0 %v1118
  %v1241 = vpop.f32.mrf.mxu0
  %v1242 = vadd.f32 %v1177, %v1241
  %1243 = vmatmul.f32.gmra.mxu0 %v1120
  %v1244 = vpop.f32.mrf.mxu0
  %v1245 = vadd.f32 %v1180, %v1244
  %1246 = vmatmul.f32.gmra.mxu0 %v1122
  %v1247 = vpop.f32.mrf.mxu0
  %v1248 = vadd.f32 %v1183, %v1247
  %1249 = vmatmul.f32.gmra.mxu0 %v1124
  %v1250 = vpop.f32.mrf.mxu0
  %v1251 = vadd.f32 %v1186, %v1250
  %1252 = vmatmul.f32.gmra.mxu0 %v1126
  %v1253 = vpop.f32.mrf.mxu0
  %v1254 = vadd.f32 %v1189, %v1253
  %1255 = vmatmul.f32.gmra.mxu0 %v1128
  %v1256 = vpop.f32.mrf.mxu0
  %v1257 = vadd.f32 %v1192, %v1256
  %1258 = vdwg.mxu0
  %v1259 = vld [vmem:[%s4] sm:$0xff]
  %v1260 = vld [vmem:[%s4 + $0x8] sm:$0xff]
  %v1261 = vld [vmem:[%s4 + $0x10] sm:$0xff]
  %v1262 = vld [vmem:[%s4 + $0x18] sm:$0xff]
  %s1263 = scalar_lea.vmem %s4, 32
  %v1264 = vld [vmem:[%s1263] sm:$0xff]
  %v1265 = vld [vmem:[%s1263 + $0x8] sm:$0xff]
  %v1266 = vld [vmem:[%s1263 + $0x10] sm:$0xff]
  %v1267 = vld [vmem:[%s1263 + $0x18] sm:$0xff]
  %v1269 = vsel %vm168, %v1212, 0
  %v1272 = vsel %vm168, %v1215, 0
  %v1275 = vsel %vm168, %v1218, 0
  %v1278 = vsel %vm168, %v1221, 0
  %v1281 = vsel %vm168, %v1224, 0
  %v1284 = vsel %vm168, %v1227, 0
  %v1287 = vsel %vm168, %v1230, 0
  %v1290 = vsel %vm168, %v1233, 0
  %v1293 = vsel %vm168, %v1236, 0
  %v1296 = vsel %vm168, %v1239, 0
  %v1299 = vsel %vm168, %v1242, 0
  %v1302 = vsel %vm168, %v1245, 0
  %v1305 = vsel %vm168, %v1248, 0
  %v1308 = vsel %vm168, %v1251, 0
  %v1311 = vsel %vm168, %v1254, 0
  %v1314 = vsel %vm168, %v1257, 0
  %1316 = vmatpush.msra.mxu0 0.0
  %1317 = vmatpush.msra.mxu0 0.0
  %1318 = vmatpush.msra.mxu0 0.0
  %1319 = vmatpush.msra.mxu0 0.0
  %1320 = vmatpush.msra.mxu0 0.0
  %1321 = vmatpush.msra.mxu0 0.0
  %1322 = vmatpush.msra.mxu0 0.0
  %1323 = vmatpush.msra.mxu0 0.0
  %1324 = vmatpush.msra.mxu0 0.0
  %1325 = vmatpush.msra.mxu0 0.0
  %1326 = vmatpush.msra.mxu0 0.0
  %1327 = vmatpush.msra.mxu0 0.0
  %1328 = vmatpush.msra.mxu0 %v1267
  %1329 = vmatpush.msra.mxu0 %v1266
  %1330 = vmatpush.msra.mxu0 %v1265
  %1331 = vmatpush.msra.mxu0 %v1264
  %1332 = vmatmul.f32.gmra.mxu0 %v1269
  %v1333 = vpop.f32.mrf.mxu0
  %v1334 = vadd.f32 0.0, %v1333
  %1335 = vmatmul.f32.gmra.mxu0 %v1272
  %v1336 = vpop.f32.mrf.mxu0
  %v1337 = vadd.f32 0.0, %v1336
  %1338 = vmatmul.f32.gmra.mxu0 %v1275
  %v1339 = vpop.f32.mrf.mxu0
  %v1340 = vadd.f32 0.0, %v1339
  %1341 = vmatmul.f32.gmra.mxu0 %v1278
  %v1342 = vpop.f32.mrf.mxu0
  %v1343 = vadd.f32 0.0, %v1342
  %1344 = vmatmul.f32.gmra.mxu0 %v1281
  %v1345 = vpop.f32.mrf.mxu0
  %v1346 = vadd.f32 0.0, %v1345
  %1347 = vmatmul.f32.gmra.mxu0 %v1284
  %v1348 = vpop.f32.mrf.mxu0
  %v1349 = vadd.f32 0.0, %v1348
  %1350 = vmatmul.f32.gmra.mxu0 %v1287
  %v1351 = vpop.f32.mrf.mxu0
  %v1352 = vadd.f32 0.0, %v1351
  %1353 = vmatmul.f32.gmra.mxu0 %v1290
  %v1354 = vpop.f32.mrf.mxu0
  %v1355 = vadd.f32 0.0, %v1354
  %1356 = vmatmul.f32.gmra.mxu0 %v1293
  %v1357 = vpop.f32.mrf.mxu0
  %v1358 = vadd.f32 0.0, %v1357
  %1359 = vmatmul.f32.gmra.mxu0 %v1296
  %v1360 = vpop.f32.mrf.mxu0
  %v1361 = vadd.f32 0.0, %v1360
  %1362 = vmatmul.f32.gmra.mxu0 %v1299
  %v1363 = vpop.f32.mrf.mxu0
  %v1364 = vadd.f32 0.0, %v1363
  %1365 = vmatmul.f32.gmra.mxu0 %v1302
  %v1366 = vpop.f32.mrf.mxu0
  %v1367 = vadd.f32 0.0, %v1366
  %1368 = vmatmul.f32.gmra.mxu0 %v1305
  %v1369 = vpop.f32.mrf.mxu0
  %v1370 = vadd.f32 0.0, %v1369
  %1371 = vmatmul.f32.gmra.mxu0 %v1308
  %v1372 = vpop.f32.mrf.mxu0
  %v1373 = vadd.f32 0.0, %v1372
  %1374 = vmatmul.f32.gmra.mxu0 %v1311
  %v1375 = vpop.f32.mrf.mxu0
  %v1376 = vadd.f32 0.0, %v1375
  %1377 = vmatmul.f32.gmra.mxu0 %v1314
  %v1378 = vpop.f32.mrf.mxu0
  %v1379 = vadd.f32 0.0, %v1378
  %1380 = vdwg.mxu0
  %1381 = vmatpush.msra.mxu0 0.0
  %1382 = vmatpush.msra.mxu0 0.0
  %1383 = vmatpush.msra.mxu0 0.0
  %1384 = vmatpush.msra.mxu0 0.0
  %1385 = vmatpush.msra.mxu0 0.0
  %1386 = vmatpush.msra.mxu0 0.0
  %1387 = vmatpush.msra.mxu0 0.0
  %1388 = vmatpush.msra.mxu0 0.0
  %1389 = vmatpush.msra.mxu0 0.0
  %1390 = vmatpush.msra.mxu0 0.0
  %1391 = vmatpush.msra.mxu0 0.0
  %1392 = vmatpush.msra.mxu0 0.0
  %1393 = vmatpush.msra.mxu0 %v1262
  %1394 = vmatpush.msra.mxu0 %v1261
  %1395 = vmatpush.msra.mxu0 %v1260
  %1396 = vmatpush.msra.mxu0 %v1259
  %1397 = vmatmul.f32.gmra.mxu0 %v1269
  %v1398 = vpop.f32.mrf.mxu0
  %v1399 = vadd.f32 %v1334, %v1398
  %1400 = vmatmul.f32.gmra.mxu0 %v1272
  %v1401 = vpop.f32.mrf.mxu0
  %v1402 = vadd.f32 %v1337, %v1401
  %1403 = vmatmul.f32.gmra.mxu0 %v1275
  %v1404 = vpop.f32.mrf.mxu0
  %v1405 = vadd.f32 %v1340, %v1404
  %1406 = vmatmul.f32.gmra.mxu0 %v1278
  %v1407 = vpop.f32.mrf.mxu0
  %v1408 = vadd.f32 %v1343, %v1407
  %1409 = vmatmul.f32.gmra.mxu0 %v1281
  %v1410 = vpop.f32.mrf.mxu0
  %v1411 = vadd.f32 %v1346, %v1410
  %1412 = vmatmul.f32.gmra.mxu0 %v1284
  %v1413 = vpop.f32.mrf.mxu0
  %v1414 = vadd.f32 %v1349, %v1413
  %1415 = vmatmul.f32.gmra.mxu0 %v1287
  %v1416 = vpop.f32.mrf.mxu0
  %v1417 = vadd.f32 %v1352, %v1416
  %1418 = vmatmul.f32.gmra.mxu0 %v1290
  %v1419 = vpop.f32.mrf.mxu0
  %v1420 = vadd.f32 %v1355, %v1419
  %1421 = vmatmul.f32.gmra.mxu0 %v1293
  %v1422 = vpop.f32.mrf.mxu0
  %v1423 = vadd.f32 %v1358, %v1422
  %1424 = vmatmul.f32.gmra.mxu0 %v1296
  %v1425 = vpop.f32.mrf.mxu0
  %v1426 = vadd.f32 %v1361, %v1425
  %1427 = vmatmul.f32.gmra.mxu0 %v1299
  %v1428 = vpop.f32.mrf.mxu0
  %v1429 = vadd.f32 %v1364, %v1428
  %1430 = vmatmul.f32.gmra.mxu0 %v1302
  %v1431 = vpop.f32.mrf.mxu0
  %v1432 = vadd.f32 %v1367, %v1431
  %1433 = vmatmul.f32.gmra.mxu0 %v1305
  %v1434 = vpop.f32.mrf.mxu0
  %v1435 = vadd.f32 %v1370, %v1434
  %1436 = vmatmul.f32.gmra.mxu0 %v1308
  %v1437 = vpop.f32.mrf.mxu0
  %v1438 = vadd.f32 %v1373, %v1437
  %1439 = vmatmul.f32.gmra.mxu0 %v1311
  %v1440 = vpop.f32.mrf.mxu0
  %v1441 = vadd.f32 %v1376, %v1440
  %1442 = vmatmul.f32.gmra.mxu0 %v1314
  %v1443 = vpop.f32.mrf.mxu0
  %v1444 = vadd.f32 %v1379, %v1443
  %1445 = vdwg.mxu0
  %s1446 = scalar_lea.vmem %s4, 64
  %v1447 = vld [vmem:[%s1446] sm:$0xff]
  %v1448 = vld [vmem:[%s1446 + $0x8] sm:$0xff]
  %v1449 = vld [vmem:[%s1446 + $0x10] sm:$0xff]
  %v1450 = vld [vmem:[%s1446 + $0x18] sm:$0xff]
  %1451 = vmatpush.msra.mxu0 0.0
  %1452 = vmatpush.msra.mxu0 0.0
  %1453 = vmatpush.msra.mxu0 0.0
  %1454 = vmatpush.msra.mxu0 0.0
  %1455 = vmatpush.msra.mxu0 0.0
  %1456 = vmatpush.msra.mxu0 0.0
  %1457 = vmatpush.msra.mxu0 0.0
  %1458 = vmatpush.msra.mxu0 0.0
  %1459 = vmatpush.msra.mxu0 0.0
  %1460 = vmatpush.msra.mxu0 0.0
  %1461 = vmatpush.msra.mxu0 0.0
  %1462 = vmatpush.msra.mxu0 0.0
  %1463 = vmatpush.msra.mxu0 %v1450
  %1464 = vmatpush.msra.mxu0 %v1449
  %1465 = vmatpush.msra.mxu0 %v1448
  %1466 = vmatpush.msra.mxu0 %v1447
  %1467 = vmatmul.f32.gmra.mxu0 %v1269
  %v1468 = vpop.f32.mrf.mxu0
  %v1469 = vadd.f32 0.0, %v1468
  %1470 = vmatmul.f32.gmra.mxu0 %v1272
  %v1471 = vpop.f32.mrf.mxu0
  %v1472 = vadd.f32 0.0, %v1471
  %1473 = vmatmul.f32.gmra.mxu0 %v1275
  %v1474 = vpop.f32.mrf.mxu0
  %v1475 = vadd.f32 0.0, %v1474
  %1476 = vmatmul.f32.gmra.mxu0 %v1278
  %v1477 = vpop.f32.mrf.mxu0
  %v1478 = vadd.f32 0.0, %v1477
  %1479 = vmatmul.f32.gmra.mxu0 %v1281
  %v1480 = vpop.f32.mrf.mxu0
  %v1481 = vadd.f32 0.0, %v1480
  %1482 = vmatmul.f32.gmra.mxu0 %v1284
  %v1483 = vpop.f32.mrf.mxu0
  %v1484 = vadd.f32 0.0, %v1483
  %1485 = vmatmul.f32.gmra.mxu0 %v1287
  %v1486 = vpop.f32.mrf.mxu0
  %v1487 = vadd.f32 0.0, %v1486
  %1488 = vmatmul.f32.gmra.mxu0 %v1290
  %v1489 = vpop.f32.mrf.mxu0
  %v1490 = vadd.f32 0.0, %v1489
  %1491 = vmatmul.f32.gmra.mxu0 %v1293
  %v1492 = vpop.f32.mrf.mxu0
  %v1493 = vadd.f32 0.0, %v1492
  %1494 = vmatmul.f32.gmra.mxu0 %v1296
  %v1495 = vpop.f32.mrf.mxu0
  %v1496 = vadd.f32 0.0, %v1495
  %1497 = vmatmul.f32.gmra.mxu0 %v1299
  %v1498 = vpop.f32.mrf.mxu0
  %v1499 = vadd.f32 0.0, %v1498
  %1500 = vmatmul.f32.gmra.mxu0 %v1302
  %v1501 = vpop.f32.mrf.mxu0
  %v1502 = vadd.f32 0.0, %v1501
  %1503 = vmatmul.f32.gmra.mxu0 %v1305
  %v1504 = vpop.f32.mrf.mxu0
  %v1505 = vadd.f32 0.0, %v1504
  %1506 = vmatmul.f32.gmra.mxu0 %v1308
  %v1507 = vpop.f32.mrf.mxu0
  %v1508 = vadd.f32 0.0, %v1507
  %1509 = vmatmul.f32.gmra.mxu0 %v1311
  %v1510 = vpop.f32.mrf.mxu0
  %v1511 = vadd.f32 0.0, %v1510
  %1512 = vmatmul.f32.gmra.mxu0 %v1314
  %v1513 = vpop.f32.mrf.mxu0
  %v1514 = vadd.f32 0.0, %v1513
  %1515 = vdwg.mxu0
  %v1516 = vadd.f32 %v1399, %v1469
  %v1517 = vadd.f32 %v1402, %v1472
  %v1518 = vadd.f32 %v1405, %v1475
  %v1519 = vadd.f32 %v1408, %v1478
  %v1520 = vadd.f32 %v1411, %v1481
  %v1521 = vadd.f32 %v1414, %v1484
  %v1522 = vadd.f32 %v1417, %v1487
  %v1523 = vadd.f32 %v1420, %v1490
  %v1524 = vadd.f32 %v1423, %v1493
  %v1525 = vadd.f32 %v1426, %v1496
  %v1526 = vadd.f32 %v1429, %v1499
  %v1527 = vadd.f32 %v1432, %v1502
  %v1528 = vadd.f32 %v1435, %v1505
  %v1529 = vadd.f32 %v1438, %v1508
  %v1530 = vadd.f32 %v1441, %v1511
  %v1531 = vadd.f32 %v1444, %v1514
  %s1532 = scalar_lea.vmem %s3, 256
  %v1533 = vld [vmem:[%s1532] sm:$0xff]
  %v1534 = vld [vmem:[%s1532 + $0x8] sm:$0xff]
  %v1535 = vld [vmem:[%s1532 + $0x10] sm:$0xff]
  %v1536 = vld [vmem:[%s1532 + $0x18] sm:$0xff]
  %v1537 = vld [vmem:[%s1532 + $0x20] sm:$0xff]
  %v1538 = vld [vmem:[%s1532 + $0x28] sm:$0xff]
  %v1539 = vld [vmem:[%s1532 + $0x30] sm:$0xff]
  %v1540 = vld [vmem:[%s1532 + $0x38] sm:$0xff]
  %v1541 = vld [vmem:[%s1532 + $0x40] sm:$0xff]
  %v1542 = vld [vmem:[%s1532 + $0x48] sm:$0xff]
  %v1543 = vld [vmem:[%s1532 + $0x50] sm:$0xff]
  %v1544 = vld [vmem:[%s1532 + $0x58] sm:$0xff]
  %v1545 = vld [vmem:[%s1532 + $0x60] sm:$0xff]
  %v1546 = vld [vmem:[%s1532 + $0x68] sm:$0xff]
  %v1547 = vld [vmem:[%s1532 + $0x70] sm:$0xff]
  %v1548 = vld [vmem:[%s1532 + $0x78] sm:$0xff]
  %v1549 = vld [vmem:[%s1532 + $0x80] sm:$0xff]
  %v1550 = vld [vmem:[%s1532 + $0x88] sm:$0xff]
  %v1551 = vld [vmem:[%s1532 + $0x90] sm:$0xff]
  %v1552 = vld [vmem:[%s1532 + $0x98] sm:$0xff]
  %v1553 = vld [vmem:[%s1532 + $0xa0] sm:$0xff]
  %v1554 = vld [vmem:[%s1532 + $0xa8] sm:$0xff]
  %v1555 = vld [vmem:[%s1532 + $0xb0] sm:$0xff]
  %v1556 = vld [vmem:[%s1532 + $0xb8] sm:$0xff]
  %v1557 = vld [vmem:[%s1532 + $0xc0] sm:$0xff]
  %v1558 = vld [vmem:[%s1532 + $0xc8] sm:$0xff]
  %v1559 = vld [vmem:[%s1532 + $0xd0] sm:$0xff]
  %v1560 = vld [vmem:[%s1532 + $0xd8] sm:$0xff]
  %v1561 = vld [vmem:[%s1532 + $0xe0] sm:$0xff]
  %v1562 = vld [vmem:[%s1532 + $0xe8] sm:$0xff]
  %v1563 = vld [vmem:[%s1532 + $0xf0] sm:$0xff]
  %v1564 = vld [vmem:[%s1532 + $0xf8] sm:$0xff]
  %1565 = vmatpush.msra.mxu0 %v856
  %1566 = vmatpush.msra.mxu0 %v841
  %1567 = vmatpush.msra.mxu0 %v826
  %1568 = vmatpush.msra.mxu0 %v811
  %1569 = vmatpush.msra.mxu0 %v796
  %1570 = vmatpush.msra.mxu0 %v781
  %1571 = vmatpush.msra.mxu0 %v766
  %1572 = vmatpush.msra.mxu0 %v751
  %1573 = vmatpush.msra.mxu0 %v736
  %1574 = vmatpush.msra.mxu0 %v721
  %1575 = vmatpush.msra.mxu0 %v706
  %1576 = vmatpush.msra.mxu0 %v691
  %1577 = vmatpush.msra.mxu0 %v676
  %1578 = vmatpush.msra.mxu0 %v661
  %1579 = vmatpush.msra.mxu0 %v646
  %1580 = vmatpush.msra.mxu0 %v631
  %1581 = vmatmul.f32.gmra.mxu0 %v1533
  %v1582 = vpop.f32.mrf.mxu0
  %v1583 = vadd.f32 0.0, %v1582
  %1584 = vmatmul.f32.gmra.mxu0 %v1535
  %v1585 = vpop.f32.mrf.mxu0
  %v1586 = vadd.f32 0.0, %v1585
  %1587 = vmatmul.f32.gmra.mxu0 %v1537
  %v1588 = vpop.f32.mrf.mxu0
  %v1589 = vadd.f32 0.0, %v1588
  %1590 = vmatmul.f32.gmra.mxu0 %v1539
  %v1591 = vpop.f32.mrf.mxu0
  %v1592 = vadd.f32 0.0, %v1591
  %1593 = vmatmul.f32.gmra.mxu0 %v1541
  %v1594 = vpop.f32.mrf.mxu0
  %v1595 = vadd.f32 0.0, %v1594
  %1596 = vmatmul.f32.gmra.mxu0 %v1543
  %v1597 = vpop.f32.mrf.mxu0
  %v1598 = vadd.f32 0.0, %v1597
  %1599 = vmatmul.f32.gmra.mxu0 %v1545
  %v1600 = vpop.f32.mrf.mxu0
  %v1601 = vadd.f32 0.0, %v1600
  %1602 = vmatmul.f32.gmra.mxu0 %v1547
  %v1603 = vpop.f32.mrf.mxu0
  %v1604 = vadd.f32 0.0, %v1603
  %1605 = vmatmul.f32.gmra.mxu0 %v1549
  %v1606 = vpop.f32.mrf.mxu0
  %v1607 = vadd.f32 0.0, %v1606
  %1608 = vmatmul.f32.gmra.mxu0 %v1551
  %v1609 = vpop.f32.mrf.mxu0
  %v1610 = vadd.f32 0.0, %v1609
  %1611 = vmatmul.f32.gmra.mxu0 %v1553
  %v1612 = vpop.f32.mrf.mxu0
  %v1613 = vadd.f32 0.0, %v1612
  %1614 = vmatmul.f32.gmra.mxu0 %v1555
  %v1615 = vpop.f32.mrf.mxu0
  %v1616 = vadd.f32 0.0, %v1615
  %1617 = vmatmul.f32.gmra.mxu0 %v1557
  %v1618 = vpop.f32.mrf.mxu0
  %v1619 = vadd.f32 0.0, %v1618
  %1620 = vmatmul.f32.gmra.mxu0 %v1559
  %v1621 = vpop.f32.mrf.mxu0
  %v1622 = vadd.f32 0.0, %v1621
  %1623 = vmatmul.f32.gmra.mxu0 %v1561
  %v1624 = vpop.f32.mrf.mxu0
  %v1625 = vadd.f32 0.0, %v1624
  %1626 = vmatmul.f32.gmra.mxu0 %v1563
  %v1627 = vpop.f32.mrf.mxu0
  %v1628 = vadd.f32 0.0, %v1627
  %1629 = vdwg.mxu0
  %1630 = vmatpush.msra.mxu0 %v1096
  %1631 = vmatpush.msra.mxu0 %v1081
  %1632 = vmatpush.msra.mxu0 %v1066
  %1633 = vmatpush.msra.mxu0 %v1051
  %1634 = vmatpush.msra.mxu0 %v1036
  %1635 = vmatpush.msra.mxu0 %v1021
  %1636 = vmatpush.msra.mxu0 %v1006
  %1637 = vmatpush.msra.mxu0 %v991
  %1638 = vmatpush.msra.mxu0 %v976
  %1639 = vmatpush.msra.mxu0 %v961
  %1640 = vmatpush.msra.mxu0 %v946
  %1641 = vmatpush.msra.mxu0 %v931
  %1642 = vmatpush.msra.mxu0 %v916
  %1643 = vmatpush.msra.mxu0 %v901
  %1644 = vmatpush.msra.mxu0 %v886
  %1645 = vmatpush.msra.mxu0 %v871
  %1646 = vmatmul.f32.gmra.mxu0 %v1534
  %v1647 = vpop.f32.mrf.mxu0
  %v1648 = vadd.f32 %v1583, %v1647
  %1649 = vmatmul.f32.gmra.mxu0 %v1536
  %v1650 = vpop.f32.mrf.mxu0
  %v1651 = vadd.f32 %v1586, %v1650
  %1652 = vmatmul.f32.gmra.mxu0 %v1538
  %v1653 = vpop.f32.mrf.mxu0
  %v1654 = vadd.f32 %v1589, %v1653
  %1655 = vmatmul.f32.gmra.mxu0 %v1540
  %v1656 = vpop.f32.mrf.mxu0
  %v1657 = vadd.f32 %v1592, %v1656
  %1658 = vmatmul.f32.gmra.mxu0 %v1542
  %v1659 = vpop.f32.mrf.mxu0
  %v1660 = vadd.f32 %v1595, %v1659
  %1661 = vmatmul.f32.gmra.mxu0 %v1544
  %v1662 = vpop.f32.mrf.mxu0
  %v1663 = vadd.f32 %v1598, %v1662
  %1664 = vmatmul.f32.gmra.mxu0 %v1546
  %v1665 = vpop.f32.mrf.mxu0
  %v1666 = vadd.f32 %v1601, %v1665
  %1667 = vmatmul.f32.gmra.mxu0 %v1548
  %v1668 = vpop.f32.mrf.mxu0
  %v1669 = vadd.f32 %v1604, %v1668
  %1670 = vmatmul.f32.gmra.mxu0 %v1550
  %v1671 = vpop.f32.mrf.mxu0
  %v1672 = vadd.f32 %v1607, %v1671
  %1673 = vmatmul.f32.gmra.mxu0 %v1552
  %v1674 = vpop.f32.mrf.mxu0
  %v1675 = vadd.f32 %v1610, %v1674
  %1676 = vmatmul.f32.gmra.mxu0 %v1554
  %v1677 = vpop.f32.mrf.mxu0
  %v1678 = vadd.f32 %v1613, %v1677
  %1679 = vmatmul.f32.gmra.mxu0 %v1556
  %v1680 = vpop.f32.mrf.mxu0
  %v1681 = vadd.f32 %v1616, %v1680
  %1682 = vmatmul.f32.gmra.mxu0 %v1558
  %v1683 = vpop.f32.mrf.mxu0
  %v1684 = vadd.f32 %v1619, %v1683
  %1685 = vmatmul.f32.gmra.mxu0 %v1560
  %v1686 = vpop.f32.mrf.mxu0
  %v1687 = vadd.f32 %v1622, %v1686
  %1688 = vmatmul.f32.gmra.mxu0 %v1562
  %v1689 = vpop.f32.mrf.mxu0
  %v1690 = vadd.f32 %v1625, %v1689
  %1691 = vmatmul.f32.gmra.mxu0 %v1564
  %v1692 = vpop.f32.mrf.mxu0
  %v1693 = vadd.f32 %v1628, %v1692
  %1694 = vdwg.mxu0
  %s1695 = scalar_lea.vmem %s4, 96
  %v1696 = vld [vmem:[%s1695] sm:$0xff]
  %v1697 = vld [vmem:[%s1695 + $0x8] sm:$0xff]
  %v1698 = vld [vmem:[%s1695 + $0x10] sm:$0xff]
  %v1699 = vld [vmem:[%s1695 + $0x18] sm:$0xff]
  %v1701 = vsel %vm168, %v1648, 0
  %v1704 = vsel %vm168, %v1651, 0
  %v1707 = vsel %vm168, %v1654, 0
  %v1710 = vsel %vm168, %v1657, 0
  %v1713 = vsel %vm168, %v1660, 0
  %v1716 = vsel %vm168, %v1663, 0
  %v1719 = vsel %vm168, %v1666, 0
  %v1722 = vsel %vm168, %v1669, 0
  %v1725 = vsel %vm168, %v1672, 0
  %v1728 = vsel %vm168, %v1675, 0
  %v1731 = vsel %vm168, %v1678, 0
  %v1734 = vsel %vm168, %v1681, 0
  %v1737 = vsel %vm168, %v1684, 0
  %v1740 = vsel %vm168, %v1687, 0
  %v1743 = vsel %vm168, %v1690, 0
  %v1746 = vsel %vm168, %v1693, 0
  %1748 = vmatpush.msra.mxu0 0.0
  %1749 = vmatpush.msra.mxu0 0.0
  %1750 = vmatpush.msra.mxu0 0.0
  %1751 = vmatpush.msra.mxu0 0.0
  %1752 = vmatpush.msra.mxu0 0.0
  %1753 = vmatpush.msra.mxu0 0.0
  %1754 = vmatpush.msra.mxu0 0.0
  %1755 = vmatpush.msra.mxu0 0.0
  %1756 = vmatpush.msra.mxu0 0.0
  %1757 = vmatpush.msra.mxu0 0.0
  %1758 = vmatpush.msra.mxu0 0.0
  %1759 = vmatpush.msra.mxu0 0.0
  %1760 = vmatpush.msra.mxu0 %v1699
  %1761 = vmatpush.msra.mxu0 %v1698
  %1762 = vmatpush.msra.mxu0 %v1697
  %1763 = vmatpush.msra.mxu0 %v1696
  %1764 = vmatmul.f32.gmra.mxu0 %v1701
  %v1765 = vpop.f32.mrf.mxu0
  %v1766 = vadd.f32 0.0, %v1765
  %1767 = vmatmul.f32.gmra.mxu0 %v1704
  %v1768 = vpop.f32.mrf.mxu0
  %v1769 = vadd.f32 0.0, %v1768
  %1770 = vmatmul.f32.gmra.mxu0 %v1707
  %v1771 = vpop.f32.mrf.mxu0
  %v1772 = vadd.f32 0.0, %v1771
  %1773 = vmatmul.f32.gmra.mxu0 %v1710
  %v1774 = vpop.f32.mrf.mxu0
  %v1775 = vadd.f32 0.0, %v1774
  %1776 = vmatmul.f32.gmra.mxu0 %v1713
  %v1777 = vpop.f32.mrf.mxu0
  %v1778 = vadd.f32 0.0, %v1777
  %1779 = vmatmul.f32.gmra.mxu0 %v1716
  %v1780 = vpop.f32.mrf.mxu0
  %v1781 = vadd.f32 0.0, %v1780
  %1782 = vmatmul.f32.gmra.mxu0 %v1719
  %v1783 = vpop.f32.mrf.mxu0
  %v1784 = vadd.f32 0.0, %v1783
  %1785 = vmatmul.f32.gmra.mxu0 %v1722
  %v1786 = vpop.f32.mrf.mxu0
  %v1787 = vadd.f32 0.0, %v1786
  %1788 = vmatmul.f32.gmra.mxu0 %v1725
  %v1789 = vpop.f32.mrf.mxu0
  %v1790 = vadd.f32 0.0, %v1789
  %1791 = vmatmul.f32.gmra.mxu0 %v1728
  %v1792 = vpop.f32.mrf.mxu0
  %v1793 = vadd.f32 0.0, %v1792
  %1794 = vmatmul.f32.gmra.mxu0 %v1731
  %v1795 = vpop.f32.mrf.mxu0
  %v1796 = vadd.f32 0.0, %v1795
  %1797 = vmatmul.f32.gmra.mxu0 %v1734
  %v1798 = vpop.f32.mrf.mxu0
  %v1799 = vadd.f32 0.0, %v1798
  %1800 = vmatmul.f32.gmra.mxu0 %v1737
  %v1801 = vpop.f32.mrf.mxu0
  %v1802 = vadd.f32 0.0, %v1801
  %1803 = vmatmul.f32.gmra.mxu0 %v1740
  %v1804 = vpop.f32.mrf.mxu0
  %v1805 = vadd.f32 0.0, %v1804
  %1806 = vmatmul.f32.gmra.mxu0 %v1743
  %v1807 = vpop.f32.mrf.mxu0
  %v1808 = vadd.f32 0.0, %v1807
  %1809 = vmatmul.f32.gmra.mxu0 %v1746
  %v1810 = vpop.f32.mrf.mxu0
  %v1811 = vadd.f32 0.0, %v1810
  %1812 = vdwg.mxu0
  %v1813 = vadd.f32 %v1516, %v1766
  %v1814 = vadd.f32 %v1517, %v1769
  %v1815 = vadd.f32 %v1518, %v1772
  %v1816 = vadd.f32 %v1519, %v1775
  %v1817 = vadd.f32 %v1520, %v1778
  %v1818 = vadd.f32 %v1521, %v1781
  %v1819 = vadd.f32 %v1522, %v1784
  %v1820 = vadd.f32 %v1523, %v1787
  %v1821 = vadd.f32 %v1524, %v1790
  %v1822 = vadd.f32 %v1525, %v1793
  %v1823 = vadd.f32 %v1526, %v1796
  %v1824 = vadd.f32 %v1527, %v1799
  %v1825 = vadd.f32 %v1528, %v1802
  %v1826 = vadd.f32 %v1529, %v1805
  %v1827 = vadd.f32 %v1530, %v1808
  %v1828 = vadd.f32 %v1531, %v1811
  %s1829 = scalar_lea.vmem %s4, 128
  %v1830 = vld [vmem:[%s1829] sm:$0xff]
  %v1831 = vld [vmem:[%s1829 + $0x8] sm:$0xff]
  %v1832 = vld [vmem:[%s1829 + $0x10] sm:$0xff]
  %v1833 = vld [vmem:[%s1829 + $0x18] sm:$0xff]
  %1834 = vmatpush.msra.mxu0 0.0
  %1835 = vmatpush.msra.mxu0 0.0
  %1836 = vmatpush.msra.mxu0 0.0
  %1837 = vmatpush.msra.mxu0 0.0
  %1838 = vmatpush.msra.mxu0 0.0
  %1839 = vmatpush.msra.mxu0 0.0
  %1840 = vmatpush.msra.mxu0 0.0
  %1841 = vmatpush.msra.mxu0 0.0
  %1842 = vmatpush.msra.mxu0 0.0
  %1843 = vmatpush.msra.mxu0 0.0
  %1844 = vmatpush.msra.mxu0 0.0
  %1845 = vmatpush.msra.mxu0 0.0
  %1846 = vmatpush.msra.mxu0 %v1833
  %1847 = vmatpush.msra.mxu0 %v1832
  %1848 = vmatpush.msra.mxu0 %v1831
  %1849 = vmatpush.msra.mxu0 %v1830
  %1850 = vmatmul.f32.gmra.mxu0 %v1701
  %v1851 = vpop.f32.mrf.mxu0
  %v1852 = vadd.f32 0.0, %v1851
  %1853 = vmatmul.f32.gmra.mxu0 %v1704
  %v1854 = vpop.f32.mrf.mxu0
  %v1855 = vadd.f32 0.0, %v1854
  %1856 = vmatmul.f32.gmra.mxu0 %v1707
  %v1857 = vpop.f32.mrf.mxu0
  %v1858 = vadd.f32 0.0, %v1857
  %1859 = vmatmul.f32.gmra.mxu0 %v1710
  %v1860 = vpop.f32.mrf.mxu0
  %v1861 = vadd.f32 0.0, %v1860
  %1862 = vmatmul.f32.gmra.mxu0 %v1713
  %v1863 = vpop.f32.mrf.mxu0
  %v1864 = vadd.f32 0.0, %v1863
  %1865 = vmatmul.f32.gmra.mxu0 %v1716
  %v1866 = vpop.f32.mrf.mxu0
  %v1867 = vadd.f32 0.0, %v1866
  %1868 = vmatmul.f32.gmra.mxu0 %v1719
  %v1869 = vpop.f32.mrf.mxu0
  %v1870 = vadd.f32 0.0, %v1869
  %1871 = vmatmul.f32.gmra.mxu0 %v1722
  %v1872 = vpop.f32.mrf.mxu0
  %v1873 = vadd.f32 0.0, %v1872
  %1874 = vmatmul.f32.gmra.mxu0 %v1725
  %v1875 = vpop.f32.mrf.mxu0
  %v1876 = vadd.f32 0.0, %v1875
  %1877 = vmatmul.f32.gmra.mxu0 %v1728
  %v1878 = vpop.f32.mrf.mxu0
  %v1879 = vadd.f32 0.0, %v1878
  %1880 = vmatmul.f32.gmra.mxu0 %v1731
  %v1881 = vpop.f32.mrf.mxu0
  %v1882 = vadd.f32 0.0, %v1881
  %1883 = vmatmul.f32.gmra.mxu0 %v1734
  %v1884 = vpop.f32.mrf.mxu0
  %v1885 = vadd.f32 0.0, %v1884
  %1886 = vmatmul.f32.gmra.mxu0 %v1737
  %v1887 = vpop.f32.mrf.mxu0
  %v1888 = vadd.f32 0.0, %v1887
  %1889 = vmatmul.f32.gmra.mxu0 %v1740
  %v1890 = vpop.f32.mrf.mxu0
  %v1891 = vadd.f32 0.0, %v1890
  %1892 = vmatmul.f32.gmra.mxu0 %v1743
  %v1893 = vpop.f32.mrf.mxu0
  %v1894 = vadd.f32 0.0, %v1893
  %1895 = vmatmul.f32.gmra.mxu0 %v1746
  %v1896 = vpop.f32.mrf.mxu0
  %v1897 = vadd.f32 0.0, %v1896
  %1898 = vdwg.mxu0
  %v1899 = vadd.f32 %v1813, %v1852
  %v1900 = vadd.f32 %v1814, %v1855
  %v1901 = vadd.f32 %v1815, %v1858
  %v1902 = vadd.f32 %v1816, %v1861
  %v1903 = vadd.f32 %v1817, %v1864
  %v1904 = vadd.f32 %v1818, %v1867
  %v1905 = vadd.f32 %v1819, %v1870
  %v1906 = vadd.f32 %v1820, %v1873
  %v1907 = vadd.f32 %v1821, %v1876
  %v1908 = vadd.f32 %v1822, %v1879
  %v1909 = vadd.f32 %v1823, %v1882
  %v1910 = vadd.f32 %v1824, %v1885
  %v1911 = vadd.f32 %v1825, %v1888
  %v1912 = vadd.f32 %v1826, %v1891
  %v1913 = vadd.f32 %v1827, %v1894
  %v1914 = vadd.f32 %v1828, %v1897
  %s1915 = scalar_lea.vmem %s4, 160
  %v1916 = vld [vmem:[%s1915] sm:$0xff]
  %v1917 = vld [vmem:[%s1915 + $0x8] sm:$0xff]
  %v1918 = vld [vmem:[%s1915 + $0x10] sm:$0xff]
  %v1919 = vld [vmem:[%s1915 + $0x18] sm:$0xff]
  %1920 = vmatpush.msra.mxu0 0.0
  %1921 = vmatpush.msra.mxu0 0.0
  %1922 = vmatpush.msra.mxu0 0.0
  %1923 = vmatpush.msra.mxu0 0.0
  %1924 = vmatpush.msra.mxu0 0.0
  %1925 = vmatpush.msra.mxu0 0.0
  %1926 = vmatpush.msra.mxu0 0.0
  %1927 = vmatpush.msra.mxu0 0.0
  %1928 = vmatpush.msra.mxu0 0.0
  %1929 = vmatpush.msra.mxu0 0.0
  %1930 = vmatpush.msra.mxu0 0.0
  %1931 = vmatpush.msra.mxu0 0.0
  %1932 = vmatpush.msra.mxu0 %v1919
  %1933 = vmatpush.msra.mxu0 %v1918
  %1934 = vmatpush.msra.mxu0 %v1917
  %1935 = vmatpush.msra.mxu0 %v1916
  %1936 = vmatmul.f32.gmra.mxu0 %v1701
  %v1937 = vpop.f32.mrf.mxu0
  %v1938 = vadd.f32 0.0, %v1937
  %1939 = vmatmul.f32.gmra.mxu0 %v1704
  %v1940 = vpop.f32.mrf.mxu0
  %v1941 = vadd.f32 0.0, %v1940
  %1942 = vmatmul.f32.gmra.mxu0 %v1707
  %v1943 = vpop.f32.mrf.mxu0
  %v1944 = vadd.f32 0.0, %v1943
  %1945 = vmatmul.f32.gmra.mxu0 %v1710
  %v1946 = vpop.f32.mrf.mxu0
  %v1947 = vadd.f32 0.0, %v1946
  %1948 = vmatmul.f32.gmra.mxu0 %v1713
  %v1949 = vpop.f32.mrf.mxu0
  %v1950 = vadd.f32 0.0, %v1949
  %1951 = vmatmul.f32.gmra.mxu0 %v1716
  %v1952 = vpop.f32.mrf.mxu0
  %v1953 = vadd.f32 0.0, %v1952
  %1954 = vmatmul.f32.gmra.mxu0 %v1719
  %v1955 = vpop.f32.mrf.mxu0
  %v1956 = vadd.f32 0.0, %v1955
  %1957 = vmatmul.f32.gmra.mxu0 %v1722
  %v1958 = vpop.f32.mrf.mxu0
  %v1959 = vadd.f32 0.0, %v1958
  %1960 = vmatmul.f32.gmra.mxu0 %v1725
  %v1961 = vpop.f32.mrf.mxu0
  %v1962 = vadd.f32 0.0, %v1961
  %1963 = vmatmul.f32.gmra.mxu0 %v1728
  %v1964 = vpop.f32.mrf.mxu0
  %v1965 = vadd.f32 0.0, %v1964
  %1966 = vmatmul.f32.gmra.mxu0 %v1731
  %v1967 = vpop.f32.mrf.mxu0
  %v1968 = vadd.f32 0.0, %v1967
  %1969 = vmatmul.f32.gmra.mxu0 %v1734
  %v1970 = vpop.f32.mrf.mxu0
  %v1971 = vadd.f32 0.0, %v1970
  %1972 = vmatmul.f32.gmra.mxu0 %v1737
  %v1973 = vpop.f32.mrf.mxu0
  %v1974 = vadd.f32 0.0, %v1973
  %1975 = vmatmul.f32.gmra.mxu0 %v1740
  %v1976 = vpop.f32.mrf.mxu0
  %v1977 = vadd.f32 0.0, %v1976
  %1978 = vmatmul.f32.gmra.mxu0 %v1743
  %v1979 = vpop.f32.mrf.mxu0
  %v1980 = vadd.f32 0.0, %v1979
  %1981 = vmatmul.f32.gmra.mxu0 %v1746
  %v1982 = vpop.f32.mrf.mxu0
  %v1983 = vadd.f32 0.0, %v1982
  %1984 = vdwg.mxu0
  %v1985 = vadd.f32 %v1899, %v1938
  %v1986 = vadd.f32 %v1900, %v1941
  %v1987 = vadd.f32 %v1901, %v1944
  %v1988 = vadd.f32 %v1902, %v1947
  %v1989 = vadd.f32 %v1903, %v1950
  %v1990 = vadd.f32 %v1904, %v1953
  %v1991 = vadd.f32 %v1905, %v1956
  %v1992 = vadd.f32 %v1906, %v1959
  %v1993 = vadd.f32 %v1907, %v1962
  %v1994 = vadd.f32 %v1908, %v1965
  %v1995 = vadd.f32 %v1909, %v1968
  %v1996 = vadd.f32 %v1910, %v1971
  %v1997 = vadd.f32 %v1911, %v1974
  %v1998 = vadd.f32 %v1912, %v1977
  %v1999 = vadd.f32 %v1913, %v1980
  %v2000 = vadd.f32 %v1914, %v1983
  %s2001 = scalar_lea.vmem %s3, 512
  %v2002 = vld [vmem:[%s2001] sm:$0xff]
  %v2003 = vld [vmem:[%s2001 + $0x8] sm:$0xff]
  %v2004 = vld [vmem:[%s2001 + $0x10] sm:$0xff]
  %v2005 = vld [vmem:[%s2001 + $0x18] sm:$0xff]
  %v2006 = vld [vmem:[%s2001 + $0x20] sm:$0xff]
  %v2007 = vld [vmem:[%s2001 + $0x28] sm:$0xff]
  %v2008 = vld [vmem:[%s2001 + $0x30] sm:$0xff]
  %v2009 = vld [vmem:[%s2001 + $0x38] sm:$0xff]
  %v2010 = vld [vmem:[%s2001 + $0x40] sm:$0xff]
  %v2011 = vld [vmem:[%s2001 + $0x48] sm:$0xff]
  %v2012 = vld [vmem:[%s2001 + $0x50] sm:$0xff]
  %v2013 = vld [vmem:[%s2001 + $0x58] sm:$0xff]
  %v2014 = vld [vmem:[%s2001 + $0x60] sm:$0xff]
  %v2015 = vld [vmem:[%s2001 + $0x68] sm:$0xff]
  %v2016 = vld [vmem:[%s2001 + $0x70] sm:$0xff]
  %v2017 = vld [vmem:[%s2001 + $0x78] sm:$0xff]
  %v2018 = vld [vmem:[%s2001 + $0x80] sm:$0xff]
  %v2019 = vld [vmem:[%s2001 + $0x88] sm:$0xff]
  %v2020 = vld [vmem:[%s2001 + $0x90] sm:$0xff]
  %v2021 = vld [vmem:[%s2001 + $0x98] sm:$0xff]
  %v2022 = vld [vmem:[%s2001 + $0xa0] sm:$0xff]
  %v2023 = vld [vmem:[%s2001 + $0xa8] sm:$0xff]
  %v2024 = vld [vmem:[%s2001 + $0xb0] sm:$0xff]
  %v2025 = vld [vmem:[%s2001 + $0xb8] sm:$0xff]
  %v2026 = vld [vmem:[%s2001 + $0xc0] sm:$0xff]
  %v2027 = vld [vmem:[%s2001 + $0xc8] sm:$0xff]
  %v2028 = vld [vmem:[%s2001 + $0xd0] sm:$0xff]
  %v2029 = vld [vmem:[%s2001 + $0xd8] sm:$0xff]
  %v2030 = vld [vmem:[%s2001 + $0xe0] sm:$0xff]
  %v2031 = vld [vmem:[%s2001 + $0xe8] sm:$0xff]
  %v2032 = vld [vmem:[%s2001 + $0xf0] sm:$0xff]
  %v2033 = vld [vmem:[%s2001 + $0xf8] sm:$0xff]
  %2034 = vmatpush.msra.mxu0 %v856
  %2035 = vmatpush.msra.mxu0 %v841
  %2036 = vmatpush.msra.mxu0 %v826
  %2037 = vmatpush.msra.mxu0 %v811
  %2038 = vmatpush.msra.mxu0 %v796
  %2039 = vmatpush.msra.mxu0 %v781
  %2040 = vmatpush.msra.mxu0 %v766
  %2041 = vmatpush.msra.mxu0 %v751
  %2042 = vmatpush.msra.mxu0 %v736
  %2043 = vmatpush.msra.mxu0 %v721
  %2044 = vmatpush.msra.mxu0 %v706
  %2045 = vmatpush.msra.mxu0 %v691
  %2046 = vmatpush.msra.mxu0 %v676
  %2047 = vmatpush.msra.mxu0 %v661
  %2048 = vmatpush.msra.mxu0 %v646
  %2049 = vmatpush.msra.mxu0 %v631
  %2050 = vmatmul.f32.gmra.mxu0 %v2002
  %v2051 = vpop.f32.mrf.mxu0
  %v2052 = vadd.f32 0.0, %v2051
  %2053 = vmatmul.f32.gmra.mxu0 %v2004
  %v2054 = vpop.f32.mrf.mxu0
  %v2055 = vadd.f32 0.0, %v2054
  %2056 = vmatmul.f32.gmra.mxu0 %v2006
  %v2057 = vpop.f32.mrf.mxu0
  %v2058 = vadd.f32 0.0, %v2057
  %2059 = vmatmul.f32.gmra.mxu0 %v2008
  %v2060 = vpop.f32.mrf.mxu0
  %v2061 = vadd.f32 0.0, %v2060
  %2062 = vmatmul.f32.gmra.mxu0 %v2010
  %v2063 = vpop.f32.mrf.mxu0
  %v2064 = vadd.f32 0.0, %v2063
  %2065 = vmatmul.f32.gmra.mxu0 %v2012
  %v2066 = vpop.f32.mrf.mxu0
  %v2067 = vadd.f32 0.0, %v2066
  %2068 = vmatmul.f32.gmra.mxu0 %v2014
  %v2069 = vpop.f32.mrf.mxu0
  %v2070 = vadd.f32 0.0, %v2069
  %2071 = vmatmul.f32.gmra.mxu0 %v2016
  %v2072 = vpop.f32.mrf.mxu0
  %v2073 = vadd.f32 0.0, %v2072
  %2074 = vmatmul.f32.gmra.mxu0 %v2018
  %v2075 = vpop.f32.mrf.mxu0
  %v2076 = vadd.f32 0.0, %v2075
  %2077 = vmatmul.f32.gmra.mxu0 %v2020
  %v2078 = vpop.f32.mrf.mxu0
  %v2079 = vadd.f32 0.0, %v2078
  %2080 = vmatmul.f32.gmra.mxu0 %v2022
  %v2081 = vpop.f32.mrf.mxu0
  %v2082 = vadd.f32 0.0, %v2081
  %2083 = vmatmul.f32.gmra.mxu0 %v2024
  %v2084 = vpop.f32.mrf.mxu0
  %v2085 = vadd.f32 0.0, %v2084
  %2086 = vmatmul.f32.gmra.mxu0 %v2026
  %v2087 = vpop.f32.mrf.mxu0
  %v2088 = vadd.f32 0.0, %v2087
  %2089 = vmatmul.f32.gmra.mxu0 %v2028
  %v2090 = vpop.f32.mrf.mxu0
  %v2091 = vadd.f32 0.0, %v2090
  %2092 = vmatmul.f32.gmra.mxu0 %v2030
  %v2093 = vpop.f32.mrf.mxu0
  %v2094 = vadd.f32 0.0, %v2093
  %2095 = vmatmul.f32.gmra.mxu0 %v2032
  %v2096 = vpop.f32.mrf.mxu0
  %v2097 = vadd.f32 0.0, %v2096
  %2098 = vdwg.mxu0
  %2099 = vmatpush.msra.mxu0 %v1096
  %2100 = vmatpush.msra.mxu0 %v1081
  %2101 = vmatpush.msra.mxu0 %v1066
  %2102 = vmatpush.msra.mxu0 %v1051
  %2103 = vmatpush.msra.mxu0 %v1036
  %2104 = vmatpush.msra.mxu0 %v1021
  %2105 = vmatpush.msra.mxu0 %v1006
  %2106 = vmatpush.msra.mxu0 %v991
  %2107 = vmatpush.msra.mxu0 %v976
  %2108 = vmatpush.msra.mxu0 %v961
  %2109 = vmatpush.msra.mxu0 %v946
  %2110 = vmatpush.msra.mxu0 %v931
  %2111 = vmatpush.msra.mxu0 %v916
  %2112 = vmatpush.msra.mxu0 %v901
  %2113 = vmatpush.msra.mxu0 %v886
  %2114 = vmatpush.msra.mxu0 %v871
  %2115 = vmatmul.f32.gmra.mxu0 %v2003
  %v2116 = vpop.f32.mrf.mxu0
  %v2117 = vadd.f32 %v2052, %v2116
  %2118 = vmatmul.f32.gmra.mxu0 %v2005
  %v2119 = vpop.f32.mrf.mxu0
  %v2120 = vadd.f32 %v2055, %v2119
  %2121 = vmatmul.f32.gmra.mxu0 %v2007
  %v2122 = vpop.f32.mrf.mxu0
  %v2123 = vadd.f32 %v2058, %v2122
  %2124 = vmatmul.f32.gmra.mxu0 %v2009
  %v2125 = vpop.f32.mrf.mxu0
  %v2126 = vadd.f32 %v2061, %v2125
  %2127 = vmatmul.f32.gmra.mxu0 %v2011
  %v2128 = vpop.f32.mrf.mxu0
  %v2129 = vadd.f32 %v2064, %v2128
  %2130 = vmatmul.f32.gmra.mxu0 %v2013
  %v2131 = vpop.f32.mrf.mxu0
  %v2132 = vadd.f32 %v2067, %v2131
  %2133 = vmatmul.f32.gmra.mxu0 %v2015
  %v2134 = vpop.f32.mrf.mxu0
  %v2135 = vadd.f32 %v2070, %v2134
  %2136 = vmatmul.f32.gmra.mxu0 %v2017
  %v2137 = vpop.f32.mrf.mxu0
  %v2138 = vadd.f32 %v2073, %v2137
  %2139 = vmatmul.f32.gmra.mxu0 %v2019
  %v2140 = vpop.f32.mrf.mxu0
  %v2141 = vadd.f32 %v2076, %v2140
  %2142 = vmatmul.f32.gmra.mxu0 %v2021
  %v2143 = vpop.f32.mrf.mxu0
  %v2144 = vadd.f32 %v2079, %v2143
  %2145 = vmatmul.f32.gmra.mxu0 %v2023
  %v2146 = vpop.f32.mrf.mxu0
  %v2147 = vadd.f32 %v2082, %v2146
  %2148 = vmatmul.f32.gmra.mxu0 %v2025
  %v2149 = vpop.f32.mrf.mxu0
  %v2150 = vadd.f32 %v2085, %v2149
  %2151 = vmatmul.f32.gmra.mxu0 %v2027
  %v2152 = vpop.f32.mrf.mxu0
  %v2153 = vadd.f32 %v2088, %v2152
  %2154 = vmatmul.f32.gmra.mxu0 %v2029
  %v2155 = vpop.f32.mrf.mxu0
  %v2156 = vadd.f32 %v2091, %v2155
  %2157 = vmatmul.f32.gmra.mxu0 %v2031
  %v2158 = vpop.f32.mrf.mxu0
  %v2159 = vadd.f32 %v2094, %v2158
  %2160 = vmatmul.f32.gmra.mxu0 %v2033
  %v2161 = vpop.f32.mrf.mxu0
  %v2162 = vadd.f32 %v2097, %v2161
  %2163 = vdwg.mxu0
  %s2164 = scalar_lea.vmem %s4, 192
  %v2165 = vld [vmem:[%s2164] sm:$0xff]
  %v2166 = vld [vmem:[%s2164 + $0x8] sm:$0xff]
  %v2167 = vld [vmem:[%s2164 + $0x10] sm:$0xff]
  %v2168 = vld [vmem:[%s2164 + $0x18] sm:$0xff]
  %v2170 = vsel %vm168, %v2117, 0
  %v2173 = vsel %vm168, %v2120, 0
  %v2176 = vsel %vm168, %v2123, 0
  %v2179 = vsel %vm168, %v2126, 0
  %v2182 = vsel %vm168, %v2129, 0
  %v2185 = vsel %vm168, %v2132, 0
  %v2188 = vsel %vm168, %v2135, 0
  %v2191 = vsel %vm168, %v2138, 0
  %v2194 = vsel %vm168, %v2141, 0
  %v2197 = vsel %vm168, %v2144, 0
  %v2200 = vsel %vm168, %v2147, 0
  %v2203 = vsel %vm168, %v2150, 0
  %v2206 = vsel %vm168, %v2153, 0
  %v2209 = vsel %vm168, %v2156, 0
  %v2212 = vsel %vm168, %v2159, 0
  %v2215 = vsel %vm168, %v2162, 0
  %2217 = vmatpush.msra.mxu0 0.0
  %2218 = vmatpush.msra.mxu0 0.0
  %2219 = vmatpush.msra.mxu0 0.0
  %2220 = vmatpush.msra.mxu0 0.0
  %2221 = vmatpush.msra.mxu0 0.0
  %2222 = vmatpush.msra.mxu0 0.0
  %2223 = vmatpush.msra.mxu0 0.0
  %2224 = vmatpush.msra.mxu0 0.0
  %2225 = vmatpush.msra.mxu0 0.0
  %2226 = vmatpush.msra.mxu0 0.0
  %2227 = vmatpush.msra.mxu0 0.0
  %2228 = vmatpush.msra.mxu0 0.0
  %2229 = vmatpush.msra.mxu0 %v2168
  %2230 = vmatpush.msra.mxu0 %v2167
  %2231 = vmatpush.msra.mxu0 %v2166
  %2232 = vmatpush.msra.mxu0 %v2165
  %2233 = vmatmul.f32.gmra.mxu0 %v2170
  %v2234 = vpop.f32.mrf.mxu0
  %v2235 = vadd.f32 0.0, %v2234
  %2236 = vmatmul.f32.gmra.mxu0 %v2173
  %v2237 = vpop.f32.mrf.mxu0
  %v2238 = vadd.f32 0.0, %v2237
  %2239 = vmatmul.f32.gmra.mxu0 %v2176
  %v2240 = vpop.f32.mrf.mxu0
  %v2241 = vadd.f32 0.0, %v2240
  %2242 = vmatmul.f32.gmra.mxu0 %v2179
  %v2243 = vpop.f32.mrf.mxu0
  %v2244 = vadd.f32 0.0, %v2243
  %2245 = vmatmul.f32.gmra.mxu0 %v2182
  %v2246 = vpop.f32.mrf.mxu0
  %v2247 = vadd.f32 0.0, %v2246
  %2248 = vmatmul.f32.gmra.mxu0 %v2185
  %v2249 = vpop.f32.mrf.mxu0
  %v2250 = vadd.f32 0.0, %v2249
  %2251 = vmatmul.f32.gmra.mxu0 %v2188
  %v2252 = vpop.f32.mrf.mxu0
  %v2253 = vadd.f32 0.0, %v2252
  %2254 = vmatmul.f32.gmra.mxu0 %v2191
  %v2255 = vpop.f32.mrf.mxu0
  %v2256 = vadd.f32 0.0, %v2255
  %2257 = vmatmul.f32.gmra.mxu0 %v2194
  %v2258 = vpop.f32.mrf.mxu0
  %v2259 = vadd.f32 0.0, %v2258
  %2260 = vmatmul.f32.gmra.mxu0 %v2197
  %v2261 = vpop.f32.mrf.mxu0
  %v2262 = vadd.f32 0.0, %v2261
  %2263 = vmatmul.f32.gmra.mxu0 %v2200
  %v2264 = vpop.f32.mrf.mxu0
  %v2265 = vadd.f32 0.0, %v2264
  %2266 = vmatmul.f32.gmra.mxu0 %v2203
  %v2267 = vpop.f32.mrf.mxu0
  %v2268 = vadd.f32 0.0, %v2267
  %2269 = vmatmul.f32.gmra.mxu0 %v2206
  %v2270 = vpop.f32.mrf.mxu0
  %v2271 = vadd.f32 0.0, %v2270
  %2272 = vmatmul.f32.gmra.mxu0 %v2209
  %v2273 = vpop.f32.mrf.mxu0
  %v2274 = vadd.f32 0.0, %v2273
  %2275 = vmatmul.f32.gmra.mxu0 %v2212
  %v2276 = vpop.f32.mrf.mxu0
  %v2277 = vadd.f32 0.0, %v2276
  %2278 = vmatmul.f32.gmra.mxu0 %v2215
  %v2279 = vpop.f32.mrf.mxu0
  %v2280 = vadd.f32 0.0, %v2279
  %2281 = vdwg.mxu0
  %v2282 = vadd.f32 %v1985, %v2235
  %v2283 = vadd.f32 %v1986, %v2238
  %v2284 = vadd.f32 %v1987, %v2241
  %v2285 = vadd.f32 %v1988, %v2244
  %v2286 = vadd.f32 %v1989, %v2247
  %v2287 = vadd.f32 %v1990, %v2250
  %v2288 = vadd.f32 %v1991, %v2253
  %v2289 = vadd.f32 %v1992, %v2256
  %v2290 = vadd.f32 %v1993, %v2259
  %v2291 = vadd.f32 %v1994, %v2262
  %v2292 = vadd.f32 %v1995, %v2265
  %v2293 = vadd.f32 %v1996, %v2268
  %v2294 = vadd.f32 %v1997, %v2271
  %v2295 = vadd.f32 %v1998, %v2274
  %v2296 = vadd.f32 %v1999, %v2277
  %v2297 = vadd.f32 %v2000, %v2280
  %s2298 = scalar_lea.vmem %s4, 224
  %v2299 = vld [vmem:[%s2298] sm:$0xff]
  %v2300 = vld [vmem:[%s2298 + $0x8] sm:$0xff]
  %v2301 = vld [vmem:[%s2298 + $0x10] sm:$0xff]
  %v2302 = vld [vmem:[%s2298 + $0x18] sm:$0xff]
  %2303 = vmatpush.msra.mxu0 0.0
  %2304 = vmatpush.msra.mxu0 0.0
  %2305 = vmatpush.msra.mxu0 0.0
  %2306 = vmatpush.msra.mxu0 0.0
  %2307 = vmatpush.msra.mxu0 0.0
  %2308 = vmatpush.msra.mxu0 0.0
  %2309 = vmatpush.msra.mxu0 0.0
  %2310 = vmatpush.msra.mxu0 0.0
  %2311 = vmatpush.msra.mxu0 0.0
  %2312 = vmatpush.msra.mxu0 0.0
  %2313 = vmatpush.msra.mxu0 0.0
  %2314 = vmatpush.msra.mxu0 0.0
  %2315 = vmatpush.msra.mxu0 %v2302
  %2316 = vmatpush.msra.mxu0 %v2301
  %2317 = vmatpush.msra.mxu0 %v2300
  %2318 = vmatpush.msra.mxu0 %v2299
  %2319 = vmatmul.f32.gmra.mxu0 %v2170
  %v2320 = vpop.f32.mrf.mxu0
  %v2321 = vadd.f32 0.0, %v2320
  %2322 = vmatmul.f32.gmra.mxu0 %v2173
  %v2323 = vpop.f32.mrf.mxu0
  %v2324 = vadd.f32 0.0, %v2323
  %2325 = vmatmul.f32.gmra.mxu0 %v2176
  %v2326 = vpop.f32.mrf.mxu0
  %v2327 = vadd.f32 0.0, %v2326
  %2328 = vmatmul.f32.gmra.mxu0 %v2179
  %v2329 = vpop.f32.mrf.mxu0
  %v2330 = vadd.f32 0.0, %v2329
  %2331 = vmatmul.f32.gmra.mxu0 %v2182
  %v2332 = vpop.f32.mrf.mxu0
  %v2333 = vadd.f32 0.0, %v2332
  %2334 = vmatmul.f32.gmra.mxu0 %v2185
  %v2335 = vpop.f32.mrf.mxu0
  %v2336 = vadd.f32 0.0, %v2335
  %2337 = vmatmul.f32.gmra.mxu0 %v2188
  %v2338 = vpop.f32.mrf.mxu0
  %v2339 = vadd.f32 0.0, %v2338
  %2340 = vmatmul.f32.gmra.mxu0 %v2191
  %v2341 = vpop.f32.mrf.mxu0
  %v2342 = vadd.f32 0.0, %v2341
  %2343 = vmatmul.f32.gmra.mxu0 %v2194
  %v2344 = vpop.f32.mrf.mxu0
  %v2345 = vadd.f32 0.0, %v2344
  %2346 = vmatmul.f32.gmra.mxu0 %v2197
  %v2347 = vpop.f32.mrf.mxu0
  %v2348 = vadd.f32 0.0, %v2347
  %2349 = vmatmul.f32.gmra.mxu0 %v2200
  %v2350 = vpop.f32.mrf.mxu0
  %v2351 = vadd.f32 0.0, %v2350
  %2352 = vmatmul.f32.gmra.mxu0 %v2203
  %v2353 = vpop.f32.mrf.mxu0
  %v2354 = vadd.f32 0.0, %v2353
  %2355 = vmatmul.f32.gmra.mxu0 %v2206
  %v2356 = vpop.f32.mrf.mxu0
  %v2357 = vadd.f32 0.0, %v2356
  %2358 = vmatmul.f32.gmra.mxu0 %v2209
  %v2359 = vpop.f32.mrf.mxu0
  %v2360 = vadd.f32 0.0, %v2359
  %2361 = vmatmul.f32.gmra.mxu0 %v2212
  %v2362 = vpop.f32.mrf.mxu0
  %v2363 = vadd.f32 0.0, %v2362
  %2364 = vmatmul.f32.gmra.mxu0 %v2215
  %v2365 = vpop.f32.mrf.mxu0
  %v2366 = vadd.f32 0.0, %v2365
  %2367 = vdwg.mxu0
  %v2368 = vadd.f32 %v2282, %v2321
  %v2369 = vadd.f32 %v2283, %v2324
  %v2370 = vadd.f32 %v2284, %v2327
  %v2371 = vadd.f32 %v2285, %v2330
  %v2372 = vadd.f32 %v2286, %v2333
  %v2373 = vadd.f32 %v2287, %v2336
  %v2374 = vadd.f32 %v2288, %v2339
  %v2375 = vadd.f32 %v2289, %v2342
  %v2376 = vadd.f32 %v2290, %v2345
  %v2377 = vadd.f32 %v2291, %v2348
  %v2378 = vadd.f32 %v2292, %v2351
  %v2379 = vadd.f32 %v2293, %v2354
  %v2380 = vadd.f32 %v2294, %v2357
  %v2381 = vadd.f32 %v2295, %v2360
  %v2382 = vadd.f32 %v2296, %v2363
  %v2383 = vadd.f32 %v2297, %v2366
  %s2384 = scalar_lea.vmem %s4, 256
  %v2385 = vld [vmem:[%s2384] sm:$0xff]
  %v2386 = vld [vmem:[%s2384 + $0x8] sm:$0xff]
  %v2387 = vld [vmem:[%s2384 + $0x10] sm:$0xff]
  %v2388 = vld [vmem:[%s2384 + $0x18] sm:$0xff]
  %2389 = vmatpush.msra.mxu0 0.0
  %2390 = vmatpush.msra.mxu0 0.0
  %2391 = vmatpush.msra.mxu0 0.0
  %2392 = vmatpush.msra.mxu0 0.0
  %2393 = vmatpush.msra.mxu0 0.0
  %2394 = vmatpush.msra.mxu0 0.0
  %2395 = vmatpush.msra.mxu0 0.0
  %2396 = vmatpush.msra.mxu0 0.0
  %2397 = vmatpush.msra.mxu0 0.0
  %2398 = vmatpush.msra.mxu0 0.0
  %2399 = vmatpush.msra.mxu0 0.0
  %2400 = vmatpush.msra.mxu0 0.0
  %2401 = vmatpush.msra.mxu0 %v2388
  %2402 = vmatpush.msra.mxu0 %v2387
  %2403 = vmatpush.msra.mxu0 %v2386
  %2404 = vmatpush.msra.mxu0 %v2385
  %2405 = vmatmul.f32.gmra.mxu0 %v2170
  %v2406 = vpop.f32.mrf.mxu0
  %v2407 = vadd.f32 0.0, %v2406
  %2408 = vmatmul.f32.gmra.mxu0 %v2173
  %v2409 = vpop.f32.mrf.mxu0
  %v2410 = vadd.f32 0.0, %v2409
  %2411 = vmatmul.f32.gmra.mxu0 %v2176
  %v2412 = vpop.f32.mrf.mxu0
  %v2413 = vadd.f32 0.0, %v2412
  %2414 = vmatmul.f32.gmra.mxu0 %v2179
  %v2415 = vpop.f32.mrf.mxu0
  %v2416 = vadd.f32 0.0, %v2415
  %2417 = vmatmul.f32.gmra.mxu0 %v2182
  %v2418 = vpop.f32.mrf.mxu0
  %v2419 = vadd.f32 0.0, %v2418
  %2420 = vmatmul.f32.gmra.mxu0 %v2185
  %v2421 = vpop.f32.mrf.mxu0
  %v2422 = vadd.f32 0.0, %v2421
  %2423 = vmatmul.f32.gmra.mxu0 %v2188
  %v2424 = vpop.f32.mrf.mxu0
  %v2425 = vadd.f32 0.0, %v2424
  %2426 = vmatmul.f32.gmra.mxu0 %v2191
  %v2427 = vpop.f32.mrf.mxu0
  %v2428 = vadd.f32 0.0, %v2427
  %2429 = vmatmul.f32.gmra.mxu0 %v2194
  %v2430 = vpop.f32.mrf.mxu0
  %v2431 = vadd.f32 0.0, %v2430
  %2432 = vmatmul.f32.gmra.mxu0 %v2197
  %v2433 = vpop.f32.mrf.mxu0
  %v2434 = vadd.f32 0.0, %v2433
  %2435 = vmatmul.f32.gmra.mxu0 %v2200
  %v2436 = vpop.f32.mrf.mxu0
  %v2437 = vadd.f32 0.0, %v2436
  %2438 = vmatmul.f32.gmra.mxu0 %v2203
  %v2439 = vpop.f32.mrf.mxu0
  %v2440 = vadd.f32 0.0, %v2439
  %2441 = vmatmul.f32.gmra.mxu0 %v2206
  %v2442 = vpop.f32.mrf.mxu0
  %v2443 = vadd.f32 0.0, %v2442
  %2444 = vmatmul.f32.gmra.mxu0 %v2209
  %v2445 = vpop.f32.mrf.mxu0
  %v2446 = vadd.f32 0.0, %v2445
  %2447 = vmatmul.f32.gmra.mxu0 %v2212
  %v2448 = vpop.f32.mrf.mxu0
  %v2449 = vadd.f32 0.0, %v2448
  %2450 = vmatmul.f32.gmra.mxu0 %v2215
  %v2451 = vpop.f32.mrf.mxu0
  %v2452 = vadd.f32 0.0, %v2451
  %2453 = vdwg.mxu0
  %v2454 = vadd.f32 %v2368, %v2407
  %v2455 = vadd.f32 %v2369, %v2410
  %v2456 = vadd.f32 %v2370, %v2413
  %v2457 = vadd.f32 %v2371, %v2416
  %v2458 = vadd.f32 %v2372, %v2419
  %v2459 = vadd.f32 %v2373, %v2422
  %v2460 = vadd.f32 %v2374, %v2425
  %v2461 = vadd.f32 %v2375, %v2428
  %v2462 = vadd.f32 %v2376, %v2431
  %v2463 = vadd.f32 %v2377, %v2434
  %v2464 = vadd.f32 %v2378, %v2437
  %v2465 = vadd.f32 %v2379, %v2440
  %v2466 = vadd.f32 %v2380, %v2443
  %v2467 = vadd.f32 %v2381, %v2446
  %v2468 = vadd.f32 %v2382, %v2449
  %v2469 = vadd.f32 %v2383, %v2452
  %v2470 = vld [vmem:[%s5] sm:$0x1]
  %v2472 = vperm.slane %v2470, 0
  %v2474 = vadd.f32 %v2454, %v2472
  %v2475 = vadd.f32 %v2455, %v2472
  %v2476 = vadd.f32 %v2456, %v2472
  %v2477 = vadd.f32 %v2457, %v2472
  %v2478 = vadd.f32 %v2458, %v2472
  %v2479 = vadd.f32 %v2459, %v2472
  %v2480 = vadd.f32 %v2460, %v2472
  %v2481 = vadd.f32 %v2461, %v2472
  %v2482 = vadd.f32 %v2462, %v2472
  %v2483 = vadd.f32 %v2463, %v2472
  %v2484 = vadd.f32 %v2464, %v2472
  %v2485 = vadd.f32 %v2465, %v2472
  %v2486 = vadd.f32 %v2466, %v2472
  %v2487 = vadd.f32 %v2467, %v2472
  %v2488 = vadd.f32 %v2468, %v2472
  %v2489 = vadd.f32 %v2469, %v2472
  %v2490 = vmax.f32 %v2474, 0.0
  %v2491 = vmax.f32 %v2475, 0.0
  %v2492 = vmax.f32 %v2476, 0.0
  %v2493 = vmax.f32 %v2477, 0.0
  %v2494 = vmax.f32 %v2478, 0.0
  %v2495 = vmax.f32 %v2479, 0.0
  %v2496 = vmax.f32 %v2480, 0.0
  %v2497 = vmax.f32 %v2481, 0.0
  %v2498 = vmax.f32 %v2482, 0.0
  %v2499 = vmax.f32 %v2483, 0.0
  %v2500 = vmax.f32 %v2484, 0.0
  %v2501 = vmax.f32 %v2485, 0.0
  %v2502 = vmax.f32 %v2486, 0.0
  %v2503 = vmax.f32 %v2487, 0.0
  %v2504 = vmax.f32 %v2488, 0.0
  %v2505 = vmax.f32 %v2489, 0.0
  %v2506 = vld [vmem:[%s6] sm:$0xff]
  %v2507 = vld [vmem:[%s6 + $0x8] sm:$0xff]
  %v2508 = vld [vmem:[%s6 + $0x10] sm:$0xff]
  %v2509 = vld [vmem:[%s6 + $0x18] sm:$0xff]
  %v2510 = vld [vmem:[%s6 + $0x20] sm:$0xff]
  %v2511 = vld [vmem:[%s6 + $0x28] sm:$0xff]
  %v2512 = vld [vmem:[%s6 + $0x30] sm:$0xff]
  %v2513 = vld [vmem:[%s6 + $0x38] sm:$0xff]
  %2514 = vmatpush.msra.mxu0 %v2505
  %2515 = vmatpush.msra.mxu0 %v2504
  %2516 = vmatpush.msra.mxu0 %v2503
  %2517 = vmatpush.msra.mxu0 %v2502
  %2518 = vmatpush.msra.mxu0 %v2501
  %2519 = vmatpush.msra.mxu0 %v2500
  %2520 = vmatpush.msra.mxu0 %v2499
  %2521 = vmatpush.msra.mxu0 %v2498
  %2522 = vmatpush.msra.mxu0 %v2497
  %2523 = vmatpush.msra.mxu0 %v2496
  %2524 = vmatpush.msra.mxu0 %v2495
  %2525 = vmatpush.msra.mxu0 %v2494
  %2526 = vmatpush.msra.mxu0 %v2493
  %2527 = vmatpush.msra.mxu0 %v2492
  %2528 = vmatpush.msra.mxu0 %v2491
  %2529 = vmatpush.msra.mxu0 %v2490
  %2530 = vmatmul.f32.gmra.mxu0 %v2506
  %v2531 = vpop.f32.mrf.mxu0
  %v2532 = vadd.f32 0.0, %v2531
  %2533 = vmatmul.f32.gmra.mxu0 %v2507
  %v2534 = vpop.f32.mrf.mxu0
  %v2535 = vadd.f32 0.0, %v2534
  %2536 = vmatmul.f32.gmra.mxu0 %v2508
  %v2537 = vpop.f32.mrf.mxu0
  %v2538 = vadd.f32 0.0, %v2537
  %2539 = vmatmul.f32.gmra.mxu0 %v2509
  %v2540 = vpop.f32.mrf.mxu0
  %v2541 = vadd.f32 0.0, %v2540
  %2542 = vmatmul.f32.gmra.mxu0 %v2510
  %v2543 = vpop.f32.mrf.mxu0
  %v2544 = vadd.f32 0.0, %v2543
  %2545 = vmatmul.f32.gmra.mxu0 %v2511
  %v2546 = vpop.f32.mrf.mxu0
  %v2547 = vadd.f32 0.0, %v2546
  %2548 = vmatmul.f32.gmra.mxu0 %v2512
  %v2549 = vpop.f32.mrf.mxu0
  %v2550 = vadd.f32 0.0, %v2549
  %2551 = vmatmul.f32.gmra.mxu0 %v2513
  %v2552 = vpop.f32.mrf.mxu0
  %v2553 = vadd.f32 0.0, %v2552
  %2554 = vdwg.mxu0
  %v2555 = vld [vmem:[%s7] sm:$0xff]
  %v2556 = vld [vmem:[%s7 + $0x8] sm:$0xff]
  %v2557 = vld [vmem:[%s7 + $0x10] sm:$0xff]
  %v2558 = vld [vmem:[%s7 + $0x18] sm:$0xff]
  %v2559 = vld [vmem:[%s7 + $0x20] sm:$0xff]
  %v2560 = vld [vmem:[%s7 + $0x28] sm:$0xff]
  %v2561 = vld [vmem:[%s7 + $0x30] sm:$0xff]
  %v2562 = vld [vmem:[%s7 + $0x38] sm:$0xff]
  %s2563 = scalar_lea.vmem %s7, 64
  %v2564 = vld [vmem:[%s2563] sm:$0xff]
  %v2565 = vld [vmem:[%s2563 + $0x8] sm:$0xff]
  %v2566 = vld [vmem:[%s2563 + $0x10] sm:$0xff]
  %v2567 = vld [vmem:[%s2563 + $0x18] sm:$0xff]
  %v2568 = vld [vmem:[%s2563 + $0x20] sm:$0xff]
  %v2569 = vld [vmem:[%s2563 + $0x28] sm:$0xff]
  %v2570 = vld [vmem:[%s2563 + $0x30] sm:$0xff]
  %v2571 = vld [vmem:[%s2563 + $0x38] sm:$0xff]
  %vm2572 = vcmask 523264
  %v2574 = vsel %vm2572, %v2532, 0
  %v2577 = vsel %vm2572, %v2535, 0
  %v2580 = vsel %vm2572, %v2538, 0
  %v2583 = vsel %vm2572, %v2541, 0
  %v2586 = vsel %vm2572, %v2544, 0
  %v2589 = vsel %vm2572, %v2547, 0
  %v2592 = vsel %vm2572, %v2550, 0
  %v2595 = vsel %vm2572, %v2553, 0
  %2597 = vmatpush.msra.mxu0 0.0
  %2598 = vmatpush.msra.mxu0 0.0
  %2599 = vmatpush.msra.mxu0 0.0
  %2600 = vmatpush.msra.mxu0 0.0
  %2601 = vmatpush.msra.mxu0 0.0
  %2602 = vmatpush.msra.mxu0 0.0
  %2603 = vmatpush.msra.mxu0 0.0
  %2604 = vmatpush.msra.mxu0 0.0
  %2605 = vmatpush.msra.mxu0 %v2571
  %2606 = vmatpush.msra.mxu0 %v2570
  %2607 = vmatpush.msra.mxu0 %v2569
  %2608 = vmatpush.msra.mxu0 %v2568
  %2609 = vmatpush.msra.mxu0 %v2567
  %2610 = vmatpush.msra.mxu0 %v2566
  %2611 = vmatpush.msra.mxu0 %v2565
  %2612 = vmatpush.msra.mxu0 %v2564
  %2613 = vmatmul.f32.gmra.mxu0 %v2574
  %v2614 = vpop.f32.mrf.mxu0
  %v2615 = vadd.f32 0.0, %v2614
  %2616 = vmatmul.f32.gmra.mxu0 %v2577
  %v2617 = vpop.f32.mrf.mxu0
  %v2618 = vadd.f32 0.0, %v2617
  %2619 = vmatmul.f32.gmra.mxu0 %v2580
  %v2620 = vpop.f32.mrf.mxu0
  %v2621 = vadd.f32 0.0, %v2620
  %2622 = vmatmul.f32.gmra.mxu0 %v2583
  %v2623 = vpop.f32.mrf.mxu0
  %v2624 = vadd.f32 0.0, %v2623
  %2625 = vmatmul.f32.gmra.mxu0 %v2586
  %v2626 = vpop.f32.mrf.mxu0
  %v2627 = vadd.f32 0.0, %v2626
  %2628 = vmatmul.f32.gmra.mxu0 %v2589
  %v2629 = vpop.f32.mrf.mxu0
  %v2630 = vadd.f32 0.0, %v2629
  %2631 = vmatmul.f32.gmra.mxu0 %v2592
  %v2632 = vpop.f32.mrf.mxu0
  %v2633 = vadd.f32 0.0, %v2632
  %2634 = vmatmul.f32.gmra.mxu0 %v2595
  %v2635 = vpop.f32.mrf.mxu0
  %v2636 = vadd.f32 0.0, %v2635
  %2637 = vdwg.mxu0
  %2638 = vmatpush.msra.mxu0 0.0
  %2639 = vmatpush.msra.mxu0 0.0
  %2640 = vmatpush.msra.mxu0 0.0
  %2641 = vmatpush.msra.mxu0 0.0
  %2642 = vmatpush.msra.mxu0 0.0
  %2643 = vmatpush.msra.mxu0 0.0
  %2644 = vmatpush.msra.mxu0 0.0
  %2645 = vmatpush.msra.mxu0 0.0
  %2646 = vmatpush.msra.mxu0 %v2562
  %2647 = vmatpush.msra.mxu0 %v2561
  %2648 = vmatpush.msra.mxu0 %v2560
  %2649 = vmatpush.msra.mxu0 %v2559
  %2650 = vmatpush.msra.mxu0 %v2558
  %2651 = vmatpush.msra.mxu0 %v2557
  %2652 = vmatpush.msra.mxu0 %v2556
  %2653 = vmatpush.msra.mxu0 %v2555
  %2654 = vmatmul.f32.gmra.mxu0 %v2574
  %v2655 = vpop.f32.mrf.mxu0
  %v2656 = vadd.f32 %v2615, %v2655
  %2657 = vmatmul.f32.gmra.mxu0 %v2577
  %v2658 = vpop.f32.mrf.mxu0
  %v2659 = vadd.f32 %v2618, %v2658
  %2660 = vmatmul.f32.gmra.mxu0 %v2580
  %v2661 = vpop.f32.mrf.mxu0
  %v2662 = vadd.f32 %v2621, %v2661
  %2663 = vmatmul.f32.gmra.mxu0 %v2583
  %v2664 = vpop.f32.mrf.mxu0
  %v2665 = vadd.f32 %v2624, %v2664
  %2666 = vmatmul.f32.gmra.mxu0 %v2586
  %v2667 = vpop.f32.mrf.mxu0
  %v2668 = vadd.f32 %v2627, %v2667
  %2669 = vmatmul.f32.gmra.mxu0 %v2589
  %v2670 = vpop.f32.mrf.mxu0
  %v2671 = vadd.f32 %v2630, %v2670
  %2672 = vmatmul.f32.gmra.mxu0 %v2592
  %v2673 = vpop.f32.mrf.mxu0
  %v2674 = vadd.f32 %v2633, %v2673
  %2675 = vmatmul.f32.gmra.mxu0 %v2595
  %v2676 = vpop.f32.mrf.mxu0
  %v2677 = vadd.f32 %v2636, %v2676
  %2678 = vdwg.mxu0
  %s2679 = scalar_lea.vmem %s7, 128
  %v2680 = vld [vmem:[%s2679] sm:$0xff]
  %v2681 = vld [vmem:[%s2679 + $0x8] sm:$0xff]
  %v2682 = vld [vmem:[%s2679 + $0x10] sm:$0xff]
  %v2683 = vld [vmem:[%s2679 + $0x18] sm:$0xff]
  %v2684 = vld [vmem:[%s2679 + $0x20] sm:$0xff]
  %v2685 = vld [vmem:[%s2679 + $0x28] sm:$0xff]
  %v2686 = vld [vmem:[%s2679 + $0x30] sm:$0xff]
  %v2687 = vld [vmem:[%s2679 + $0x38] sm:$0xff]
  %2688 = vmatpush.msra.mxu0 0.0
  %2689 = vmatpush.msra.mxu0 0.0
  %2690 = vmatpush.msra.mxu0 0.0
  %2691 = vmatpush.msra.mxu0 0.0
  %2692 = vmatpush.msra.mxu0 0.0
  %2693 = vmatpush.msra.mxu0 0.0
  %2694 = vmatpush.msra.mxu0 0.0
  %2695 = vmatpush.msra.mxu0 0.0
  %2696 = vmatpush.msra.mxu0 %v2687
  %2697 = vmatpush.msra.mxu0 %v2686
  %2698 = vmatpush.msra.mxu0 %v2685
  %2699 = vmatpush.msra.mxu0 %v2684
  %2700 = vmatpush.msra.mxu0 %v2683
  %2701 = vmatpush.msra.mxu0 %v2682
  %2702 = vmatpush.msra.mxu0 %v2681
  %2703 = vmatpush.msra.mxu0 %v2680
  %2704 = vmatmul.f32.gmra.mxu0 %v2574
  %v2705 = vpop.f32.mrf.mxu0
  %v2706 = vadd.f32 0.0, %v2705
  %2707 = vmatmul.f32.gmra.mxu0 %v2577
  %v2708 = vpop.f32.mrf.mxu0
  %v2709 = vadd.f32 0.0, %v2708
  %2710 = vmatmul.f32.gmra.mxu0 %v2580
  %v2711 = vpop.f32.mrf.mxu0
  %v2712 = vadd.f32 0.0, %v2711
  %2713 = vmatmul.f32.gmra.mxu0 %v2583
  %v2714 = vpop.f32.mrf.mxu0
  %v2715 = vadd.f32 0.0, %v2714
  %2716 = vmatmul.f32.gmra.mxu0 %v2586
  %v2717 = vpop.f32.mrf.mxu0
  %v2718 = vadd.f32 0.0, %v2717
  %2719 = vmatmul.f32.gmra.mxu0 %v2589
  %v2720 = vpop.f32.mrf.mxu0
  %v2721 = vadd.f32 0.0, %v2720
  %2722 = vmatmul.f32.gmra.mxu0 %v2592
  %v2723 = vpop.f32.mrf.mxu0
  %v2724 = vadd.f32 0.0, %v2723
  %2725 = vmatmul.f32.gmra.mxu0 %v2595
  %v2726 = vpop.f32.mrf.mxu0
  %v2727 = vadd.f32 0.0, %v2726
  %2728 = vdwg.mxu0
  %v2729 = vadd.f32 %v2656, %v2706
  %v2730 = vadd.f32 %v2659, %v2709
  %v2731 = vadd.f32 %v2662, %v2712
  %v2732 = vadd.f32 %v2665, %v2715
  %v2733 = vadd.f32 %v2668, %v2718
  %v2734 = vadd.f32 %v2671, %v2721
  %v2735 = vadd.f32 %v2674, %v2724
  %v2736 = vadd.f32 %v2677, %v2727
  %s2737 = scalar_lea.vmem %s6, 64
  %v2738 = vld [vmem:[%s2737] sm:$0xff]
  %v2739 = vld [vmem:[%s2737 + $0x8] sm:$0xff]
  %v2740 = vld [vmem:[%s2737 + $0x10] sm:$0xff]
  %v2741 = vld [vmem:[%s2737 + $0x18] sm:$0xff]
  %v2742 = vld [vmem:[%s2737 + $0x20] sm:$0xff]
  %v2743 = vld [vmem:[%s2737 + $0x28] sm:$0xff]
  %v2744 = vld [vmem:[%s2737 + $0x30] sm:$0xff]
  %v2745 = vld [vmem:[%s2737 + $0x38] sm:$0xff]
  %2746 = vmatpush.msra.mxu0 %v2505
  %2747 = vmatpush.msra.mxu0 %v2504
  %2748 = vmatpush.msra.mxu0 %v2503
  %2749 = vmatpush.msra.mxu0 %v2502
  %2750 = vmatpush.msra.mxu0 %v2501
  %2751 = vmatpush.msra.mxu0 %v2500
  %2752 = vmatpush.msra.mxu0 %v2499
  %2753 = vmatpush.msra.mxu0 %v2498
  %2754 = vmatpush.msra.mxu0 %v2497
  %2755 = vmatpush.msra.mxu0 %v2496
  %2756 = vmatpush.msra.mxu0 %v2495
  %2757 = vmatpush.msra.mxu0 %v2494
  %2758 = vmatpush.msra.mxu0 %v2493
  %2759 = vmatpush.msra.mxu0 %v2492
  %2760 = vmatpush.msra.mxu0 %v2491
  %2761 = vmatpush.msra.mxu0 %v2490
  %2762 = vmatmul.f32.gmra.mxu0 %v2738
  %v2763 = vpop.f32.mrf.mxu0
  %v2764 = vadd.f32 0.0, %v2763
  %2765 = vmatmul.f32.gmra.mxu0 %v2739
  %v2766 = vpop.f32.mrf.mxu0
  %v2767 = vadd.f32 0.0, %v2766
  %2768 = vmatmul.f32.gmra.mxu0 %v2740
  %v2769 = vpop.f32.mrf.mxu0
  %v2770 = vadd.f32 0.0, %v2769
  %2771 = vmatmul.f32.gmra.mxu0 %v2741
  %v2772 = vpop.f32.mrf.mxu0
  %v2773 = vadd.f32 0.0, %v2772
  %2774 = vmatmul.f32.gmra.mxu0 %v2742
  %v2775 = vpop.f32.mrf.mxu0
  %v2776 = vadd.f32 0.0, %v2775
  %2777 = vmatmul.f32.gmra.mxu0 %v2743
  %v2778 = vpop.f32.mrf.mxu0
  %v2779 = vadd.f32 0.0, %v2778
  %2780 = vmatmul.f32.gmra.mxu0 %v2744
  %v2781 = vpop.f32.mrf.mxu0
  %v2782 = vadd.f32 0.0, %v2781
  %2783 = vmatmul.f32.gmra.mxu0 %v2745
  %v2784 = vpop.f32.mrf.mxu0
  %v2785 = vadd.f32 0.0, %v2784
  %2786 = vdwg.mxu0
  %s2787 = scalar_lea.vmem %s7, 192
  %v2788 = vld [vmem:[%s2787] sm:$0xff]
  %v2789 = vld [vmem:[%s2787 + $0x8] sm:$0xff]
  %v2790 = vld [vmem:[%s2787 + $0x10] sm:$0xff]
  %v2791 = vld [vmem:[%s2787 + $0x18] sm:$0xff]
  %v2792 = vld [vmem:[%s2787 + $0x20] sm:$0xff]
  %v2793 = vld [vmem:[%s2787 + $0x28] sm:$0xff]
  %v2794 = vld [vmem:[%s2787 + $0x30] sm:$0xff]
  %v2795 = vld [vmem:[%s2787 + $0x38] sm:$0xff]
  %v2797 = vsel %vm2572, %v2764, 0
  %v2800 = vsel %vm2572, %v2767, 0
  %v2803 = vsel %vm2572, %v2770, 0
  %v2806 = vsel %vm2572, %v2773, 0
  %v2809 = vsel %vm2572, %v2776, 0
  %v2812 = vsel %vm2572, %v2779, 0
  %v2815 = vsel %vm2572, %v2782, 0
  %v2818 = vsel %vm2572, %v2785, 0
  %2820 = vmatpush.msra.mxu0 0.0
  %2821 = vmatpush.msra.mxu0 0.0
  %2822 = vmatpush.msra.mxu0 0.0
  %2823 = vmatpush.msra.mxu0 0.0
  %2824 = vmatpush.msra.mxu0 0.0
  %2825 = vmatpush.msra.mxu0 0.0
  %2826 = vmatpush.msra.mxu0 0.0
  %2827 = vmatpush.msra.mxu0 0.0
  %2828 = vmatpush.msra.mxu0 %v2795
  %2829 = vmatpush.msra.mxu0 %v2794
  %2830 = vmatpush.msra.mxu0 %v2793
  %2831 = vmatpush.msra.mxu0 %v2792
  %2832 = vmatpush.msra.mxu0 %v2791
  %2833 = vmatpush.msra.mxu0 %v2790
  %2834 = vmatpush.msra.mxu0 %v2789
  %2835 = vmatpush.msra.mxu0 %v2788
  %2836 = vmatmul.f32.gmra.mxu0 %v2797
  %v2837 = vpop.f32.mrf.mxu0
  %v2838 = vadd.f32 0.0, %v2837
  %2839 = vmatmul.f32.gmra.mxu0 %v2800
  %v2840 = vpop.f32.mrf.mxu0
  %v2841 = vadd.f32 0.0, %v2840
  %2842 = vmatmul.f32.gmra.mxu0 %v2803
  %v2843 = vpop.f32.mrf.mxu0
  %v2844 = vadd.f32 0.0, %v2843
  %2845 = vmatmul.f32.gmra.mxu0 %v2806
  %v2846 = vpop.f32.mrf.mxu0
  %v2847 = vadd.f32 0.0, %v2846
  %2848 = vmatmul.f32.gmra.mxu0 %v2809
  %v2849 = vpop.f32.mrf.mxu0
  %v2850 = vadd.f32 0.0, %v2849
  %2851 = vmatmul.f32.gmra.mxu0 %v2812
  %v2852 = vpop.f32.mrf.mxu0
  %v2853 = vadd.f32 0.0, %v2852
  %2854 = vmatmul.f32.gmra.mxu0 %v2815
  %v2855 = vpop.f32.mrf.mxu0
  %v2856 = vadd.f32 0.0, %v2855
  %2857 = vmatmul.f32.gmra.mxu0 %v2818
  %v2858 = vpop.f32.mrf.mxu0
  %v2859 = vadd.f32 0.0, %v2858
  %2860 = vdwg.mxu0
  %v2861 = vadd.f32 %v2729, %v2838
  %v2862 = vadd.f32 %v2730, %v2841
  %v2863 = vadd.f32 %v2731, %v2844
  %v2864 = vadd.f32 %v2732, %v2847
  %v2865 = vadd.f32 %v2733, %v2850
  %v2866 = vadd.f32 %v2734, %v2853
  %v2867 = vadd.f32 %v2735, %v2856
  %v2868 = vadd.f32 %v2736, %v2859
  %s2869 = scalar_lea.vmem %s7, 256
  %v2870 = vld [vmem:[%s2869] sm:$0xff]
  %v2871 = vld [vmem:[%s2869 + $0x8] sm:$0xff]
  %v2872 = vld [vmem:[%s2869 + $0x10] sm:$0xff]
  %v2873 = vld [vmem:[%s2869 + $0x18] sm:$0xff]
  %v2874 = vld [vmem:[%s2869 + $0x20] sm:$0xff]
  %v2875 = vld [vmem:[%s2869 + $0x28] sm:$0xff]
  %v2876 = vld [vmem:[%s2869 + $0x30] sm:$0xff]
  %v2877 = vld [vmem:[%s2869 + $0x38] sm:$0xff]
  %2878 = vmatpush.msra.mxu0 0.0
  %2879 = vmatpush.msra.mxu0 0.0
  %2880 = vmatpush.msra.mxu0 0.0
  %2881 = vmatpush.msra.mxu0 0.0
  %2882 = vmatpush.msra.mxu0 0.0
  %2883 = vmatpush.msra.mxu0 0.0
  %2884 = vmatpush.msra.mxu0 0.0
  %2885 = vmatpush.msra.mxu0 0.0
  %2886 = vmatpush.msra.mxu0 %v2877
  %2887 = vmatpush.msra.mxu0 %v2876
  %2888 = vmatpush.msra.mxu0 %v2875
  %2889 = vmatpush.msra.mxu0 %v2874
  %2890 = vmatpush.msra.mxu0 %v2873
  %2891 = vmatpush.msra.mxu0 %v2872
  %2892 = vmatpush.msra.mxu0 %v2871
  %2893 = vmatpush.msra.mxu0 %v2870
  %2894 = vmatmul.f32.gmra.mxu0 %v2797
  %v2895 = vpop.f32.mrf.mxu0
  %v2896 = vadd.f32 0.0, %v2895
  %2897 = vmatmul.f32.gmra.mxu0 %v2800
  %v2898 = vpop.f32.mrf.mxu0
  %v2899 = vadd.f32 0.0, %v2898
  %2900 = vmatmul.f32.gmra.mxu0 %v2803
  %v2901 = vpop.f32.mrf.mxu0
  %v2902 = vadd.f32 0.0, %v2901
  %2903 = vmatmul.f32.gmra.mxu0 %v2806
  %v2904 = vpop.f32.mrf.mxu0
  %v2905 = vadd.f32 0.0, %v2904
  %2906 = vmatmul.f32.gmra.mxu0 %v2809
  %v2907 = vpop.f32.mrf.mxu0
  %v2908 = vadd.f32 0.0, %v2907
  %2909 = vmatmul.f32.gmra.mxu0 %v2812
  %v2910 = vpop.f32.mrf.mxu0
  %v2911 = vadd.f32 0.0, %v2910
  %2912 = vmatmul.f32.gmra.mxu0 %v2815
  %v2913 = vpop.f32.mrf.mxu0
  %v2914 = vadd.f32 0.0, %v2913
  %2915 = vmatmul.f32.gmra.mxu0 %v2818
  %v2916 = vpop.f32.mrf.mxu0
  %v2917 = vadd.f32 0.0, %v2916
  %2918 = vdwg.mxu0
  %v2919 = vadd.f32 %v2861, %v2896
  %v2920 = vadd.f32 %v2862, %v2899
  %v2921 = vadd.f32 %v2863, %v2902
  %v2922 = vadd.f32 %v2864, %v2905
  %v2923 = vadd.f32 %v2865, %v2908
  %v2924 = vadd.f32 %v2866, %v2911
  %v2925 = vadd.f32 %v2867, %v2914
  %v2926 = vadd.f32 %v2868, %v2917
  %s2927 = scalar_lea.vmem %s7, 320
  %v2928 = vld [vmem:[%s2927] sm:$0xff]
  %v2929 = vld [vmem:[%s2927 + $0x8] sm:$0xff]
  %v2930 = vld [vmem:[%s2927 + $0x10] sm:$0xff]
  %v2931 = vld [vmem:[%s2927 + $0x18] sm:$0xff]
  %v2932 = vld [vmem:[%s2927 + $0x20] sm:$0xff]
  %v2933 = vld [vmem:[%s2927 + $0x28] sm:$0xff]
  %v2934 = vld [vmem:[%s2927 + $0x30] sm:$0xff]
  %v2935 = vld [vmem:[%s2927 + $0x38] sm:$0xff]
  %2936 = vmatpush.msra.mxu0 0.0
  %2937 = vmatpush.msra.mxu0 0.0
  %2938 = vmatpush.msra.mxu0 0.0
  %2939 = vmatpush.msra.mxu0 0.0
  %2940 = vmatpush.msra.mxu0 0.0
  %2941 = vmatpush.msra.mxu0 0.0
  %2942 = vmatpush.msra.mxu0 0.0
  %2943 = vmatpush.msra.mxu0 0.0
  %2944 = vmatpush.msra.mxu0 %v2935
  %2945 = vmatpush.msra.mxu0 %v2934
  %2946 = vmatpush.msra.mxu0 %v2933
  %2947 = vmatpush.msra.mxu0 %v2932
  %2948 = vmatpush.msra.mxu0 %v2931
  %2949 = vmatpush.msra.mxu0 %v2930
  %2950 = vmatpush.msra.mxu0 %v2929
  %2951 = vmatpush.msra.mxu0 %v2928
  %2952 = vmatmul.f32.gmra.mxu0 %v2797
  %v2953 = vpop.f32.mrf.mxu0
  %v2954 = vadd.f32 0.0, %v2953
  %2955 = vmatmul.f32.gmra.mxu0 %v2800
  %v2956 = vpop.f32.mrf.mxu0
  %v2957 = vadd.f32 0.0, %v2956
  %2958 = vmatmul.f32.gmra.mxu0 %v2803
  %v2959 = vpop.f32.mrf.mxu0
  %v2960 = vadd.f32 0.0, %v2959
  %2961 = vmatmul.f32.gmra.mxu0 %v2806
  %v2962 = vpop.f32.mrf.mxu0
  %v2963 = vadd.f32 0.0, %v2962
  %2964 = vmatmul.f32.gmra.mxu0 %v2809
  %v2965 = vpop.f32.mrf.mxu0
  %v2966 = vadd.f32 0.0, %v2965
  %2967 = vmatmul.f32.gmra.mxu0 %v2812
  %v2968 = vpop.f32.mrf.mxu0
  %v2969 = vadd.f32 0.0, %v2968
  %2970 = vmatmul.f32.gmra.mxu0 %v2815
  %v2971 = vpop.f32.mrf.mxu0
  %v2972 = vadd.f32 0.0, %v2971
  %2973 = vmatmul.f32.gmra.mxu0 %v2818
  %v2974 = vpop.f32.mrf.mxu0
  %v2975 = vadd.f32 0.0, %v2974
  %2976 = vdwg.mxu0
  %v2977 = vadd.f32 %v2919, %v2954
  %v2978 = vadd.f32 %v2920, %v2957
  %v2979 = vadd.f32 %v2921, %v2960
  %v2980 = vadd.f32 %v2922, %v2963
  %v2981 = vadd.f32 %v2923, %v2966
  %v2982 = vadd.f32 %v2924, %v2969
  %v2983 = vadd.f32 %v2925, %v2972
  %v2984 = vadd.f32 %v2926, %v2975
  %s2985 = scalar_lea.vmem %s6, 128
  %v2986 = vld [vmem:[%s2985] sm:$0xff]
  %v2987 = vld [vmem:[%s2985 + $0x8] sm:$0xff]
  %v2988 = vld [vmem:[%s2985 + $0x10] sm:$0xff]
  %v2989 = vld [vmem:[%s2985 + $0x18] sm:$0xff]
  %v2990 = vld [vmem:[%s2985 + $0x20] sm:$0xff]
  %v2991 = vld [vmem:[%s2985 + $0x28] sm:$0xff]
  %v2992 = vld [vmem:[%s2985 + $0x30] sm:$0xff]
  %v2993 = vld [vmem:[%s2985 + $0x38] sm:$0xff]
  %2994 = vmatpush.msra.mxu0 %v2505
  %2995 = vmatpush.msra.mxu0 %v2504
  %2996 = vmatpush.msra.mxu0 %v2503
  %2997 = vmatpush.msra.mxu0 %v2502
  %2998 = vmatpush.msra.mxu0 %v2501
  %2999 = vmatpush.msra.mxu0 %v2500
  %3000 = vmatpush.msra.mxu0 %v2499
  %3001 = vmatpush.msra.mxu0 %v2498
  %3002 = vmatpush.msra.mxu0 %v2497
  %3003 = vmatpush.msra.mxu0 %v2496
  %3004 = vmatpush.msra.mxu0 %v2495
  %3005 = vmatpush.msra.mxu0 %v2494
  %3006 = vmatpush.msra.mxu0 %v2493
  %3007 = vmatpush.msra.mxu0 %v2492
  %3008 = vmatpush.msra.mxu0 %v2491
  %3009 = vmatpush.msra.mxu0 %v2490
  %3010 = vmatmul.f32.gmra.mxu0 %v2986
  %v3011 = vpop.f32.mrf.mxu0
  %v3012 = vadd.f32 0.0, %v3011
  %3013 = vmatmul.f32.gmra.mxu0 %v2987
  %v3014 = vpop.f32.mrf.mxu0
  %v3015 = vadd.f32 0.0, %v3014
  %3016 = vmatmul.f32.gmra.mxu0 %v2988
  %v3017 = vpop.f32.mrf.mxu0
  %v3018 = vadd.f32 0.0, %v3017
  %3019 = vmatmul.f32.gmra.mxu0 %v2989
  %v3020 = vpop.f32.mrf.mxu0
  %v3021 = vadd.f32 0.0, %v3020
  %3022 = vmatmul.f32.gmra.mxu0 %v2990
  %v3023 = vpop.f32.mrf.mxu0
  %v3024 = vadd.f32 0.0, %v3023
  %3025 = vmatmul.f32.gmra.mxu0 %v2991
  %v3026 = vpop.f32.mrf.mxu0
  %v3027 = vadd.f32 0.0, %v3026
  %3028 = vmatmul.f32.gmra.mxu0 %v2992
  %v3029 = vpop.f32.mrf.mxu0
  %v3030 = vadd.f32 0.0, %v3029
  %3031 = vmatmul.f32.gmra.mxu0 %v2993
  %v3032 = vpop.f32.mrf.mxu0
  %v3033 = vadd.f32 0.0, %v3032
  %3034 = vdwg.mxu0
  %s3035 = scalar_lea.vmem %s7, 384
  %v3036 = vld [vmem:[%s3035] sm:$0xff]
  %v3037 = vld [vmem:[%s3035 + $0x8] sm:$0xff]
  %v3038 = vld [vmem:[%s3035 + $0x10] sm:$0xff]
  %v3039 = vld [vmem:[%s3035 + $0x18] sm:$0xff]
  %v3040 = vld [vmem:[%s3035 + $0x20] sm:$0xff]
  %v3041 = vld [vmem:[%s3035 + $0x28] sm:$0xff]
  %v3042 = vld [vmem:[%s3035 + $0x30] sm:$0xff]
  %v3043 = vld [vmem:[%s3035 + $0x38] sm:$0xff]
  %v3045 = vsel %vm2572, %v3012, 0
  %v3048 = vsel %vm2572, %v3015, 0
  %v3051 = vsel %vm2572, %v3018, 0
  %v3054 = vsel %vm2572, %v3021, 0
  %v3057 = vsel %vm2572, %v3024, 0
  %v3060 = vsel %vm2572, %v3027, 0
  %v3063 = vsel %vm2572, %v3030, 0
  %v3066 = vsel %vm2572, %v3033, 0
  %3068 = vmatpush.msra.mxu0 0.0
  %3069 = vmatpush.msra.mxu0 0.0
  %3070 = vmatpush.msra.mxu0 0.0
  %3071 = vmatpush.msra.mxu0 0.0
  %3072 = vmatpush.msra.mxu0 0.0
  %3073 = vmatpush.msra.mxu0 0.0
  %3074 = vmatpush.msra.mxu0 0.0
  %3075 = vmatpush.msra.mxu0 0.0
  %3076 = vmatpush.msra.mxu0 %v3043
  %3077 = vmatpush.msra.mxu0 %v3042
  %3078 = vmatpush.msra.mxu0 %v3041
  %3079 = vmatpush.msra.mxu0 %v3040
  %3080 = vmatpush.msra.mxu0 %v3039
  %3081 = vmatpush.msra.mxu0 %v3038
  %3082 = vmatpush.msra.mxu0 %v3037
  %3083 = vmatpush.msra.mxu0 %v3036
  %3084 = vmatmul.f32.gmra.mxu0 %v3045
  %v3085 = vpop.f32.mrf.mxu0
  %v3086 = vadd.f32 0.0, %v3085
  %3087 = vmatmul.f32.gmra.mxu0 %v3048
  %v3088 = vpop.f32.mrf.mxu0
  %v3089 = vadd.f32 0.0, %v3088
  %3090 = vmatmul.f32.gmra.mxu0 %v3051
  %v3091 = vpop.f32.mrf.mxu0
  %v3092 = vadd.f32 0.0, %v3091
  %3093 = vmatmul.f32.gmra.mxu0 %v3054
  %v3094 = vpop.f32.mrf.mxu0
  %v3095 = vadd.f32 0.0, %v3094
  %3096 = vmatmul.f32.gmra.mxu0 %v3057
  %v3097 = vpop.f32.mrf.mxu0
  %v3098 = vadd.f32 0.0, %v3097
  %3099 = vmatmul.f32.gmra.mxu0 %v3060
  %v3100 = vpop.f32.mrf.mxu0
  %v3101 = vadd.f32 0.0, %v3100
  %3102 = vmatmul.f32.gmra.mxu0 %v3063
  %v3103 = vpop.f32.mrf.mxu0
  %v3104 = vadd.f32 0.0, %v3103
  %3105 = vmatmul.f32.gmra.mxu0 %v3066
  %v3106 = vpop.f32.mrf.mxu0
  %v3107 = vadd.f32 0.0, %v3106
  %3108 = vdwg.mxu0
  %v3109 = vadd.f32 %v2977, %v3086
  %v3110 = vadd.f32 %v2978, %v3089
  %v3111 = vadd.f32 %v2979, %v3092
  %v3112 = vadd.f32 %v2980, %v3095
  %v3113 = vadd.f32 %v2981, %v3098
  %v3114 = vadd.f32 %v2982, %v3101
  %v3115 = vadd.f32 %v2983, %v3104
  %v3116 = vadd.f32 %v2984, %v3107
  %s3117 = scalar_lea.vmem %s7, 448
  %v3118 = vld [vmem:[%s3117] sm:$0xff]
  %v3119 = vld [vmem:[%s3117 + $0x8] sm:$0xff]
  %v3120 = vld [vmem:[%s3117 + $0x10] sm:$0xff]
  %v3121 = vld [vmem:[%s3117 + $0x18] sm:$0xff]
  %v3122 = vld [vmem:[%s3117 + $0x20] sm:$0xff]
  %v3123 = vld [vmem:[%s3117 + $0x28] sm:$0xff]
  %v3124 = vld [vmem:[%s3117 + $0x30] sm:$0xff]
  %v3125 = vld [vmem:[%s3117 + $0x38] sm:$0xff]
  %3126 = vmatpush.msra.mxu0 0.0
  %3127 = vmatpush.msra.mxu0 0.0
  %3128 = vmatpush.msra.mxu0 0.0
  %3129 = vmatpush.msra.mxu0 0.0
  %3130 = vmatpush.msra.mxu0 0.0
  %3131 = vmatpush.msra.mxu0 0.0
  %3132 = vmatpush.msra.mxu0 0.0
  %3133 = vmatpush.msra.mxu0 0.0
  %3134 = vmatpush.msra.mxu0 %v3125
  %3135 = vmatpush.msra.mxu0 %v3124
  %3136 = vmatpush.msra.mxu0 %v3123
  %3137 = vmatpush.msra.mxu0 %v3122
  %3138 = vmatpush.msra.mxu0 %v3121
  %3139 = vmatpush.msra.mxu0 %v3120
  %3140 = vmatpush.msra.mxu0 %v3119
  %3141 = vmatpush.msra.mxu0 %v3118
  %3142 = vmatmul.f32.gmra.mxu0 %v3045
  %v3143 = vpop.f32.mrf.mxu0
  %v3144 = vadd.f32 0.0, %v3143
  %3145 = vmatmul.f32.gmra.mxu0 %v3048
  %v3146 = vpop.f32.mrf.mxu0
  %v3147 = vadd.f32 0.0, %v3146
  %3148 = vmatmul.f32.gmra.mxu0 %v3051
  %v3149 = vpop.f32.mrf.mxu0
  %v3150 = vadd.f32 0.0, %v3149
  %3151 = vmatmul.f32.gmra.mxu0 %v3054
  %v3152 = vpop.f32.mrf.mxu0
  %v3153 = vadd.f32 0.0, %v3152
  %3154 = vmatmul.f32.gmra.mxu0 %v3057
  %v3155 = vpop.f32.mrf.mxu0
  %v3156 = vadd.f32 0.0, %v3155
  %3157 = vmatmul.f32.gmra.mxu0 %v3060
  %v3158 = vpop.f32.mrf.mxu0
  %v3159 = vadd.f32 0.0, %v3158
  %3160 = vmatmul.f32.gmra.mxu0 %v3063
  %v3161 = vpop.f32.mrf.mxu0
  %v3162 = vadd.f32 0.0, %v3161
  %3163 = vmatmul.f32.gmra.mxu0 %v3066
  %v3164 = vpop.f32.mrf.mxu0
  %v3165 = vadd.f32 0.0, %v3164
  %3166 = vdwg.mxu0
  %v3167 = vadd.f32 %v3109, %v3144
  %v3168 = vadd.f32 %v3110, %v3147
  %v3169 = vadd.f32 %v3111, %v3150
  %v3170 = vadd.f32 %v3112, %v3153
  %v3171 = vadd.f32 %v3113, %v3156
  %v3172 = vadd.f32 %v3114, %v3159
  %v3173 = vadd.f32 %v3115, %v3162
  %v3174 = vadd.f32 %v3116, %v3165
  %s3175 = scalar_lea.vmem %s7, 512
  %v3176 = vld [vmem:[%s3175] sm:$0xff]
  %v3177 = vld [vmem:[%s3175 + $0x8] sm:$0xff]
  %v3178 = vld [vmem:[%s3175 + $0x10] sm:$0xff]
  %v3179 = vld [vmem:[%s3175 + $0x18] sm:$0xff]
  %v3180 = vld [vmem:[%s3175 + $0x20] sm:$0xff]
  %v3181 = vld [vmem:[%s3175 + $0x28] sm:$0xff]
  %v3182 = vld [vmem:[%s3175 + $0x30] sm:$0xff]
  %v3183 = vld [vmem:[%s3175 + $0x38] sm:$0xff]
  %3184 = vmatpush.msra.mxu0 0.0
  %3185 = vmatpush.msra.mxu0 0.0
  %3186 = vmatpush.msra.mxu0 0.0
  %3187 = vmatpush.msra.mxu0 0.0
  %3188 = vmatpush.msra.mxu0 0.0
  %3189 = vmatpush.msra.mxu0 0.0
  %3190 = vmatpush.msra.mxu0 0.0
  %3191 = vmatpush.msra.mxu0 0.0
  %3192 = vmatpush.msra.mxu0 %v3183
  %3193 = vmatpush.msra.mxu0 %v3182
  %3194 = vmatpush.msra.mxu0 %v3181
  %3195 = vmatpush.msra.mxu0 %v3180
  %3196 = vmatpush.msra.mxu0 %v3179
  %3197 = vmatpush.msra.mxu0 %v3178
  %3198 = vmatpush.msra.mxu0 %v3177
  %3199 = vmatpush.msra.mxu0 %v3176
  %3200 = vmatmul.f32.gmra.mxu0 %v3045
  %v3201 = vpop.f32.mrf.mxu0
  %v3202 = vadd.f32 0.0, %v3201
  %3203 = vmatmul.f32.gmra.mxu0 %v3048
  %v3204 = vpop.f32.mrf.mxu0
  %v3205 = vadd.f32 0.0, %v3204
  %3206 = vmatmul.f32.gmra.mxu0 %v3051
  %v3207 = vpop.f32.mrf.mxu0
  %v3208 = vadd.f32 0.0, %v3207
  %3209 = vmatmul.f32.gmra.mxu0 %v3054
  %v3210 = vpop.f32.mrf.mxu0
  %v3211 = vadd.f32 0.0, %v3210
  %3212 = vmatmul.f32.gmra.mxu0 %v3057
  %v3213 = vpop.f32.mrf.mxu0
  %v3214 = vadd.f32 0.0, %v3213
  %3215 = vmatmul.f32.gmra.mxu0 %v3060
  %v3216 = vpop.f32.mrf.mxu0
  %v3217 = vadd.f32 0.0, %v3216
  %3218 = vmatmul.f32.gmra.mxu0 %v3063
  %v3219 = vpop.f32.mrf.mxu0
  %v3220 = vadd.f32 0.0, %v3219
  %3221 = vmatmul.f32.gmra.mxu0 %v3066
  %v3222 = vpop.f32.mrf.mxu0
  %v3223 = vadd.f32 0.0, %v3222
  %3224 = vdwg.mxu0
  %v3225 = vadd.f32 %v3167, %v3202
  %v3226 = vadd.f32 %v3168, %v3205
  %v3227 = vadd.f32 %v3169, %v3208
  %v3228 = vadd.f32 %v3170, %v3211
  %v3229 = vadd.f32 %v3171, %v3214
  %v3230 = vadd.f32 %v3172, %v3217
  %v3231 = vadd.f32 %v3173, %v3220
  %v3232 = vadd.f32 %v3174, %v3223
  %v3233 = vld [vmem:[%s8] sm:$0x1]
  %v3235 = vperm.slane %v3233, 0
  %v3237 = vadd.f32 %v3225, %v3235
  %v3238 = vadd.f32 %v3226, %v3235
  %v3239 = vadd.f32 %v3227, %v3235
  %v3240 = vadd.f32 %v3228, %v3235
  %v3241 = vadd.f32 %v3229, %v3235
  %v3242 = vadd.f32 %v3230, %v3235
  %v3243 = vadd.f32 %v3231, %v3235
  %v3244 = vadd.f32 %v3232, %v3235
  %v3245 = vmax.f32 %v3237, 0.0
  %v3246 = vmax.f32 %v3238, 0.0
  %v3247 = vmax.f32 %v3239, 0.0
  %v3248 = vmax.f32 %v3240, 0.0
  %v3249 = vmax.f32 %v3241, 0.0
  %v3250 = vmax.f32 %v3242, 0.0
  %v3251 = vmax.f32 %v3243, 0.0
  %v3252 = vmax.f32 %v3244, 0.0
  %v3253 = vld [vmem:[%s9] sm:$0xff]
  %v3254 = vld [vmem:[%s9 + $0x8] sm:$0xff]
  %v3255 = vld [vmem:[%s9 + $0x10] sm:$0xff]
  %v3256 = vld [vmem:[%s9 + $0x18] sm:$0xff]
  %v3258 = vsel %vm2572, %v3253, 0
  %v3261 = vsel %vm2572, %v3254, 0
  %v3264 = vsel %vm2572, %v3255, 0
  %v3267 = vsel %vm2572, %v3256, 0
  %3269 = vmatpush.msra.mxu0 0.0
  %3270 = vmatpush.msra.mxu0 0.0
  %3271 = vmatpush.msra.mxu0 0.0
  %3272 = vmatpush.msra.mxu0 0.0
  %3273 = vmatpush.msra.mxu0 0.0
  %3274 = vmatpush.msra.mxu0 0.0
  %3275 = vmatpush.msra.mxu0 0.0
  %3276 = vmatpush.msra.mxu0 0.0
  %3277 = vmatpush.msra.mxu0 %v3252
  %3278 = vmatpush.msra.mxu0 %v3251
  %3279 = vmatpush.msra.mxu0 %v3250
  %3280 = vmatpush.msra.mxu0 %v3249
  %3281 = vmatpush.msra.mxu0 %v3248
  %3282 = vmatpush.msra.mxu0 %v3247
  %3283 = vmatpush.msra.mxu0 %v3246
  %3284 = vmatpush.msra.mxu0 %v3245
  %3285 = vmatmul.f32.gmra.mxu0 %v3258
  %v3286 = vpop.f32.mrf.mxu0
  %v3287 = vadd.f32 0.0, %v3286
  %3288 = vmatmul.f32.gmra.mxu0 %v3261
  %v3289 = vpop.f32.mrf.mxu0
  %v3290 = vadd.f32 0.0, %v3289
  %3291 = vmatmul.f32.gmra.mxu0 %v3264
  %v3292 = vpop.f32.mrf.mxu0
  %v3293 = vadd.f32 0.0, %v3292
  %3294 = vmatmul.f32.gmra.mxu0 %v3267
  %v3295 = vpop.f32.mrf.mxu0
  %v3296 = vadd.f32 0.0, %v3295
  %3297 = vdwg.mxu0
  %v3298 = vld [vmem:[%s10] sm:$0xff]
  %v3299 = vld [vmem:[%s10 + $0x8] sm:$0xff]
  %v3300 = vld [vmem:[%s10 + $0x10] sm:$0xff]
  %v3301 = vld [vmem:[%s10 + $0x18] sm:$0xff]
  %v3302 = vld [vmem:[%s10 + $0x20] sm:$0xff]
  %v3303 = vld [vmem:[%s10 + $0x28] sm:$0xff]
  %v3304 = vld [vmem:[%s10 + $0x30] sm:$0xff]
  %v3305 = vld [vmem:[%s10 + $0x38] sm:$0xff]
  %s3306 = scalar_lea.vmem %s10, 64
  %v3307 = vld [vmem:[%s3306] sm:$0xff]
  %v3308 = vld [vmem:[%s3306 + $0x8] sm:$0xff]
  %v3309 = vld [vmem:[%s3306 + $0x10] sm:$0xff]
  %v3310 = vld [vmem:[%s3306 + $0x18] sm:$0xff]
  %v3311 = vld [vmem:[%s3306 + $0x20] sm:$0xff]
  %v3312 = vld [vmem:[%s3306 + $0x28] sm:$0xff]
  %v3313 = vld [vmem:[%s3306 + $0x30] sm:$0xff]
  %v3314 = vld [vmem:[%s3306 + $0x38] sm:$0xff]
  %v3316 = vsel %vm2572, %v3287, 0
  %v3319 = vsel %vm2572, %v3290, 0
  %v3322 = vsel %vm2572, %v3293, 0
  %v3325 = vsel %vm2572, %v3296, 0
  %3327 = vmatpush.msra.mxu0 0.0
  %3328 = vmatpush.msra.mxu0 0.0
  %3329 = vmatpush.msra.mxu0 0.0
  %3330 = vmatpush.msra.mxu0 0.0
  %3331 = vmatpush.msra.mxu0 0.0
  %3332 = vmatpush.msra.mxu0 0.0
  %3333 = vmatpush.msra.mxu0 0.0
  %3334 = vmatpush.msra.mxu0 0.0
  %3335 = vmatpush.msra.mxu0 %v3314
  %3336 = vmatpush.msra.mxu0 %v3313
  %3337 = vmatpush.msra.mxu0 %v3312
  %3338 = vmatpush.msra.mxu0 %v3311
  %3339 = vmatpush.msra.mxu0 %v3310
  %3340 = vmatpush.msra.mxu0 %v3309
  %3341 = vmatpush.msra.mxu0 %v3308
  %3342 = vmatpush.msra.mxu0 %v3307
  %3343 = vmatmul.f32.gmra.mxu0 %v3316
  %v3344 = vpop.f32.mrf.mxu0
  %v3345 = vadd.f32 0.0, %v3344
  %3346 = vmatmul.f32.gmra.mxu0 %v3319
  %v3347 = vpop.f32.mrf.mxu0
  %v3348 = vadd.f32 0.0, %v3347
  %3349 = vmatmul.f32.gmra.mxu0 %v3322
  %v3350 = vpop.f32.mrf.mxu0
  %v3351 = vadd.f32 0.0, %v3350
  %3352 = vmatmul.f32.gmra.mxu0 %v3325
  %v3353 = vpop.f32.mrf.mxu0
  %v3354 = vadd.f32 0.0, %v3353
  %3355 = vdwg.mxu0
  %3356 = vmatpush.msra.mxu0 0.0
  %3357 = vmatpush.msra.mxu0 0.0
  %3358 = vmatpush.msra.mxu0 0.0
  %3359 = vmatpush.msra.mxu0 0.0
  %3360 = vmatpush.msra.mxu0 0.0
  %3361 = vmatpush.msra.mxu0 0.0
  %3362 = vmatpush.msra.mxu0 0.0
  %3363 = vmatpush.msra.mxu0 0.0
  %3364 = vmatpush.msra.mxu0 %v3305
  %3365 = vmatpush.msra.mxu0 %v3304
  %3366 = vmatpush.msra.mxu0 %v3303
  %3367 = vmatpush.msra.mxu0 %v3302
  %3368 = vmatpush.msra.mxu0 %v3301
  %3369 = vmatpush.msra.mxu0 %v3300
  %3370 = vmatpush.msra.mxu0 %v3299
  %3371 = vmatpush.msra.mxu0 %v3298
  %3372 = vmatmul.f32.gmra.mxu0 %v3316
  %v3373 = vpop.f32.mrf.mxu0
  %v3374 = vadd.f32 %v3345, %v3373
  %3375 = vmatmul.f32.gmra.mxu0 %v3319
  %v3376 = vpop.f32.mrf.mxu0
  %v3377 = vadd.f32 %v3348, %v3376
  %3378 = vmatmul.f32.gmra.mxu0 %v3322
  %v3379 = vpop.f32.mrf.mxu0
  %v3380 = vadd.f32 %v3351, %v3379
  %3381 = vmatmul.f32.gmra.mxu0 %v3325
  %v3382 = vpop.f32.mrf.mxu0
  %v3383 = vadd.f32 %v3354, %v3382
  %3384 = vdwg.mxu0
  %s3385 = scalar_lea.vmem %s10, 128
  %v3386 = vld [vmem:[%s3385] sm:$0xff]
  %v3387 = vld [vmem:[%s3385 + $0x8] sm:$0xff]
  %v3388 = vld [vmem:[%s3385 + $0x10] sm:$0xff]
  %v3389 = vld [vmem:[%s3385 + $0x18] sm:$0xff]
  %v3390 = vld [vmem:[%s3385 + $0x20] sm:$0xff]
  %v3391 = vld [vmem:[%s3385 + $0x28] sm:$0xff]
  %v3392 = vld [vmem:[%s3385 + $0x30] sm:$0xff]
  %v3393 = vld [vmem:[%s3385 + $0x38] sm:$0xff]
  %3394 = vmatpush.msra.mxu0 0.0
  %3395 = vmatpush.msra.mxu0 0.0
  %3396 = vmatpush.msra.mxu0 0.0
  %3397 = vmatpush.msra.mxu0 0.0
  %3398 = vmatpush.msra.mxu0 0.0
  %3399 = vmatpush.msra.mxu0 0.0
  %3400 = vmatpush.msra.mxu0 0.0
  %3401 = vmatpush.msra.mxu0 0.0
  %3402 = vmatpush.msra.mxu0 %v3393
  %3403 = vmatpush.msra.mxu0 %v3392
  %3404 = vmatpush.msra.mxu0 %v3391
  %3405 = vmatpush.msra.mxu0 %v3390
  %3406 = vmatpush.msra.mxu0 %v3389
  %3407 = vmatpush.msra.mxu0 %v3388
  %3408 = vmatpush.msra.mxu0 %v3387
  %3409 = vmatpush.msra.mxu0 %v3386
  %3410 = vmatmul.f32.gmra.mxu0 %v3316
  %v3411 = vpop.f32.mrf.mxu0
  %v3412 = vadd.f32 0.0, %v3411
  %3413 = vmatmul.f32.gmra.mxu0 %v3319
  %v3414 = vpop.f32.mrf.mxu0
  %v3415 = vadd.f32 0.0, %v3414
  %3416 = vmatmul.f32.gmra.mxu0 %v3322
  %v3417 = vpop.f32.mrf.mxu0
  %v3418 = vadd.f32 0.0, %v3417
  %3419 = vmatmul.f32.gmra.mxu0 %v3325
  %v3420 = vpop.f32.mrf.mxu0
  %v3421 = vadd.f32 0.0, %v3420
  %3422 = vdwg.mxu0
  %v3423 = vadd.f32 %v3374, %v3412
  %v3424 = vadd.f32 %v3377, %v3415
  %v3425 = vadd.f32 %v3380, %v3418
  %v3426 = vadd.f32 %v3383, %v3421
  %s3427 = scalar_lea.vmem %s9, 32
  %v3428 = vld [vmem:[%s3427] sm:$0xff]
  %v3429 = vld [vmem:[%s3427 + $0x8] sm:$0xff]
  %v3430 = vld [vmem:[%s3427 + $0x10] sm:$0xff]
  %v3431 = vld [vmem:[%s3427 + $0x18] sm:$0xff]
  %v3433 = vsel %vm2572, %v3428, 0
  %v3436 = vsel %vm2572, %v3429, 0
  %v3439 = vsel %vm2572, %v3430, 0
  %v3442 = vsel %vm2572, %v3431, 0
  %3444 = vmatpush.msra.mxu0 0.0
  %3445 = vmatpush.msra.mxu0 0.0
  %3446 = vmatpush.msra.mxu0 0.0
  %3447 = vmatpush.msra.mxu0 0.0
  %3448 = vmatpush.msra.mxu0 0.0
  %3449 = vmatpush.msra.mxu0 0.0
  %3450 = vmatpush.msra.mxu0 0.0
  %3451 = vmatpush.msra.mxu0 0.0
  %3452 = vmatpush.msra.mxu0 %v3252
  %3453 = vmatpush.msra.mxu0 %v3251
  %3454 = vmatpush.msra.mxu0 %v3250
  %3455 = vmatpush.msra.mxu0 %v3249
  %3456 = vmatpush.msra.mxu0 %v3248
  %3457 = vmatpush.msra.mxu0 %v3247
  %3458 = vmatpush.msra.mxu0 %v3246
  %3459 = vmatpush.msra.mxu0 %v3245
  %3460 = vmatmul.f32.gmra.mxu0 %v3433
  %v3461 = vpop.f32.mrf.mxu0
  %v3462 = vadd.f32 0.0, %v3461
  %3463 = vmatmul.f32.gmra.mxu0 %v3436
  %v3464 = vpop.f32.mrf.mxu0
  %v3465 = vadd.f32 0.0, %v3464
  %3466 = vmatmul.f32.gmra.mxu0 %v3439
  %v3467 = vpop.f32.mrf.mxu0
  %v3468 = vadd.f32 0.0, %v3467
  %3469 = vmatmul.f32.gmra.mxu0 %v3442
  %v3470 = vpop.f32.mrf.mxu0
  %v3471 = vadd.f32 0.0, %v3470
  %3472 = vdwg.mxu0
  %s3473 = scalar_lea.vmem %s10, 192
  %v3474 = vld [vmem:[%s3473] sm:$0xff]
  %v3475 = vld [vmem:[%s3473 + $0x8] sm:$0xff]
  %v3476 = vld [vmem:[%s3473 + $0x10] sm:$0xff]
  %v3477 = vld [vmem:[%s3473 + $0x18] sm:$0xff]
  %v3478 = vld [vmem:[%s3473 + $0x20] sm:$0xff]
  %v3479 = vld [vmem:[%s3473 + $0x28] sm:$0xff]
  %v3480 = vld [vmem:[%s3473 + $0x30] sm:$0xff]
  %v3481 = vld [vmem:[%s3473 + $0x38] sm:$0xff]
  %v3483 = vsel %vm2572, %v3462, 0
  %v3486 = vsel %vm2572, %v3465, 0
  %v3489 = vsel %vm2572, %v3468, 0
  %v3492 = vsel %vm2572, %v3471, 0
  %3494 = vmatpush.msra.mxu0 0.0
  %3495 = vmatpush.msra.mxu0 0.0
  %3496 = vmatpush.msra.mxu0 0.0
  %3497 = vmatpush.msra.mxu0 0.0
  %3498 = vmatpush.msra.mxu0 0.0
  %3499 = vmatpush.msra.mxu0 0.0
  %3500 = vmatpush.msra.mxu0 0.0
  %3501 = vmatpush.msra.mxu0 0.0
  %3502 = vmatpush.msra.mxu0 %v3481
  %3503 = vmatpush.msra.mxu0 %v3480
  %3504 = vmatpush.msra.mxu0 %v3479
  %3505 = vmatpush.msra.mxu0 %v3478
  %3506 = vmatpush.msra.mxu0 %v3477
  %3507 = vmatpush.msra.mxu0 %v3476
  %3508 = vmatpush.msra.mxu0 %v3475
  %3509 = vmatpush.msra.mxu0 %v3474
  %3510 = vmatmul.f32.gmra.mxu0 %v3483
  %v3511 = vpop.f32.mrf.mxu0
  %v3512 = vadd.f32 0.0, %v3511
  %3513 = vmatmul.f32.gmra.mxu0 %v3486
  %v3514 = vpop.f32.mrf.mxu0
  %v3515 = vadd.f32 0.0, %v3514
  %3516 = vmatmul.f32.gmra.mxu0 %v3489
  %v3517 = vpop.f32.mrf.mxu0
  %v3518 = vadd.f32 0.0, %v3517
  %3519 = vmatmul.f32.gmra.mxu0 %v3492
  %v3520 = vpop.f32.mrf.mxu0
  %v3521 = vadd.f32 0.0, %v3520
  %3522 = vdwg.mxu0
  %v3523 = vadd.f32 %v3423, %v3512
  %v3524 = vadd.f32 %v3424, %v3515
  %v3525 = vadd.f32 %v3425, %v3518
  %v3526 = vadd.f32 %v3426, %v3521
  %s3527 = scalar_lea.vmem %s10, 256
  %v3528 = vld [vmem:[%s3527] sm:$0xff]
  %v3529 = vld [vmem:[%s3527 + $0x8] sm:$0xff]
  %v3530 = vld [vmem:[%s3527 + $0x10] sm:$0xff]
  %v3531 = vld [vmem:[%s3527 + $0x18] sm:$0xff]
  %v3532 = vld [vmem:[%s3527 + $0x20] sm:$0xff]
  %v3533 = vld [vmem:[%s3527 + $0x28] sm:$0xff]
  %v3534 = vld [vmem:[%s3527 + $0x30] sm:$0xff]
  %v3535 = vld [vmem:[%s3527 + $0x38] sm:$0xff]
  %3536 = vmatpush.msra.mxu0 0.0
  %3537 = vmatpush.msra.mxu0 0.0
  %3538 = vmatpush.msra.mxu0 0.0
  %3539 = vmatpush.msra.mxu0 0.0
  %3540 = vmatpush.msra.mxu0 0.0
  %3541 = vmatpush.msra.mxu0 0.0
  %3542 = vmatpush.msra.mxu0 0.0
  %3543 = vmatpush.msra.mxu0 0.0
  %3544 = vmatpush.msra.mxu0 %v3535
  %3545 = vmatpush.msra.mxu0 %v3534
  %3546 = vmatpush.msra.mxu0 %v3533
  %3547 = vmatpush.msra.mxu0 %v3532
  %3548 = vmatpush.msra.mxu0 %v3531
  %3549 = vmatpush.msra.mxu0 %v3530
  %3550 = vmatpush.msra.mxu0 %v3529
  %3551 = vmatpush.msra.mxu0 %v3528
  %3552 = vmatmul.f32.gmra.mxu0 %v3483
  %v3553 = vpop.f32.mrf.mxu0
  %v3554 = vadd.f32 0.0, %v3553
  %3555 = vmatmul.f32.gmra.mxu0 %v3486
  %v3556 = vpop.f32.mrf.mxu0
  %v3557 = vadd.f32 0.0, %v3556
  %3558 = vmatmul.f32.gmra.mxu0 %v3489
  %v3559 = vpop.f32.mrf.mxu0
  %v3560 = vadd.f32 0.0, %v3559
  %3561 = vmatmul.f32.gmra.mxu0 %v3492
  %v3562 = vpop.f32.mrf.mxu0
  %v3563 = vadd.f32 0.0, %v3562
  %3564 = vdwg.mxu0
  %v3565 = vadd.f32 %v3523, %v3554
  %v3566 = vadd.f32 %v3524, %v3557
  %v3567 = vadd.f32 %v3525, %v3560
  %v3568 = vadd.f32 %v3526, %v3563
  %s3569 = scalar_lea.vmem %s10, 320
  %v3570 = vld [vmem:[%s3569] sm:$0xff]
  %v3571 = vld [vmem:[%s3569 + $0x8] sm:$0xff]
  %v3572 = vld [vmem:[%s3569 + $0x10] sm:$0xff]
  %v3573 = vld [vmem:[%s3569 + $0x18] sm:$0xff]
  %v3574 = vld [vmem:[%s3569 + $0x20] sm:$0xff]
  %v3575 = vld [vmem:[%s3569 + $0x28] sm:$0xff]
  %v3576 = vld [vmem:[%s3569 + $0x30] sm:$0xff]
  %v3577 = vld [vmem:[%s3569 + $0x38] sm:$0xff]
  %3578 = vmatpush.msra.mxu0 0.0
  %3579 = vmatpush.msra.mxu0 0.0
  %3580 = vmatpush.msra.mxu0 0.0
  %3581 = vmatpush.msra.mxu0 0.0
  %3582 = vmatpush.msra.mxu0 0.0
  %3583 = vmatpush.msra.mxu0 0.0
  %3584 = vmatpush.msra.mxu0 0.0
  %3585 = vmatpush.msra.mxu0 0.0
  %3586 = vmatpush.msra.mxu0 %v3577
  %3587 = vmatpush.msra.mxu0 %v3576
  %3588 = vmatpush.msra.mxu0 %v3575
  %3589 = vmatpush.msra.mxu0 %v3574
  %3590 = vmatpush.msra.mxu0 %v3573
  %3591 = vmatpush.msra.mxu0 %v3572
  %3592 = vmatpush.msra.mxu0 %v3571
  %3593 = vmatpush.msra.mxu0 %v3570
  %3594 = vmatmul.f32.gmra.mxu0 %v3483
  %v3595 = vpop.f32.mrf.mxu0
  %v3596 = vadd.f32 0.0, %v3595
  %3597 = vmatmul.f32.gmra.mxu0 %v3486
  %v3598 = vpop.f32.mrf.mxu0
  %v3599 = vadd.f32 0.0, %v3598
  %3600 = vmatmul.f32.gmra.mxu0 %v3489
  %v3601 = vpop.f32.mrf.mxu0
  %v3602 = vadd.f32 0.0, %v3601
  %3603 = vmatmul.f32.gmra.mxu0 %v3492
  %v3604 = vpop.f32.mrf.mxu0
  %v3605 = vadd.f32 0.0, %v3604
  %3606 = vdwg.mxu0
  %v3607 = vadd.f32 %v3565, %v3596
  %v3608 = vadd.f32 %v3566, %v3599
  %v3609 = vadd.f32 %v3567, %v3602
  %v3610 = vadd.f32 %v3568, %v3605
  %s3611 = scalar_lea.vmem %s9, 64
  %v3612 = vld [vmem:[%s3611] sm:$0xff]
  %v3613 = vld [vmem:[%s3611 + $0x8] sm:$0xff]
  %v3614 = vld [vmem:[%s3611 + $0x10] sm:$0xff]
  %v3615 = vld [vmem:[%s3611 + $0x18] sm:$0xff]
  %v3617 = vsel %vm2572, %v3612, 0
  %v3620 = vsel %vm2572, %v3613, 0
  %v3623 = vsel %vm2572, %v3614, 0
  %v3626 = vsel %vm2572, %v3615, 0
  %3628 = vmatpush.msra.mxu0 0.0
  %3629 = vmatpush.msra.mxu0 0.0
  %3630 = vmatpush.msra.mxu0 0.0
  %3631 = vmatpush.msra.mxu0 0.0
  %3632 = vmatpush.msra.mxu0 0.0
  %3633 = vmatpush.msra.mxu0 0.0
  %3634 = vmatpush.msra.mxu0 0.0
  %3635 = vmatpush.msra.mxu0 0.0
  %3636 = vmatpush.msra.mxu0 %v3252
  %3637 = vmatpush.msra.mxu0 %v3251
  %3638 = vmatpush.msra.mxu0 %v3250
  %3639 = vmatpush.msra.mxu0 %v3249
  %3640 = vmatpush.msra.mxu0 %v3248
  %3641 = vmatpush.msra.mxu0 %v3247
  %3642 = vmatpush.msra.mxu0 %v3246
  %3643 = vmatpush.msra.mxu0 %v3245
  %3644 = vmatmul.f32.gmra.mxu0 %v3617
  %v3645 = vpop.f32.mrf.mxu0
  %v3646 = vadd.f32 0.0, %v3645
  %3647 = vmatmul.f32.gmra.mxu0 %v3620
  %v3648 = vpop.f32.mrf.mxu0
  %v3649 = vadd.f32 0.0, %v3648
  %3650 = vmatmul.f32.gmra.mxu0 %v3623
  %v3651 = vpop.f32.mrf.mxu0
  %v3652 = vadd.f32 0.0, %v3651
  %3653 = vmatmul.f32.gmra.mxu0 %v3626
  %v3654 = vpop.f32.mrf.mxu0
  %v3655 = vadd.f32 0.0, %v3654
  %3656 = vdwg.mxu0
  %s3657 = scalar_lea.vmem %s10, 384
  %v3658 = vld [vmem:[%s3657] sm:$0xff]
  %v3659 = vld [vmem:[%s3657 + $0x8] sm:$0xff]
  %v3660 = vld [vmem:[%s3657 + $0x10] sm:$0xff]
  %v3661 = vld [vmem:[%s3657 + $0x18] sm:$0xff]
  %v3662 = vld [vmem:[%s3657 + $0x20] sm:$0xff]
  %v3663 = vld [vmem:[%s3657 + $0x28] sm:$0xff]
  %v3664 = vld [vmem:[%s3657 + $0x30] sm:$0xff]
  %v3665 = vld [vmem:[%s3657 + $0x38] sm:$0xff]
  %v3667 = vsel %vm2572, %v3646, 0
  %v3670 = vsel %vm2572, %v3649, 0
  %v3673 = vsel %vm2572, %v3652, 0
  %v3676 = vsel %vm2572, %v3655, 0
  %3678 = vmatpush.msra.mxu0 0.0
  %3679 = vmatpush.msra.mxu0 0.0
  %3680 = vmatpush.msra.mxu0 0.0
  %3681 = vmatpush.msra.mxu0 0.0
  %3682 = vmatpush.msra.mxu0 0.0
  %3683 = vmatpush.msra.mxu0 0.0
  %3684 = vmatpush.msra.mxu0 0.0
  %3685 = vmatpush.msra.mxu0 0.0
  %3686 = vmatpush.msra.mxu0 %v3665
  %3687 = vmatpush.msra.mxu0 %v3664
  %3688 = vmatpush.msra.mxu0 %v3663
  %3689 = vmatpush.msra.mxu0 %v3662
  %3690 = vmatpush.msra.mxu0 %v3661
  %3691 = vmatpush.msra.mxu0 %v3660
  %3692 = vmatpush.msra.mxu0 %v3659
  %3693 = vmatpush.msra.mxu0 %v3658
  %3694 = vmatmul.f32.gmra.mxu0 %v3667
  %v3695 = vpop.f32.mrf.mxu0
  %v3696 = vadd.f32 0.0, %v3695
  %3697 = vmatmul.f32.gmra.mxu0 %v3670
  %v3698 = vpop.f32.mrf.mxu0
  %v3699 = vadd.f32 0.0, %v3698
  %3700 = vmatmul.f32.gmra.mxu0 %v3673
  %v3701 = vpop.f32.mrf.mxu0
  %v3702 = vadd.f32 0.0, %v3701
  %3703 = vmatmul.f32.gmra.mxu0 %v3676
  %v3704 = vpop.f32.mrf.mxu0
  %v3705 = vadd.f32 0.0, %v3704
  %3706 = vdwg.mxu0
  %v3707 = vadd.f32 %v3607, %v3696
  %v3708 = vadd.f32 %v3608, %v3699
  %v3709 = vadd.f32 %v3609, %v3702
  %v3710 = vadd.f32 %v3610, %v3705
  %s3711 = scalar_lea.vmem %s10, 448
  %v3712 = vld [vmem:[%s3711] sm:$0xff]
  %v3713 = vld [vmem:[%s3711 + $0x8] sm:$0xff]
  %v3714 = vld [vmem:[%s3711 + $0x10] sm:$0xff]
  %v3715 = vld [vmem:[%s3711 + $0x18] sm:$0xff]
  %v3716 = vld [vmem:[%s3711 + $0x20] sm:$0xff]
  %v3717 = vld [vmem:[%s3711 + $0x28] sm:$0xff]
  %v3718 = vld [vmem:[%s3711 + $0x30] sm:$0xff]
  %v3719 = vld [vmem:[%s3711 + $0x38] sm:$0xff]
  %3720 = vmatpush.msra.mxu0 0.0
  %3721 = vmatpush.msra.mxu0 0.0
  %3722 = vmatpush.msra.mxu0 0.0
  %3723 = vmatpush.msra.mxu0 0.0
  %3724 = vmatpush.msra.mxu0 0.0
  %3725 = vmatpush.msra.mxu0 0.0
  %3726 = vmatpush.msra.mxu0 0.0
  %3727 = vmatpush.msra.mxu0 0.0
  %3728 = vmatpush.msra.mxu0 %v3719
  %3729 = vmatpush.msra.mxu0 %v3718
  %3730 = vmatpush.msra.mxu0 %v3717
  %3731 = vmatpush.msra.mxu0 %v3716
  %3732 = vmatpush.msra.mxu0 %v3715
  %3733 = vmatpush.msra.mxu0 %v3714
  %3734 = vmatpush.msra.mxu0 %v3713
  %3735 = vmatpush.msra.mxu0 %v3712
  %3736 = vmatmul.f32.gmra.mxu0 %v3667
  %v3737 = vpop.f32.mrf.mxu0
  %v3738 = vadd.f32 0.0, %v3737
  %3739 = vmatmul.f32.gmra.mxu0 %v3670
  %v3740 = vpop.f32.mrf.mxu0
  %v3741 = vadd.f32 0.0, %v3740
  %3742 = vmatmul.f32.gmra.mxu0 %v3673
  %v3743 = vpop.f32.mrf.mxu0
  %v3744 = vadd.f32 0.0, %v3743
  %3745 = vmatmul.f32.gmra.mxu0 %v3676
  %v3746 = vpop.f32.mrf.mxu0
  %v3747 = vadd.f32 0.0, %v3746
  %3748 = vdwg.mxu0
  %v3749 = vadd.f32 %v3707, %v3738
  %v3750 = vadd.f32 %v3708, %v3741
  %v3751 = vadd.f32 %v3709, %v3744
  %v3752 = vadd.f32 %v3710, %v3747
  %s3753 = scalar_lea.vmem %s10, 512
  %v3754 = vld [vmem:[%s3753] sm:$0xff]
  %v3755 = vld [vmem:[%s3753 + $0x8] sm:$0xff]
  %v3756 = vld [vmem:[%s3753 + $0x10] sm:$0xff]
  %v3757 = vld [vmem:[%s3753 + $0x18] sm:$0xff]
  %v3758 = vld [vmem:[%s3753 + $0x20] sm:$0xff]
  %v3759 = vld [vmem:[%s3753 + $0x28] sm:$0xff]
  %v3760 = vld [vmem:[%s3753 + $0x30] sm:$0xff]
  %v3761 = vld [vmem:[%s3753 + $0x38] sm:$0xff]
  %3762 = vmatpush.msra.mxu0 0.0
  %3763 = vmatpush.msra.mxu0 0.0
  %3764 = vmatpush.msra.mxu0 0.0
  %3765 = vmatpush.msra.mxu0 0.0
  %3766 = vmatpush.msra.mxu0 0.0
  %3767 = vmatpush.msra.mxu0 0.0
  %3768 = vmatpush.msra.mxu0 0.0
  %3769 = vmatpush.msra.mxu0 0.0
  %3770 = vmatpush.msra.mxu0 %v3761
  %3771 = vmatpush.msra.mxu0 %v3760
  %3772 = vmatpush.msra.mxu0 %v3759
  %3773 = vmatpush.msra.mxu0 %v3758
  %3774 = vmatpush.msra.mxu0 %v3757
  %3775 = vmatpush.msra.mxu0 %v3756
  %3776 = vmatpush.msra.mxu0 %v3755
  %3777 = vmatpush.msra.mxu0 %v3754
  %3778 = vmatmul.f32.gmra.mxu0 %v3667
  %v3779 = vpop.f32.mrf.mxu0
  %v3780 = vadd.f32 0.0, %v3779
  %3781 = vmatmul.f32.gmra.mxu0 %v3670
  %v3782 = vpop.f32.mrf.mxu0
  %v3783 = vadd.f32 0.0, %v3782
  %3784 = vmatmul.f32.gmra.mxu0 %v3673
  %v3785 = vpop.f32.mrf.mxu0
  %v3786 = vadd.f32 0.0, %v3785
  %3787 = vmatmul.f32.gmra.mxu0 %v3676
  %v3788 = vpop.f32.mrf.mxu0
  %v3789 = vadd.f32 0.0, %v3788
  %3790 = vdwg.mxu0
  %v3791 = vadd.f32 %v3749, %v3780
  %v3792 = vadd.f32 %v3750, %v3783
  %v3793 = vadd.f32 %v3751, %v3786
  %v3794 = vadd.f32 %v3752, %v3789
  %v3795 = vld [vmem:[%s11] sm:$0x1]
  %v3797 = vperm.slane %v3795, 0
  %v3799 = vadd.f32 %v3791, %v3797
  %v3800 = vadd.f32 %v3792, %v3797
  %v3801 = vadd.f32 %v3793, %v3797
  %v3802 = vadd.f32 %v3794, %v3797
  %v3803 = vmax.f32 %v3799, 0.0
  %v3804 = vmax.f32 %v3800, 0.0
  %v3805 = vmax.f32 %v3801, 0.0
  %v3806 = vmax.f32 %v3802, 0.0
  %v3807 = vld [vmem:[%s12] sm:$0xff]
  %v3808 = vld [vmem:[%s12 + $0x8] sm:$0xff]
  %v3809 = vld [vmem:[%s12 + $0x10] sm:$0xff]
  %v3810 = vld [vmem:[%s12 + $0x18] sm:$0xff]
  %v3812 = vsel %vm168, %v3807, 0
  %v3815 = vsel %vm168, %v3808, 0
  %v3818 = vsel %vm168, %v3809, 0
  %v3821 = vsel %vm168, %v3810, 0
  %3823 = vmatpush.msra.mxu0 0.0
  %3824 = vmatpush.msra.mxu0 0.0
  %3825 = vmatpush.msra.mxu0 0.0
  %3826 = vmatpush.msra.mxu0 0.0
  %3827 = vmatpush.msra.mxu0 0.0
  %3828 = vmatpush.msra.mxu0 0.0
  %3829 = vmatpush.msra.mxu0 0.0
  %3830 = vmatpush.msra.mxu0 0.0
  %3831 = vmatpush.msra.mxu0 0.0
  %3832 = vmatpush.msra.mxu0 0.0
  %3833 = vmatpush.msra.mxu0 0.0
  %3834 = vmatpush.msra.mxu0 0.0
  %3835 = vmatpush.msra.mxu0 %v3806
  %3836 = vmatpush.msra.mxu0 %v3805
  %3837 = vmatpush.msra.mxu0 %v3804
  %3838 = vmatpush.msra.mxu0 %v3803
  %3839 = vmatmul.f32.gmra.mxu0 %v3812
  %v3840 = vpop.f32.mrf.mxu0
  %v3841 = vadd.f32 0.0, %v3840
  %3842 = vmatmul.f32.gmra.mxu0 %v3815
  %v3843 = vpop.f32.mrf.mxu0
  %v3844 = vadd.f32 0.0, %v3843
  %3845 = vmatmul.f32.gmra.mxu0 %v3818
  %v3846 = vpop.f32.mrf.mxu0
  %v3847 = vadd.f32 0.0, %v3846
  %3848 = vmatmul.f32.gmra.mxu0 %v3821
  %v3849 = vpop.f32.mrf.mxu0
  %v3850 = vadd.f32 0.0, %v3849
  %3851 = vdwg.mxu0
  %v3852 = vld [vmem:[%s13] sm:$0xff]
  %v3853 = vld [vmem:[%s13 + $0x8] sm:$0xff]
  %v3854 = vld [vmem:[%s13 + $0x10] sm:$0xff]
  %v3855 = vld [vmem:[%s13 + $0x18] sm:$0xff]
  %s3856 = scalar_lea.vmem %s13, 32
  %v3857 = vld [vmem:[%s3856] sm:$0xff]
  %v3858 = vld [vmem:[%s3856 + $0x8] sm:$0xff]
  %v3859 = vld [vmem:[%s3856 + $0x10] sm:$0xff]
  %v3860 = vld [vmem:[%s3856 + $0x18] sm:$0xff]
  %v3862 = vsel %vm168, %v3841, 0
  %v3865 = vsel %vm168, %v3844, 0
  %v3868 = vsel %vm168, %v3847, 0
  %v3871 = vsel %vm168, %v3850, 0
  %3873 = vmatpush.msra.mxu0 0.0
  %3874 = vmatpush.msra.mxu0 0.0
  %3875 = vmatpush.msra.mxu0 0.0
  %3876 = vmatpush.msra.mxu0 0.0
  %3877 = vmatpush.msra.mxu0 0.0
  %3878 = vmatpush.msra.mxu0 0.0
  %3879 = vmatpush.msra.mxu0 0.0
  %3880 = vmatpush.msra.mxu0 0.0
  %3881 = vmatpush.msra.mxu0 0.0
  %3882 = vmatpush.msra.mxu0 0.0
  %3883 = vmatpush.msra.mxu0 0.0
  %3884 = vmatpush.msra.mxu0 0.0
  %3885 = vmatpush.msra.mxu0 %v3860
  %3886 = vmatpush.msra.mxu0 %v3859
  %3887 = vmatpush.msra.mxu0 %v3858
  %3888 = vmatpush.msra.mxu0 %v3857
  %3889 = vmatmul.f32.gmra.mxu0 %v3862
  %v3890 = vpop.f32.mrf.mxu0
  %v3891 = vadd.f32 0.0, %v3890
  %3892 = vmatmul.f32.gmra.mxu0 %v3865
  %v3893 = vpop.f32.mrf.mxu0
  %v3894 = vadd.f32 0.0, %v3893
  %3895 = vmatmul.f32.gmra.mxu0 %v3868
  %v3896 = vpop.f32.mrf.mxu0
  %v3897 = vadd.f32 0.0, %v3896
  %3898 = vmatmul.f32.gmra.mxu0 %v3871
  %v3899 = vpop.f32.mrf.mxu0
  %v3900 = vadd.f32 0.0, %v3899
  %3901 = vdwg.mxu0
  %3902 = vmatpush.msra.mxu0 0.0
  %3903 = vmatpush.msra.mxu0 0.0
  %3904 = vmatpush.msra.mxu0 0.0
  %3905 = vmatpush.msra.mxu0 0.0
  %3906 = vmatpush.msra.mxu0 0.0
  %3907 = vmatpush.msra.mxu0 0.0
  %3908 = vmatpush.msra.mxu0 0.0
  %3909 = vmatpush.msra.mxu0 0.0
  %3910 = vmatpush.msra.mxu0 0.0
  %3911 = vmatpush.msra.mxu0 0.0
  %3912 = vmatpush.msra.mxu0 0.0
  %3913 = vmatpush.msra.mxu0 0.0
  %3914 = vmatpush.msra.mxu0 %v3855
  %3915 = vmatpush.msra.mxu0 %v3854
  %3916 = vmatpush.msra.mxu0 %v3853
  %3917 = vmatpush.msra.mxu0 %v3852
  %3918 = vmatmul.f32.gmra.mxu0 %v3862
  %v3919 = vpop.f32.mrf.mxu0
  %v3920 = vadd.f32 %v3891, %v3919
  %3921 = vmatmul.f32.gmra.mxu0 %v3865
  %v3922 = vpop.f32.mrf.mxu0
  %v3923 = vadd.f32 %v3894, %v3922
  %3924 = vmatmul.f32.gmra.mxu0 %v3868
  %v3925 = vpop.f32.mrf.mxu0
  %v3926 = vadd.f32 %v3897, %v3925
  %3927 = vmatmul.f32.gmra.mxu0 %v3871
  %v3928 = vpop.f32.mrf.mxu0
  %v3929 = vadd.f32 %v3900, %v3928
  %3930 = vdwg.mxu0
  %s3931 = scalar_lea.vmem %s13, 64
  %v3932 = vld [vmem:[%s3931] sm:$0xff]
  %v3933 = vld [vmem:[%s3931 + $0x8] sm:$0xff]
  %v3934 = vld [vmem:[%s3931 + $0x10] sm:$0xff]
  %v3935 = vld [vmem:[%s3931 + $0x18] sm:$0xff]
  %3936 = vmatpush.msra.mxu0 0.0
  %3937 = vmatpush.msra.mxu0 0.0
  %3938 = vmatpush.msra.mxu0 0.0
  %3939 = vmatpush.msra.mxu0 0.0
  %3940 = vmatpush.msra.mxu0 0.0
  %3941 = vmatpush.msra.mxu0 0.0
  %3942 = vmatpush.msra.mxu0 0.0
  %3943 = vmatpush.msra.mxu0 0.0
  %3944 = vmatpush.msra.mxu0 0.0
  %3945 = vmatpush.msra.mxu0 0.0
  %3946 = vmatpush.msra.mxu0 0.0
  %3947 = vmatpush.msra.mxu0 0.0
  %3948 = vmatpush.msra.mxu0 %v3935
  %3949 = vmatpush.msra.mxu0 %v3934
  %3950 = vmatpush.msra.mxu0 %v3933
  %3951 = vmatpush.msra.mxu0 %v3932
  %3952 = vmatmul.f32.gmra.mxu0 %v3862
  %v3953 = vpop.f32.mrf.mxu0
  %v3954 = vadd.f32 0.0, %v3953
  %3955 = vmatmul.f32.gmra.mxu0 %v3865
  %v3956 = vpop.f32.mrf.mxu0
  %v3957 = vadd.f32 0.0, %v3956
  %3958 = vmatmul.f32.gmra.mxu0 %v3868
  %v3959 = vpop.f32.mrf.mxu0
  %v3960 = vadd.f32 0.0, %v3959
  %3961 = vmatmul.f32.gmra.mxu0 %v3871
  %v3962 = vpop.f32.mrf.mxu0
  %v3963 = vadd.f32 0.0, %v3962
  %3964 = vdwg.mxu0
  %v3965 = vadd.f32 %v3920, %v3954
  %v3966 = vadd.f32 %v3923, %v3957
  %v3967 = vadd.f32 %v3926, %v3960
  %v3968 = vadd.f32 %v3929, %v3963
  %s3969 = scalar_lea.vmem %s12, 32
  %v3970 = vld [vmem:[%s3969] sm:$0xff]
  %v3971 = vld [vmem:[%s3969 + $0x8] sm:$0xff]
  %v3972 = vld [vmem:[%s3969 + $0x10] sm:$0xff]
  %v3973 = vld [vmem:[%s3969 + $0x18] sm:$0xff]
  %v3975 = vsel %vm168, %v3970, 0
  %v3978 = vsel %vm168, %v3971, 0
  %v3981 = vsel %vm168, %v3972, 0
  %v3984 = vsel %vm168, %v3973, 0
  %3986 = vmatpush.msra.mxu0 0.0
  %3987 = vmatpush.msra.mxu0 0.0
  %3988 = vmatpush.msra.mxu0 0.0
  %3989 = vmatpush.msra.mxu0 0.0
  %3990 = vmatpush.msra.mxu0 0.0
  %3991 = vmatpush.msra.mxu0 0.0
  %3992 = vmatpush.msra.mxu0 0.0
  %3993 = vmatpush.msra.mxu0 0.0
  %3994 = vmatpush.msra.mxu0 0.0
  %3995 = vmatpush.msra.mxu0 0.0
  %3996 = vmatpush.msra.mxu0 0.0
  %3997 = vmatpush.msra.mxu0 0.0
  %3998 = vmatpush.msra.mxu0 %v3806
  %3999 = vmatpush.msra.mxu0 %v3805
  %4000 = vmatpush.msra.mxu0 %v3804
  %4001 = vmatpush.msra.mxu0 %v3803
  %4002 = vmatmul.f32.gmra.mxu0 %v3975
  %v4003 = vpop.f32.mrf.mxu0
  %v4004 = vadd.f32 0.0, %v4003
  %4005 = vmatmul.f32.gmra.mxu0 %v3978
  %v4006 = vpop.f32.mrf.mxu0
  %v4007 = vadd.f32 0.0, %v4006
  %4008 = vmatmul.f32.gmra.mxu0 %v3981
  %v4009 = vpop.f32.mrf.mxu0
  %v4010 = vadd.f32 0.0, %v4009
  %4011 = vmatmul.f32.gmra.mxu0 %v3984
  %v4012 = vpop.f32.mrf.mxu0
  %v4013 = vadd.f32 0.0, %v4012
  %4014 = vdwg.mxu0
  %s4015 = scalar_lea.vmem %s13, 96
  %v4016 = vld [vmem:[%s4015] sm:$0xff]
  %v4017 = vld [vmem:[%s4015 + $0x8] sm:$0xff]
  %v4018 = vld [vmem:[%s4015 + $0x10] sm:$0xff]
  %v4019 = vld [vmem:[%s4015 + $0x18] sm:$0xff]
  %v4021 = vsel %vm168, %v4004, 0
  %v4024 = vsel %vm168, %v4007, 0
  %v4027 = vsel %vm168, %v4010, 0
  %v4030 = vsel %vm168, %v4013, 0
  %4032 = vmatpush.msra.mxu0 0.0
  %4033 = vmatpush.msra.mxu0 0.0
  %4034 = vmatpush.msra.mxu0 0.0
  %4035 = vmatpush.msra.mxu0 0.0
  %4036 = vmatpush.msra.mxu0 0.0
  %4037 = vmatpush.msra.mxu0 0.0
  %4038 = vmatpush.msra.mxu0 0.0
  %4039 = vmatpush.msra.mxu0 0.0
  %4040 = vmatpush.msra.mxu0 0.0
  %4041 = vmatpush.msra.mxu0 0.0
  %4042 = vmatpush.msra.mxu0 0.0
  %4043 = vmatpush.msra.mxu0 0.0
  %4044 = vmatpush.msra.mxu0 %v4019
  %4045 = vmatpush.msra.mxu0 %v4018
  %4046 = vmatpush.msra.mxu0 %v4017
  %4047 = vmatpush.msra.mxu0 %v4016
  %4048 = vmatmul.f32.gmra.mxu0 %v4021
  %v4049 = vpop.f32.mrf.mxu0
  %v4050 = vadd.f32 0.0, %v4049
  %4051 = vmatmul.f32.gmra.mxu0 %v4024
  %v4052 = vpop.f32.mrf.mxu0
  %v4053 = vadd.f32 0.0, %v4052
  %4054 = vmatmul.f32.gmra.mxu0 %v4027
  %v4055 = vpop.f32.mrf.mxu0
  %v4056 = vadd.f32 0.0, %v4055
  %4057 = vmatmul.f32.gmra.mxu0 %v4030
  %v4058 = vpop.f32.mrf.mxu0
  %v4059 = vadd.f32 0.0, %v4058
  %4060 = vdwg.mxu0
  %v4061 = vadd.f32 %v3965, %v4050
  %v4062 = vadd.f32 %v3966, %v4053
  %v4063 = vadd.f32 %v3967, %v4056
  %v4064 = vadd.f32 %v3968, %v4059
  %s4065 = scalar_lea.vmem %s13, 128
  %v4066 = vld [vmem:[%s4065] sm:$0xff]
  %v4067 = vld [vmem:[%s4065 + $0x8] sm:$0xff]
  %v4068 = vld [vmem:[%s4065 + $0x10] sm:$0xff]
  %v4069 = vld [vmem:[%s4065 + $0x18] sm:$0xff]
  %4070 = vmatpush.msra.mxu0 0.0
  %4071 = vmatpush.msra.mxu0 0.0
  %4072 = vmatpush.msra.mxu0 0.0
  %4073 = vmatpush.msra.mxu0 0.0
  %4074 = vmatpush.msra.mxu0 0.0
  %4075 = vmatpush.msra.mxu0 0.0
  %4076 = vmatpush.msra.mxu0 0.0
  %4077 = vmatpush.msra.mxu0 0.0
  %4078 = vmatpush.msra.mxu0 0.0
  %4079 = vmatpush.msra.mxu0 0.0
  %4080 = vmatpush.msra.mxu0 0.0
  %4081 = vmatpush.msra.mxu0 0.0
  %4082 = vmatpush.msra.mxu0 %v4069
  %4083 = vmatpush.msra.mxu0 %v4068
  %4084 = vmatpush.msra.mxu0 %v4067
  %4085 = vmatpush.msra.mxu0 %v4066
  %4086 = vmatmul.f32.gmra.mxu0 %v4021
  %v4087 = vpop.f32.mrf.mxu0
  %v4088 = vadd.f32 0.0, %v4087
  %4089 = vmatmul.f32.gmra.mxu0 %v4024
  %v4090 = vpop.f32.mrf.mxu0
  %v4091 = vadd.f32 0.0, %v4090
  %4092 = vmatmul.f32.gmra.mxu0 %v4027
  %v4093 = vpop.f32.mrf.mxu0
  %v4094 = vadd.f32 0.0, %v4093
  %4095 = vmatmul.f32.gmra.mxu0 %v4030
  %v4096 = vpop.f32.mrf.mxu0
  %v4097 = vadd.f32 0.0, %v4096
  %4098 = vdwg.mxu0
  %v4099 = vadd.f32 %v4061, %v4088
  %v4100 = vadd.f32 %v4062, %v4091
  %v4101 = vadd.f32 %v4063, %v4094
  %v4102 = vadd.f32 %v4064, %v4097
  %s4103 = scalar_lea.vmem %s13, 160
  %v4104 = vld [vmem:[%s4103] sm:$0xff]
  %v4105 = vld [vmem:[%s4103 + $0x8] sm:$0xff]
  %v4106 = vld [vmem:[%s4103 + $0x10] sm:$0xff]
  %v4107 = vld [vmem:[%s4103 + $0x18] sm:$0xff]
  %4108 = vmatpush.msra.mxu0 0.0
  %4109 = vmatpush.msra.mxu0 0.0
  %4110 = vmatpush.msra.mxu0 0.0
  %4111 = vmatpush.msra.mxu0 0.0
  %4112 = vmatpush.msra.mxu0 0.0
  %4113 = vmatpush.msra.mxu0 0.0
  %4114 = vmatpush.msra.mxu0 0.0
  %4115 = vmatpush.msra.mxu0 0.0
  %4116 = vmatpush.msra.mxu0 0.0
  %4117 = vmatpush.msra.mxu0 0.0
  %4118 = vmatpush.msra.mxu0 0.0
  %4119 = vmatpush.msra.mxu0 0.0
  %4120 = vmatpush.msra.mxu0 %v4107
  %4121 = vmatpush.msra.mxu0 %v4106
  %4122 = vmatpush.msra.mxu0 %v4105
  %4123 = vmatpush.msra.mxu0 %v4104
  %4124 = vmatmul.f32.gmra.mxu0 %v4021
  %v4125 = vpop.f32.mrf.mxu0
  %v4126 = vadd.f32 0.0, %v4125
  %4127 = vmatmul.f32.gmra.mxu0 %v4024
  %v4128 = vpop.f32.mrf.mxu0
  %v4129 = vadd.f32 0.0, %v4128
  %4130 = vmatmul.f32.gmra.mxu0 %v4027
  %v4131 = vpop.f32.mrf.mxu0
  %v4132 = vadd.f32 0.0, %v4131
  %4133 = vmatmul.f32.gmra.mxu0 %v4030
  %v4134 = vpop.f32.mrf.mxu0
  %v4135 = vadd.f32 0.0, %v4134
  %4136 = vdwg.mxu0
  %v4137 = vadd.f32 %v4099, %v4126
  %v4138 = vadd.f32 %v4100, %v4129
  %v4139 = vadd.f32 %v4101, %v4132
  %v4140 = vadd.f32 %v4102, %v4135
  %s4141 = scalar_lea.vmem %s12, 64
  %v4142 = vld [vmem:[%s4141] sm:$0xff]
  %v4143 = vld [vmem:[%s4141 + $0x8] sm:$0xff]
  %v4144 = vld [vmem:[%s4141 + $0x10] sm:$0xff]
  %v4145 = vld [vmem:[%s4141 + $0x18] sm:$0xff]
  %v4147 = vsel %vm168, %v4142, 0
  %v4150 = vsel %vm168, %v4143, 0
  %v4153 = vsel %vm168, %v4144, 0
  %v4156 = vsel %vm168, %v4145, 0
  %4158 = vmatpush.msra.mxu0 0.0
  %4159 = vmatpush.msra.mxu0 0.0
  %4160 = vmatpush.msra.mxu0 0.0
  %4161 = vmatpush.msra.mxu0 0.0
  %4162 = vmatpush.msra.mxu0 0.0
  %4163 = vmatpush.msra.mxu0 0.0
  %4164 = vmatpush.msra.mxu0 0.0
  %4165 = vmatpush.msra.mxu0 0.0
  %4166 = vmatpush.msra.mxu0 0.0
  %4167 = vmatpush.msra.mxu0 0.0
  %4168 = vmatpush.msra.mxu0 0.0
  %4169 = vmatpush.msra.mxu0 0.0
  %4170 = vmatpush.msra.mxu0 %v3806
  %4171 = vmatpush.msra.mxu0 %v3805
  %4172 = vmatpush.msra.mxu0 %v3804
  %4173 = vmatpush.msra.mxu0 %v3803
  %4174 = vmatmul.f32.gmra.mxu0 %v4147
  %v4175 = vpop.f32.mrf.mxu0
  %v4176 = vadd.f32 0.0, %v4175
  %4177 = vmatmul.f32.gmra.mxu0 %v4150
  %v4178 = vpop.f32.mrf.mxu0
  %v4179 = vadd.f32 0.0, %v4178
  %4180 = vmatmul.f32.gmra.mxu0 %v4153
  %v4181 = vpop.f32.mrf.mxu0
  %v4182 = vadd.f32 0.0, %v4181
  %4183 = vmatmul.f32.gmra.mxu0 %v4156
  %v4184 = vpop.f32.mrf.mxu0
  %v4185 = vadd.f32 0.0, %v4184
  %4186 = vdwg.mxu0
  %s4187 = scalar_lea.vmem %s13, 192
  %v4188 = vld [vmem:[%s4187] sm:$0xff]
  %v4189 = vld [vmem:[%s4187 + $0x8] sm:$0xff]
  %v4190 = vld [vmem:[%s4187 + $0x10] sm:$0xff]
  %v4191 = vld [vmem:[%s4187 + $0x18] sm:$0xff]
  %v4193 = vsel %vm168, %v4176, 0
  %v4196 = vsel %vm168, %v4179, 0
  %v4199 = vsel %vm168, %v4182, 0
  %v4202 = vsel %vm168, %v4185, 0
  %4204 = vmatpush.msra.mxu0 0.0
  %4205 = vmatpush.msra.mxu0 0.0
  %4206 = vmatpush.msra.mxu0 0.0
  %4207 = vmatpush.msra.mxu0 0.0
  %4208 = vmatpush.msra.mxu0 0.0
  %4209 = vmatpush.msra.mxu0 0.0
  %4210 = vmatpush.msra.mxu0 0.0
  %4211 = vmatpush.msra.mxu0 0.0
  %4212 = vmatpush.msra.mxu0 0.0
  %4213 = vmatpush.msra.mxu0 0.0
  %4214 = vmatpush.msra.mxu0 0.0
  %4215 = vmatpush.msra.mxu0 0.0
  %4216 = vmatpush.msra.mxu0 %v4191
  %4217 = vmatpush.msra.mxu0 %v4190
  %4218 = vmatpush.msra.mxu0 %v4189
  %4219 = vmatpush.msra.mxu0 %v4188
  %4220 = vmatmul.f32.gmra.mxu0 %v4193
  %v4221 = vpop.f32.mrf.mxu0
  %v4222 = vadd.f32 0.0, %v4221
  %4223 = vmatmul.f32.gmra.mxu0 %v4196
  %v4224 = vpop.f32.mrf.mxu0
  %v4225 = vadd.f32 0.0, %v4224
  %4226 = vmatmul.f32.gmra.mxu0 %v4199
  %v4227 = vpop.f32.mrf.mxu0
  %v4228 = vadd.f32 0.0, %v4227
  %4229 = vmatmul.f32.gmra.mxu0 %v4202
  %v4230 = vpop.f32.mrf.mxu0
  %v4231 = vadd.f32 0.0, %v4230
  %4232 = vdwg.mxu0
  %v4233 = vadd.f32 %v4137, %v4222
  %v4234 = vadd.f32 %v4138, %v4225
  %v4235 = vadd.f32 %v4139, %v4228
  %v4236 = vadd.f32 %v4140, %v4231
  %s4237 = scalar_lea.vmem %s13, 224
  %v4238 = vld [vmem:[%s4237] sm:$0xff]
  %v4239 = vld [vmem:[%s4237 + $0x8] sm:$0xff]
  %v4240 = vld [vmem:[%s4237 + $0x10] sm:$0xff]
  %v4241 = vld [vmem:[%s4237 + $0x18] sm:$0xff]
  %4242 = vmatpush.msra.mxu0 0.0
  %4243 = vmatpush.msra.mxu0 0.0
  %4244 = vmatpush.msra.mxu0 0.0
  %4245 = vmatpush.msra.mxu0 0.0
  %4246 = vmatpush.msra.mxu0 0.0
  %4247 = vmatpush.msra.mxu0 0.0
  %4248 = vmatpush.msra.mxu0 0.0
  %4249 = vmatpush.msra.mxu0 0.0
  %4250 = vmatpush.msra.mxu0 0.0
  %4251 = vmatpush.msra.mxu0 0.0
  %4252 = vmatpush.msra.mxu0 0.0
  %4253 = vmatpush.msra.mxu0 0.0
  %4254 = vmatpush.msra.mxu0 %v4241
  %4255 = vmatpush.msra.mxu0 %v4240
  %4256 = vmatpush.msra.mxu0 %v4239
  %4257 = vmatpush.msra.mxu0 %v4238
  %4258 = vmatmul.f32.gmra.mxu0 %v4193
  %v4259 = vpop.f32.mrf.mxu0
  %v4260 = vadd.f32 0.0, %v4259
  %4261 = vmatmul.f32.gmra.mxu0 %v4196
  %v4262 = vpop.f32.mrf.mxu0
  %v4263 = vadd.f32 0.0, %v4262
  %4264 = vmatmul.f32.gmra.mxu0 %v4199
  %v4265 = vpop.f32.mrf.mxu0
  %v4266 = vadd.f32 0.0, %v4265
  %4267 = vmatmul.f32.gmra.mxu0 %v4202
  %v4268 = vpop.f32.mrf.mxu0
  %v4269 = vadd.f32 0.0, %v4268
  %4270 = vdwg.mxu0
  %v4271 = vadd.f32 %v4233, %v4260
  %v4272 = vadd.f32 %v4234, %v4263
  %v4273 = vadd.f32 %v4235, %v4266
  %v4274 = vadd.f32 %v4236, %v4269
  %s4275 = scalar_lea.vmem %s13, 256
  %v4276 = vld [vmem:[%s4275] sm:$0xff]
  %v4277 = vld [vmem:[%s4275 + $0x8] sm:$0xff]
  %v4278 = vld [vmem:[%s4275 + $0x10] sm:$0xff]
  %v4279 = vld [vmem:[%s4275 + $0x18] sm:$0xff]
  %4280 = vmatpush.msra.mxu0 0.0
  %4281 = vmatpush.msra.mxu0 0.0
  %4282 = vmatpush.msra.mxu0 0.0
  %4283 = vmatpush.msra.mxu0 0.0
  %4284 = vmatpush.msra.mxu0 0.0
  %4285 = vmatpush.msra.mxu0 0.0
  %4286 = vmatpush.msra.mxu0 0.0
  %4287 = vmatpush.msra.mxu0 0.0
  %4288 = vmatpush.msra.mxu0 0.0
  %4289 = vmatpush.msra.mxu0 0.0
  %4290 = vmatpush.msra.mxu0 0.0
  %4291 = vmatpush.msra.mxu0 0.0
  %4292 = vmatpush.msra.mxu0 %v4279
  %4293 = vmatpush.msra.mxu0 %v4278
  %4294 = vmatpush.msra.mxu0 %v4277
  %4295 = vmatpush.msra.mxu0 %v4276
  %4296 = vmatmul.f32.gmra.mxu0 %v4193
  %v4297 = vpop.f32.mrf.mxu0
  %v4298 = vadd.f32 0.0, %v4297
  %4299 = vmatmul.f32.gmra.mxu0 %v4196
  %v4300 = vpop.f32.mrf.mxu0
  %v4301 = vadd.f32 0.0, %v4300
  %4302 = vmatmul.f32.gmra.mxu0 %v4199
  %v4303 = vpop.f32.mrf.mxu0
  %v4304 = vadd.f32 0.0, %v4303
  %4305 = vmatmul.f32.gmra.mxu0 %v4202
  %v4306 = vpop.f32.mrf.mxu0
  %v4307 = vadd.f32 0.0, %v4306
  %4308 = vdwg.mxu0
  %v4309 = vadd.f32 %v4271, %v4298
  %v4310 = vadd.f32 %v4272, %v4301
  %v4311 = vadd.f32 %v4273, %v4304
  %v4312 = vadd.f32 %v4274, %v4307
  %v4313 = vld [vmem:[%s14] sm:$0x1]
  %v4315 = vperm.slane %v4313, 0
  %v4317 = vadd.f32 %v4309, %v4315
  %v4318 = vadd.f32 %v4310, %v4315
  %v4319 = vadd.f32 %v4311, %v4315
  %v4320 = vadd.f32 %v4312, %v4315
  %v4321 = vmax.f32 %v4317, 0.0
  %v4322 = vmax.f32 %v4318, 0.0
  %v4323 = vmax.f32 %v4319, 0.0
  %v4324 = vmax.f32 %v4320, 0.0
  %v4325 = vld [vmem:[%s15] sm:$0xff]
  %v4327 = vsel %vm168, %v4325, 0
  %4329 = vmatpush.msra.mxu0 0.0
  %4330 = vmatpush.msra.mxu0 0.0
  %4331 = vmatpush.msra.mxu0 0.0
  %4332 = vmatpush.msra.mxu0 0.0
  %4333 = vmatpush.msra.mxu0 0.0
  %4334 = vmatpush.msra.mxu0 0.0
  %4335 = vmatpush.msra.mxu0 0.0
  %4336 = vmatpush.msra.mxu0 0.0
  %4337 = vmatpush.msra.mxu0 0.0
  %4338 = vmatpush.msra.mxu0 0.0
  %4339 = vmatpush.msra.mxu0 0.0
  %4340 = vmatpush.msra.mxu0 0.0
  %4341 = vmatpush.msra.mxu0 %v4324
  %4342 = vmatpush.msra.mxu0 %v4323
  %4343 = vmatpush.msra.mxu0 %v4322
  %4344 = vmatpush.msra.mxu0 %v4321
  %4345 = vmatmul.f32.gmra.mxu0 %v4327
  %v4346 = vpop.f32.mrf.mxu0
  %v4347 = vadd.f32 0.0, %v4346
  %4348 = vdwg.mxu0
  %v4349 = vld [vmem:[%s16] sm:$0xf]
  %s4350 = scalar_lea.vmem %s15, 8
  %v4351 = vld [vmem:[%s4350] sm:$0xff]
  %v4353 = vsel %vm168, %v4351, 0
  %4355 = vmatpush.msra.mxu0 0.0
  %4356 = vmatpush.msra.mxu0 0.0
  %4357 = vmatpush.msra.mxu0 0.0
  %4358 = vmatpush.msra.mxu0 0.0
  %4359 = vmatpush.msra.mxu0 0.0
  %4360 = vmatpush.msra.mxu0 0.0
  %4361 = vmatpush.msra.mxu0 0.0
  %4362 = vmatpush.msra.mxu0 0.0
  %4363 = vmatpush.msra.mxu0 0.0
  %4364 = vmatpush.msra.mxu0 0.0
  %4365 = vmatpush.msra.mxu0 0.0
  %4366 = vmatpush.msra.mxu0 0.0
  %4367 = vmatpush.msra.mxu0 %v4324
  %4368 = vmatpush.msra.mxu0 %v4323
  %4369 = vmatpush.msra.mxu0 %v4322
  %4370 = vmatpush.msra.mxu0 %v4321
  %4371 = vmatmul.f32.gmra.mxu0 %v4353
  %v4372 = vpop.f32.mrf.mxu0
  %v4373 = vadd.f32 0.0, %v4372
  %4374 = vdwg.mxu0
  %s4375 = scalar_lea.vmem %s16, 4
  %v4376 = vld [vmem:[%s4375] sm:$0xf]
  %vm4377 = vcmask 31744
  %v4379 = vsel %vm4377, %v4373, 0
  %vm4381 = vcmask 1043456
  %v4383 = vsel %vm4381, %v4376, 0
  %4385 = vmatpush.msra.mxu0 0.0
  %4386 = vmatpush.msra.mxu0 0.0
  %4387 = vmatpush.msra.mxu0 0.0
  %4388 = vmatpush.msra.mxu0 0.0
  %4389 = vmatpush.msra.mxu0 0.0
  %4390 = vmatpush.msra.mxu0 0.0
  %4391 = vmatpush.msra.mxu0 0.0
  %4392 = vmatpush.msra.mxu0 0.0
  %4393 = vmatpush.msra.mxu0 0.0
  %4394 = vmatpush.msra.mxu0 0.0
  %4395 = vmatpush.msra.mxu0 0.0
  %4396 = vmatpush.msra.mxu0 0.0
  %4397 = vmatpush.msra.mxu0 0.0
  %4398 = vmatpush.msra.mxu0 0.0
  %4399 = vmatpush.msra.mxu0 0.0
  %4400 = vmatpush.msra.mxu0 %v4383
  %4401 = vmatmul.f32.gmra.mxu0 %v4379
  %v4402 = vpop.f32.mrf.mxu0
  %v4403 = vadd.f32 0.0, %v4402
  %4404 = vdwg.mxu0
  %v4406 = vsel %vm4377, %v4347, 0
  %v4409 = vsel %vm4381, %v4349, 0
  %4411 = vmatpush.msra.mxu0 0.0
  %4412 = vmatpush.msra.mxu0 0.0
  %4413 = vmatpush.msra.mxu0 0.0
  %4414 = vmatpush.msra.mxu0 0.0
  %4415 = vmatpush.msra.mxu0 0.0
  %4416 = vmatpush.msra.mxu0 0.0
  %4417 = vmatpush.msra.mxu0 0.0
  %4418 = vmatpush.msra.mxu0 0.0
  %4419 = vmatpush.msra.mxu0 0.0
  %4420 = vmatpush.msra.mxu0 0.0
  %4421 = vmatpush.msra.mxu0 0.0
  %4422 = vmatpush.msra.mxu0 0.0
  %4423 = vmatpush.msra.mxu0 0.0
  %4424 = vmatpush.msra.mxu0 0.0
  %4425 = vmatpush.msra.mxu0 0.0
  %4426 = vmatpush.msra.mxu0 %v4409
  %4427 = vmatmul.f32.gmra.mxu0 %v4406
  %v4428 = vpop.f32.mrf.mxu0
  %v4429 = vadd.f32 %v4403, %v4428
  %4430 = vdwg.mxu0
  %s4431 = scalar_lea.vmem %s15, 16
  %v4432 = vld [vmem:[%s4431] sm:$0xff]
  %v4434 = vsel %vm168, %v4432, 0
  %4436 = vmatpush.msra.mxu0 0.0
  %4437 = vmatpush.msra.mxu0 0.0
  %4438 = vmatpush.msra.mxu0 0.0
  %4439 = vmatpush.msra.mxu0 0.0
  %4440 = vmatpush.msra.mxu0 0.0
  %4441 = vmatpush.msra.mxu0 0.0
  %4442 = vmatpush.msra.mxu0 0.0
  %4443 = vmatpush.msra.mxu0 0.0
  %4444 = vmatpush.msra.mxu0 0.0
  %4445 = vmatpush.msra.mxu0 0.0
  %4446 = vmatpush.msra.mxu0 0.0
  %4447 = vmatpush.msra.mxu0 0.0
  %4448 = vmatpush.msra.mxu0 %v4324
  %4449 = vmatpush.msra.mxu0 %v4323
  %4450 = vmatpush.msra.mxu0 %v4322
  %4451 = vmatpush.msra.mxu0 %v4321
  %4452 = vmatmul.f32.gmra.mxu0 %v4434
  %v4453 = vpop.f32.mrf.mxu0
  %v4454 = vadd.f32 0.0, %v4453
  %4455 = vdwg.mxu0
  %s4456 = scalar_lea.vmem %s16, 8
  %v4457 = vld [vmem:[%s4456] sm:$0xf]
  %v4459 = vsel %vm4377, %v4454, 0
  %v4462 = vsel %vm4381, %v4457, 0
  %4464 = vmatpush.msra.mxu0 0.0
  %4465 = vmatpush.msra.mxu0 0.0
  %4466 = vmatpush.msra.mxu0 0.0
  %4467 = vmatpush.msra.mxu0 0.0
  %4468 = vmatpush.msra.mxu0 0.0
  %4469 = vmatpush.msra.mxu0 0.0
  %4470 = vmatpush.msra.mxu0 0.0
  %4471 = vmatpush.msra.mxu0 0.0
  %4472 = vmatpush.msra.mxu0 0.0
  %4473 = vmatpush.msra.mxu0 0.0
  %4474 = vmatpush.msra.mxu0 0.0
  %4475 = vmatpush.msra.mxu0 0.0
  %4476 = vmatpush.msra.mxu0 0.0
  %4477 = vmatpush.msra.mxu0 0.0
  %4478 = vmatpush.msra.mxu0 0.0
  %4479 = vmatpush.msra.mxu0 %v4462
  %4480 = vmatmul.f32.gmra.mxu0 %v4459
  %v4481 = vpop.f32.mrf.mxu0
  %v4482 = vadd.f32 0.0, %v4481
  %4483 = vdwg.mxu0
  %v4484 = vadd.f32 %v4429, %v4482
  %s4485 = scalar_lea.vmem %s15, 24
  %v4486 = vld [vmem:[%s4485] sm:$0xff]
  %v4488 = vsel %vm168, %v4486, 0
  %4490 = vmatpush.msra.mxu0 0.0
  %4491 = vmatpush.msra.mxu0 0.0
  %4492 = vmatpush.msra.mxu0 0.0
  %4493 = vmatpush.msra.mxu0 0.0
  %4494 = vmatpush.msra.mxu0 0.0
  %4495 = vmatpush.msra.mxu0 0.0
  %4496 = vmatpush.msra.mxu0 0.0
  %4497 = vmatpush.msra.mxu0 0.0
  %4498 = vmatpush.msra.mxu0 0.0
  %4499 = vmatpush.msra.mxu0 0.0
  %4500 = vmatpush.msra.mxu0 0.0
  %4501 = vmatpush.msra.mxu0 0.0
  %4502 = vmatpush.msra.mxu0 %v4324
  %4503 = vmatpush.msra.mxu0 %v4323
  %4504 = vmatpush.msra.mxu0 %v4322
  %4505 = vmatpush.msra.mxu0 %v4321
  %4506 = vmatmul.f32.gmra.mxu0 %v4488
  %v4507 = vpop.f32.mrf.mxu0
  %v4508 = vadd.f32 0.0, %v4507
  %4509 = vdwg.mxu0
  %s4510 = scalar_lea.vmem %s16, 12
  %v4511 = vld [vmem:[%s4510] sm:$0xf]
  %v4513 = vsel %vm4377, %v4508, 0
  %v4516 = vsel %vm4381, %v4511, 0
  %4518 = vmatpush.msra.mxu0 0.0
  %4519 = vmatpush.msra.mxu0 0.0
  %4520 = vmatpush.msra.mxu0 0.0
  %4521 = vmatpush.msra.mxu0 0.0
  %4522 = vmatpush.msra.mxu0 0.0
  %4523 = vmatpush.msra.mxu0 0.0
  %4524 = vmatpush.msra.mxu0 0.0
  %4525 = vmatpush.msra.mxu0 0.0
  %4526 = vmatpush.msra.mxu0 0.0
  %4527 = vmatpush.msra.mxu0 0.0
  %4528 = vmatpush.msra.mxu0 0.0
  %4529 = vmatpush.msra.mxu0 0.0
  %4530 = vmatpush.msra.mxu0 0.0
  %4531 = vmatpush.msra.mxu0 0.0
  %4532 = vmatpush.msra.mxu0 0.0
  %4533 = vmatpush.msra.mxu0 %v4516
  %4534 = vmatmul.f32.gmra.mxu0 %v4513
  %v4535 = vpop.f32.mrf.mxu0
  %v4536 = vadd.f32 0.0, %v4535
  %4537 = vdwg.mxu0
  %v4538 = vadd.f32 %v4484, %v4536
  %v4539 = vmax.f32 %v4538, 0.0
  %v4540 = vld [vmem:[%s17] sm:$0xff]
  %v4541 = vld [vmem:[%s17 + $0x8] sm:$0xff]
  %v4542 = vld [vmem:[%s17 + $0x10] sm:$0xff]
  %v4543 = vld [vmem:[%s17 + $0x18] sm:$0xff]
  %v4545 = vsel %vm168, %v4539, 0
  %4547 = vmatpush.msra.mxu0 0.0
  %4548 = vmatpush.msra.mxu0 0.0
  %4549 = vmatpush.msra.mxu0 0.0
  %4550 = vmatpush.msra.mxu0 0.0
  %4551 = vmatpush.msra.mxu0 0.0
  %4552 = vmatpush.msra.mxu0 0.0
  %4553 = vmatpush.msra.mxu0 0.0
  %4554 = vmatpush.msra.mxu0 0.0
  %4555 = vmatpush.msra.mxu0 0.0
  %4556 = vmatpush.msra.mxu0 0.0
  %4557 = vmatpush.msra.mxu0 0.0
  %4558 = vmatpush.msra.mxu0 0.0
  %4559 = vmatpush.msra.mxu0 %v4543
  %4560 = vmatpush.msra.mxu0 %v4542
  %4561 = vmatpush.msra.mxu0 %v4541
  %4562 = vmatpush.msra.mxu0 %v4540
  %4563 = vmatmul.f32.gmra.mxu0 %v4545
  %v4564 = vpop.f32.mrf.mxu0
  %v4565 = vadd.f32 0.0, %v4564
  %4566 = vdwg.mxu0
  %v4567 = vmax.f32 %v4565, 0.0
  %v4568 = vld [vmem:[%s18] sm:$0xff]
  %v4569 = vld [vmem:[%s18 + $0x8] sm:$0xff]
  %v4570 = vld [vmem:[%s18 + $0x10] sm:$0xff]
  %v4571 = vld [vmem:[%s18 + $0x18] sm:$0xff]
  %v4573 = vsel %vm168, %v4567, 0
  %4575 = vmatpush.msra.mxu0 0.0
  %4576 = vmatpush.msra.mxu0 0.0
  %4577 = vmatpush.msra.mxu0 0.0
  %4578 = vmatpush.msra.mxu0 0.0
  %4579 = vmatpush.msra.mxu0 0.0
  %4580 = vmatpush.msra.mxu0 0.0
  %4581 = vmatpush.msra.mxu0 0.0
  %4582 = vmatpush.msra.mxu0 0.0
  %4583 = vmatpush.msra.mxu0 0.0
  %4584 = vmatpush.msra.mxu0 0.0
  %4585 = vmatpush.msra.mxu0 0.0
  %4586 = vmatpush.msra.mxu0 0.0
  %4587 = vmatpush.msra.mxu0 %v4571
  %4588 = vmatpush.msra.mxu0 %v4570
  %4589 = vmatpush.msra.mxu0 %v4569
  %4590 = vmatpush.msra.mxu0 %v4568
  %4591 = vmatmul.f32.gmra.mxu0 %v4573
  %v4592 = vpop.f32.mrf.mxu0
  %v4593 = vadd.f32 0.0, %v4592
  %4594 = vdwg.mxu0
  %4595 = vst.msk [vmem:[%s19] sm:$0xff] %vm168, %v4593
  // Predicated region
  $region78: #{cnn_simple_forward.1} parent=0 // pred_check
    _
  $region79: #{cnn_simple_forward.1} parent=0 // pred_check_branch
    %4597 = sbr.rel (0) target = $region81
  $region80: #{cnn_simple_forward.1} parent=0 // pred_region
    _
  $region81: #{cnn_simple_forward.1} parent=0 // pred_fallthru
    _
  // Predicated region
  $region82: #{cnn_simple_forward.1} parent=0 // pred_check
    _
  $region83: #{cnn_simple_forward.1} parent=0 // pred_check_branch
    %4599 = sbr.rel (0) target = $region85
  $region84: #{cnn_simple_forward.1} parent=0 // pred_region
    _
  $region85: #{cnn_simple_forward.1} parent=0 // pred_fallthru
    _

</llo_original>
